<compile_context>
chip_gen: v7x
topology: tpu7x:2x2x1
jax: 0.10.0
libtpu: 0.0.40
codegen_flags: <defaults>
</compile_context>

<pallas_src>
import functools

import jax
import jax.numpy as jnp
from jax.experimental import pallas as pl
from jax.experimental.pallas import tpu as pltpu

SIZE = 224            # ViT-L/14 input resolution (module's size table)
PATCH = 14            # ViT-L/14 patch size
NPATCH = (SIZE // PATCH) ** 2          # 256 patches
PATCH_DIM = 3 * PATCH * PATCH          # 588
PD_PAD = 640                           # 588 padded to a multiple of 128 (lane-aligned)
HIDDEN = 128          # synthetic encoder width (real ViT-L/14: 1024)
EMBED = 64            # synthetic joint embedding dim (real ViT-L/14: 768)
EMBED_PAD = 128       # lane-dense embedding width (cols 64..127 are zero)
CTX_LEN = 77          # CLIP text context length
CTX_PAD = 80          # 77 padded to a multiple of 8 (sublane-aligned)
VOCAB = 512           # synthetic vocab (real CLIP: 49408)
TOK_DIM = 64          # synthetic token embedding width
TOK_PAD = 128         # lane-dense token width

CLIP_MEAN = jnp.array([0.48145466, 0.4578275, 0.40821073], dtype=jnp.float32)
CLIP_STD = jnp.array([0.26862954, 0.26130258, 0.27577711], dtype=jnp.float32)


# ---------------------------------------------------------------------------
# Fused Pallas kernel: encode both images + both texts + 4 cosine similarities
# ---------------------------------------------------------------------------
def _fused_clip_kernel(p0_ref, p1_ref, e0_ref, e1_ref,
                       w1_ref, b1_ref, w2_ref, wt_ref, out_ref, *, b_tile):
    f32 = jnp.float32

    def l2norm(f):
        ss = jnp.sum(f * f, axis=-1, keepdims=True)
        return f * jax.lax.rsqrt(jnp.maximum(ss, 1e-12))   # eps guards zero features

    def encode_image(p_ref):
        # (b_tile*256, 640) bf16 x (640, 128) bf16 -> f32 on the MXU.
        h = jnp.dot(p_ref[0], w1_ref[...], preferred_element_type=f32)
        h = h + b1_ref[...]                                  # folded CLIP mean/std
        h = h * jax.nn.sigmoid(1.702 * h)                    # QuickGELU (f32, v5e-safe; sigmoid on EUP)
        # Mean-pool as a tile-aligned sublane sum; 1/NPATCH is folded into w2.
        pooled = jnp.sum(h.reshape(b_tile, NPATCH, HIDDEN), axis=1)        # (b_tile, HIDDEN) f32
        f = jnp.dot(pooled.astype(jnp.bfloat16), w2_ref[...],
                    preferred_element_type=f32)                            # (b_tile, EMBED_PAD)
        return l2norm(f)

    def encode_text(e_ref):
        # Mean-pool the (zero-padded) token embeddings; 1/CTX_LEN is folded into wt.
        emb = e_ref[0].astype(f32)                                         # bf16 -> f32 before accumulate
        tp = jnp.sum(emb.reshape(b_tile, CTX_PAD, TOK_PAD), axis=1)        # (b_tile, TOK_PAD) f32
        f = jnp.dot(tp.astype(jnp.bfloat16), wt_ref[...],
                    preferred_element_type=f32)                            # (b_tile, EMBED_PAD)
        return l2norm(f)

    i0 = encode_image(p0_ref)
    i1 = encode_image(p1_ref)
    t0 = encode_text(e0_ref)
    t1 = encode_text(e1_ref)

    # i0/i1/t0/t1 are already unit-norm -> plain dot products for these three.
    s0 = jnp.sum(i0 * t0, axis=-1, keepdims=True)
    s1 = jnp.sum(i1 * t1, axis=-1, keepdims=True)
    si = jnp.sum(i0 * i1, axis=-1, keepdims=True)

    # sim_direction needs the full cosine (difference vectors are not unit-norm).
    # torch.F.cosine_similarity clamps each norm at eps=1e-8 -> norm^2 at 1e-16.
    di, dt = i1 - i0, t1 - t0
    ndi = jnp.maximum(jnp.sum(di * di, axis=-1, keepdims=True), 1e-16)
    ndt = jnp.maximum(jnp.sum(dt * dt, axis=-1, keepdims=True), 1e-16)
    sd = jnp.sum(di * dt, axis=-1, keepdims=True) * jax.lax.rsqrt(ndi * ndt)

    # Pack the four per-row scalars into lanes 0..3 of a lane-dense (b_tile, 128) slab.
    lane = jax.lax.broadcasted_iota(jnp.int32, (b_tile, EMBED_PAD), 1)
    out_ref[0] = (jnp.where(lane == 0, s0, 0.0) + jnp.where(lane == 1, s1, 0.0) +
                  jnp.where(lane == 2, sd, 0.0) + jnp.where(lane == 3, si, 0.0))


# ---------------------------------------------------------------------------
# Wrapper (glue in plain JAX, hot path in one pallas_call)
# ---------------------------------------------------------------------------
def _patchify(img):
    B, C, H, W = img.shape
    x = img.reshape(B, C, H // PATCH, PATCH, W // PATCH, PATCH)
    x = x.transpose(0, 2, 4, 1, 3, 5)              # (B, gh, gw, C, p, p)
    return x.reshape(B, NPATCH, PATCH_DIM)          # within-patch order [c, ph, pw]


def _choose_b_tile(batch):
    # Prefer an even number (>=2) of grid steps so both v7x TensorCores stay busy,
    # with tiles capped at 8 rows (VMEM-safe on v7x's 64 MiB per core).
    for t in (8, 4, 2, 1):
        if batch % t == 0 and (batch // t) >= 2 and (batch // t) % 2 == 0:
            return t
    for t in (8, 4, 2, 1):
        if batch % t == 0 and (batch // t) >= 2:
            return t
    return batch   # batch == 1


def clip_similarity_forward(image_0, image_1, tokens_0, tokens_1, params):
    B = image_0.shape[0]
    b_tile = _choose_b_tile(B)
    num_tiles = B // b_tile

    # -- fold CLIP mean/std normalization into w1 / bias (trace-time, constant-folded) --
    mean_patch = jnp.repeat(CLIP_MEAN, PATCH * PATCH)          # (588,) in [c, ph, pw] order
    std_patch = jnp.repeat(CLIP_STD, PATCH * PATCH)
    w1 = params["img_w1"]
    w1_folded = w1 * (1.0 / std_patch)[:, None]
    b1 = (-(mean_patch / std_patch) @ w1)[None, :]             # (1, HIDDEN), added before activation
    w1_pad = jnp.pad(w1_folded, ((0, PD_PAD - PATCH_DIM), (0, 0))).astype(jnp.bfloat16)

    # Fold the mean-pool denominators into the (bf16) projection weights.
    w2_pad = jnp.pad(params["img_w2"] / float(NPATCH),
                     ((0, 0), (0, EMBED_PAD - EMBED))).astype(jnp.bfloat16)
    wt_pad = jnp.pad(params["txt_w"] / float(CTX_LEN),
                     ((0, TOK_PAD - TOK_DIM), (0, EMBED_PAD - EMBED))).astype(jnp.bfloat16)

    def prep_image(img):
        # F.interpolate(..., size=224, mode='bicubic', align_corners=False)
        # TODO(synk): jax.image.resize bicubic uses a=-0.5 Keys kernel vs torch's a=-0.75.
        img = jax.image.resize(img.astype(jnp.float32),
                               (B, 3, SIZE, SIZE), method="bicubic")
        p = _patchify(img)                                      # (B, NPATCH, PATCH_DIM)
        p = jnp.pad(p, ((0, 0), (0, 0), (0, PD_PAD - PATCH_DIM)))
        return p.reshape(num_tiles, b_tile * NPATCH, PD_PAD).astype(jnp.bfloat16)

    def prep_text(tokens):
        # TODO(synk): clip.tokenize (BPE string tokenizer) has no Pallas equivalent;
        # this forward accepts pre-tokenized int32 ids of shape (B, 77).
        emb = jnp.take(params["tok_emb"], tokens, axis=0)       # (B, CTX_LEN, TOK_DIM)
        emb = jnp.pad(emb, ((0, 0), (0, CTX_PAD - CTX_LEN), (0, TOK_PAD - TOK_DIM)))
        return emb.reshape(num_tiles, b_tile * CTX_PAD, TOK_PAD).astype(jnp.bfloat16)

    patches_0 = prep_image(image_0)
    patches_1 = prep_image(image_1)
    emb_0 = prep_text(tokens_0)
    emb_1 = prep_text(tokens_1)

    kernel = functools.partial(_fused_clip_kernel, b_tile=b_tile)
    sims = pl.pallas_call(
        kernel,
        out_shape=jax.ShapeDtypeStruct((num_tiles, b_tile, EMBED_PAD), jnp.float32),
        grid=(num_tiles,),
        in_specs=[
            pl.BlockSpec((1, b_tile * NPATCH, PD_PAD), lambda b: (b, 0, 0)),   # patches_0
            pl.BlockSpec((1, b_tile * NPATCH, PD_PAD), lambda b: (b, 0, 0)),   # patches_1
            pl.BlockSpec((1, b_tile * CTX_PAD, TOK_PAD), lambda b: (b, 0, 0)), # emb_0
            pl.BlockSpec((1, b_tile * CTX_PAD, TOK_PAD), lambda b: (b, 0, 0)), # emb_1
            pl.BlockSpec((PD_PAD, HIDDEN), lambda b: (0, 0)),                  # w1 (folded norm)
            pl.BlockSpec((1, HIDDEN), lambda b: (0, 0)),                       # b1
            pl.BlockSpec((HIDDEN, EMBED_PAD), lambda b: (0, 0)),               # w2 (1/NPATCH folded)
            pl.BlockSpec((TOK_PAD, EMBED_PAD), lambda b: (0, 0)),              # wt (1/CTX_LEN folded)
        ],
        out_specs=pl.BlockSpec((1, b_tile, EMBED_PAD), lambda b: (b, 0, 0)),
        compiler_params=pltpu.CompilerParams(
            dimension_semantics=("parallel",),
            vmem_limit_bytes=48 * 1024 * 1024,          # fits double-buffered tiles, v7x-safe
        ),
    )(patches_0, patches_1, emb_0, emb_1, w1_pad, b1, w2_pad, wt_pad)

    sims = sims.reshape(B, EMBED_PAD)
    # lanes 0..3 hold sim_0, sim_1, sim_direction, sim_image (each shape (B,))
    return sims[:, 0], sims[:, 1], sims[:, 2], sims[:, 3]


# ---------------------------------------------------------------------------
# Main
# ---------------------------------------------------------------------------
if __name__ == "__main__":
    key = jax.random.PRNGKey(0)
    k_img0, k_img1, k_t0, k_t1, k_w1, k_w2, k_emb, k_wt = jax.random.split(key, 8)

    B = 2
    image_0 = jax.random.uniform(k_img0, (B, 3, 16, 16), dtype=jnp.float32)
    image_1 = jax.random.uniform(k_img1, (B, 3, 16, 16), dtype=jnp.float32)
    tokens_0 = jax.random.randint(k_t0, (B, CTX_LEN), 0, VOCAB, dtype=jnp.int32)
    tokens_1 = jax.random.randint(k_t1, (B, CTX_LEN), 0, VOCAB, dtype=jnp.int32)

    params = {
        "img_w1": jax.random.normal(k_w1, (PATCH_DIM, HIDDEN), jnp.float32) * (PATCH_DIM ** -0.5),
        "img_w2": jax.random.normal(k_w2, (HIDDEN, EMBED), jnp.float32) * (HIDDEN ** -0.5),
        "tok_emb": jax.random.normal(k_emb, (VOCAB, TOK_DIM), jnp.float32) * 0.02,
        "txt_w": jax.random.normal(k_wt, (TOK_DIM, EMBED), jnp.float32) * (TOK_DIM ** -0.5),
    }

    sims = jax.jit(clip_similarity_forward)(image_0, image_1, tokens_0, tokens_1, params)
    sims = jax.block_until_ready(sims)

    assert all(s.shape == (B,) for s in sims)
    assert all(bool(jnp.all(jnp.isfinite(s))) for s in sims)
    assert all(bool(jnp.all(jnp.abs(s) <= 1.0 + 1e-4)) for s in sims)
    print("KERNEL_OK")
</pallas_src>

<mosaic_0001>
module attributes {stable_mosaic.version = 11 : i64} {
  func.func @_fused_clip_kernel(%arg0: i32, %arg1: memref<1x256x640xbf16, #tpu.memory_space<vmem>>, %arg2: memref<1x256x640xbf16, #tpu.memory_space<vmem>>, %arg3: memref<1x80x128xbf16, #tpu.memory_space<vmem>>, %arg4: memref<1x80x128xbf16, #tpu.memory_space<vmem>>, %arg5: memref<640x128xbf16, #tpu.memory_space<vmem>>, %arg6: memref<1x128xf32, #tpu.memory_space<vmem>>, %arg7: memref<128x128xbf16, #tpu.memory_space<vmem>>, %arg8: memref<128x128xbf16, #tpu.memory_space<vmem>>, %arg9: memref<1x1x128xf32, #tpu.memory_space<vmem>>) attributes {dimension_semantics = [#tpu.dimension_semantics<parallel>], iteration_bounds = array<i64: 2>, scalar_prefetch = 0 : i64, scratch_operands = 0 : i64, tpu.core_type = #tpu.core_type<tc>, window_params = [{transform_indices = @transform_0, window_bounds = array<i64: 1, 256, 640>}, {transform_indices = @transform_1, window_bounds = array<i64: 1, 256, 640>}, {transform_indices = @transform_2, window_bounds = array<i64: 1, 80, 128>}, {transform_indices = @transform_3, window_bounds = array<i64: 1, 80, 128>}, {pipeline_mode = #tpu.pipeline_mode<synchronous>, transform_indices = @transform_4, window_bounds = array<i64: 640, 128>}, {pipeline_mode = #tpu.pipeline_mode<synchronous>, transform_indices = @transform_5, window_bounds = array<i64: 1, 128>}, {pipeline_mode = #tpu.pipeline_mode<synchronous>, transform_indices = @transform_6, window_bounds = array<i64: 128, 128>}, {pipeline_mode = #tpu.pipeline_mode<synchronous>, transform_indices = @transform_7, window_bounds = array<i64: 128, 128>}, {transform_indices = @transform_8, window_bounds = array<i64: 1, 1, 128>}]} {
    %c0 = arith.constant 0 : index
    %c0_0 = arith.constant 0 : index
    %c0_1 = arith.constant 0 : index
    %0 = vector.load %arg1[%c0, %c0_0, %c0_1] : memref<1x256x640xbf16, #tpu.memory_space<vmem>>, vector<1x256x640xbf16>
    %1 = vector.shape_cast %0 : vector<1x256x640xbf16> to vector<256x640xbf16>
    %c0_2 = arith.constant 0 : index
    %c0_3 = arith.constant 0 : index
    %2 = vector.load %arg5[%c0_2, %c0_3] : memref<640x128xbf16, #tpu.memory_space<vmem>>, vector<640x128xbf16>
    %cst = arith.constant dense<0.000000e+00> : vector<256x128xf32>
    %3 = tpu.matmul %1, %2, %cst {dimension_numbers = #tpu.dot_dimension_numbers<[1], [0], [0], [1], [0, 0, 1, 1], [], []>} : vector<256x640xbf16>, vector<640x128xbf16>, vector<256x128xf32> -> vector<256x128xf32>
    %c0_4 = arith.constant 0 : index
    %c0_5 = arith.constant 0 : index
    %4 = vector.load %arg6[%c0_4, %c0_5] : memref<1x128xf32, #tpu.memory_space<vmem>>, vector<1x128xf32>
    %5 = vector.broadcast %4 : vector<1x128xf32> to vector<256x128xf32>
    %6 = arith.addf %3, %5 : vector<256x128xf32>
    %cst_6 = arith.constant 1.702000e+00 : f32
    %7 = vector.broadcast %cst_6 : f32 to vector<256x128xf32>
    %8 = arith.mulf %7, %6 : vector<256x128xf32>
    %9 = arith.negf %8 : vector<256x128xf32>
    %10 = math.exp %9 : vector<256x128xf32>
    %cst_7 = arith.constant 1.000000e+00 : f32
    %11 = vector.broadcast %cst_7 : f32 to vector<256x128xf32>
    %12 = arith.addf %11, %10 : vector<256x128xf32>
    %13 = arith.divf %11, %12 : vector<256x128xf32>
    %14 = arith.mulf %6, %13 : vector<256x128xf32>
    %15 = vector.shape_cast %14 : vector<256x128xf32> to vector<1x256x128xf32>
    %cst_8 = arith.constant dense<0.000000e+00> : vector<1x128xf32>
    %16 = vector.multi_reduction <add>, %15, %cst_8 [1] : vector<1x256x128xf32> to vector<1x128xf32>
    %17 = arith.truncf %16 : vector<1x128xf32> to vector<1x128xbf16>
    %c0_9 = arith.constant 0 : index
    %c0_10 = arith.constant 0 : index
    %18 = vector.load %arg7[%c0_9, %c0_10] : memref<128x128xbf16, #tpu.memory_space<vmem>>, vector<128x128xbf16>
    %cst_11 = arith.constant dense<0.000000e+00> : vector<1x128xf32>
    %19 = tpu.matmul %17, %18, %cst_11 {dimension_numbers = #tpu.dot_dimension_numbers<[1], [0], [0], [1], [0, 0, 1, 1], [], []>} : vector<1x128xbf16>, vector<128x128xbf16>, vector<1x128xf32> -> vector<1x128xf32>
    %20 = arith.mulf %19, %19 : vector<1x128xf32>
    %cst_12 = arith.constant dense<0.000000e+00> : vector<1xf32>
    %21 = vector.multi_reduction <add>, %20, %cst_12 [1] : vector<1x128xf32> to vector<1xf32>
    %22 = vector.shape_cast %21 : vector<1xf32> to vector<1x1xf32>
    %cst_13 = arith.constant 9.99999996E-13 : f32
    %23 = vector.broadcast %cst_13 : f32 to vector<1x1xf32>
    %24 = arith.maximumf %22, %23 : vector<1x1xf32>
    %25 = math.rsqrt %24 : vector<1x1xf32>
    %26 = vector.broadcast %25 : vector<1x1xf32> to vector<1x128xf32>
    %27 = arith.mulf %19, %26 : vector<1x128xf32>
    %c0_14 = arith.constant 0 : index
    %c0_15 = arith.constant 0 : index
    %c0_16 = arith.constant 0 : index
    %28 = vector.load %arg2[%c0_14, %c0_15, %c0_16] : memref<1x256x640xbf16, #tpu.memory_space<vmem>>, vector<1x256x640xbf16>
    %29 = vector.shape_cast %28 : vector<1x256x640xbf16> to vector<256x640xbf16>
    %c0_17 = arith.constant 0 : index
    %c0_18 = arith.constant 0 : index
    %30 = vector.load %arg5[%c0_17, %c0_18] : memref<640x128xbf16, #tpu.memory_space<vmem>>, vector<640x128xbf16>
    %cst_19 = arith.constant dense<0.000000e+00> : vector<256x128xf32>
    %31 = tpu.matmul %29, %30, %cst_19 {dimension_numbers = #tpu.dot_dimension_numbers<[1], [0], [0], [1], [0, 0, 1, 1], [], []>} : vector<256x640xbf16>, vector<640x128xbf16>, vector<256x128xf32> -> vector<256x128xf32>
    %c0_20 = arith.constant 0 : index
    %c0_21 = arith.constant 0 : index
    %32 = vector.load %arg6[%c0_20, %c0_21] : memref<1x128xf32, #tpu.memory_space<vmem>>, vector<1x128xf32>
    %33 = vector.broadcast %32 : vector<1x128xf32> to vector<256x128xf32>
    %34 = arith.addf %31, %33 : vector<256x128xf32>
    %cst_22 = arith.constant 1.702000e+00 : f32
    %35 = vector.broadcast %cst_22 : f32 to vector<256x128xf32>
    %36 = arith.mulf %35, %34 : vector<256x128xf32>
    %37 = arith.negf %36 : vector<256x128xf32>
    %38 = math.exp %37 : vector<256x128xf32>
    %cst_23 = arith.constant 1.000000e+00 : f32
    %39 = vector.broadcast %cst_23 : f32 to vector<256x128xf32>
    %40 = arith.addf %39, %38 : vector<256x128xf32>
    %41 = arith.divf %39, %40 : vector<256x128xf32>
    %42 = arith.mulf %34, %41 : vector<256x128xf32>
    %43 = vector.shape_cast %42 : vector<256x128xf32> to vector<1x256x128xf32>
    %cst_24 = arith.constant dense<0.000000e+00> : vector<1x128xf32>
    %44 = vector.multi_reduction <add>, %43, %cst_24 [1] : vector<1x256x128xf32> to vector<1x128xf32>
    %45 = arith.truncf %44 : vector<1x128xf32> to vector<1x128xbf16>
    %c0_25 = arith.constant 0 : index
    %c0_26 = arith.constant 0 : index
    %46 = vector.load %arg7[%c0_25, %c0_26] : memref<128x128xbf16, #tpu.memory_space<vmem>>, vector<128x128xbf16>
    %cst_27 = arith.constant dense<0.000000e+00> : vector<1x128xf32>
    %47 = tpu.matmul %45, %46, %cst_27 {dimension_numbers = #tpu.dot_dimension_numbers<[1], [0], [0], [1], [0, 0, 1, 1], [], []>} : vector<1x128xbf16>, vector<128x128xbf16>, vector<1x128xf32> -> vector<1x128xf32>
    %48 = arith.mulf %47, %47 : vector<1x128xf32>
    %cst_28 = arith.constant dense<0.000000e+00> : vector<1xf32>
    %49 = vector.multi_reduction <add>, %48, %cst_28 [1] : vector<1x128xf32> to vector<1xf32>
    %50 = vector.shape_cast %49 : vector<1xf32> to vector<1x1xf32>
    %cst_29 = arith.constant 9.99999996E-13 : f32
    %51 = vector.broadcast %cst_29 : f32 to vector<1x1xf32>
    %52 = arith.maximumf %50, %51 : vector<1x1xf32>
    %53 = math.rsqrt %52 : vector<1x1xf32>
    %54 = vector.broadcast %53 : vector<1x1xf32> to vector<1x128xf32>
    %55 = arith.mulf %47, %54 : vector<1x128xf32>
    %c0_30 = arith.constant 0 : index
    %c0_31 = arith.constant 0 : index
    %c0_32 = arith.constant 0 : index
    %56 = vector.load %arg3[%c0_30, %c0_31, %c0_32] : memref<1x80x128xbf16, #tpu.memory_space<vmem>>, vector<1x80x128xbf16>
    %57 = vector.shape_cast %56 : vector<1x80x128xbf16> to vector<80x128xbf16>
    %58 = arith.extf %57 : vector<80x128xbf16> to vector<80x128xf32>
    %59 = vector.shape_cast %58 : vector<80x128xf32> to vector<1x80x128xf32>
    %cst_33 = arith.constant dense<0.000000e+00> : vector<1x128xf32>
    %60 = vector.multi_reduction <add>, %59, %cst_33 [1] : vector<1x80x128xf32> to vector<1x128xf32>
    %61 = arith.truncf %60 : vector<1x128xf32> to vector<1x128xbf16>
    %c0_34 = arith.constant 0 : index
    %c0_35 = arith.constant 0 : index
    %62 = vector.load %arg8[%c0_34, %c0_35] : memref<128x128xbf16, #tpu.memory_space<vmem>>, vector<128x128xbf16>
    %cst_36 = arith.constant dense<0.000000e+00> : vector<1x128xf32>
    %63 = tpu.matmul %61, %62, %cst_36 {dimension_numbers = #tpu.dot_dimension_numbers<[1], [0], [0], [1], [0, 0, 1, 1], [], []>} : vector<1x128xbf16>, vector<128x128xbf16>, vector<1x128xf32> -> vector<1x128xf32>
    %64 = arith.mulf %63, %63 : vector<1x128xf32>
    %cst_37 = arith.constant dense<0.000000e+00> : vector<1xf32>
    %65 = vector.multi_reduction <add>, %64, %cst_37 [1] : vector<1x128xf32> to vector<1xf32>
    %66 = vector.shape_cast %65 : vector<1xf32> to vector<1x1xf32>
    %cst_38 = arith.constant 9.99999996E-13 : f32
    %67 = vector.broadcast %cst_38 : f32 to vector<1x1xf32>
    %68 = arith.maximumf %66, %67 : vector<1x1xf32>
    %69 = math.rsqrt %68 : vector<1x1xf32>
    %70 = vector.broadcast %69 : vector<1x1xf32> to vector<1x128xf32>
    %71 = arith.mulf %63, %70 : vector<1x128xf32>
    %c0_39 = arith.constant 0 : index
    %c0_40 = arith.constant 0 : index
    %c0_41 = arith.constant 0 : index
    %72 = vector.load %arg4[%c0_39, %c0_40, %c0_41] : memref<1x80x128xbf16, #tpu.memory_space<vmem>>, vector<1x80x128xbf16>
    %73 = vector.shape_cast %72 : vector<1x80x128xbf16> to vector<80x128xbf16>
    %74 = arith.extf %73 : vector<80x128xbf16> to vector<80x128xf32>
    %75 = vector.shape_cast %74 : vector<80x128xf32> to vector<1x80x128xf32>
    %cst_42 = arith.constant dense<0.000000e+00> : vector<1x128xf32>
    %76 = vector.multi_reduction <add>, %75, %cst_42 [1] : vector<1x80x128xf32> to vector<1x128xf32>
    %77 = arith.truncf %76 : vector<1x128xf32> to vector<1x128xbf16>
    %c0_43 = arith.constant 0 : index
    %c0_44 = arith.constant 0 : index
    %78 = vector.load %arg8[%c0_43, %c0_44] : memref<128x128xbf16, #tpu.memory_space<vmem>>, vector<128x128xbf16>
    %cst_45 = arith.constant dense<0.000000e+00> : vector<1x128xf32>
    %79 = tpu.matmul %77, %78, %cst_45 {dimension_numbers = #tpu.dot_dimension_numbers<[1], [0], [0], [1], [0, 0, 1, 1], [], []>} : vector<1x128xbf16>, vector<128x128xbf16>, vector<1x128xf32> -> vector<1x128xf32>
    %80 = arith.mulf %79, %79 : vector<1x128xf32>
    %cst_46 = arith.constant dense<0.000000e+00> : vector<1xf32>
    %81 = vector.multi_reduction <add>, %80, %cst_46 [1] : vector<1x128xf32> to vector<1xf32>
    %82 = vector.shape_cast %81 : vector<1xf32> to vector<1x1xf32>
    %cst_47 = arith.constant 9.99999996E-13 : f32
    %83 = vector.broadcast %cst_47 : f32 to vector<1x1xf32>
    %84 = arith.maximumf %82, %83 : vector<1x1xf32>
    %85 = math.rsqrt %84 : vector<1x1xf32>
    %86 = vector.broadcast %85 : vector<1x1xf32> to vector<1x128xf32>
    %87 = arith.mulf %79, %86 : vector<1x128xf32>
    %88 = arith.mulf %27, %71 : vector<1x128xf32>
    %cst_48 = arith.constant dense<0.000000e+00> : vector<1xf32>
    %89 = vector.multi_reduction <add>, %88, %cst_48 [1] : vector<1x128xf32> to vector<1xf32>
    %90 = vector.shape_cast %89 : vector<1xf32> to vector<1x1xf32>
    %91 = arith.mulf %55, %87 : vector<1x128xf32>
    %cst_49 = arith.constant dense<0.000000e+00> : vector<1xf32>
    %92 = vector.multi_reduction <add>, %91, %cst_49 [1] : vector<1x128xf32> to vector<1xf32>
    %93 = vector.shape_cast %92 : vector<1xf32> to vector<1x1xf32>
    %94 = arith.mulf %27, %55 : vector<1x128xf32>
    %cst_50 = arith.constant dense<0.000000e+00> : vector<1xf32>
    %95 = vector.multi_reduction <add>, %94, %cst_50 [1] : vector<1x128xf32> to vector<1xf32>
    %96 = vector.shape_cast %95 : vector<1xf32> to vector<1x1xf32>
    %97 = arith.subf %55, %27 : vector<1x128xf32>
    %98 = arith.subf %87, %71 : vector<1x128xf32>
    %99 = arith.mulf %97, %97 : vector<1x128xf32>
    %cst_51 = arith.constant dense<0.000000e+00> : vector<1xf32>
    %100 = vector.multi_reduction <add>, %99, %cst_51 [1] : vector<1x128xf32> to vector<1xf32>
    %101 = vector.shape_cast %100 : vector<1xf32> to vector<1x1xf32>
    %cst_52 = arith.constant 1.000000e-16 : f32
    %102 = vector.broadcast %cst_52 : f32 to vector<1x1xf32>
    %103 = arith.maximumf %101, %102 : vector<1x1xf32>
    %104 = arith.mulf %98, %98 : vector<1x128xf32>
    %cst_53 = arith.constant dense<0.000000e+00> : vector<1xf32>
    %105 = vector.multi_reduction <add>, %104, %cst_53 [1] : vector<1x128xf32> to vector<1xf32>
    %106 = vector.shape_cast %105 : vector<1xf32> to vector<1x1xf32>
    %cst_54 = arith.constant 1.000000e-16 : f32
    %107 = vector.broadcast %cst_54 : f32 to vector<1x1xf32>
    %108 = arith.maximumf %106, %107 : vector<1x1xf32>
    %109 = arith.mulf %97, %98 : vector<1x128xf32>
    %cst_55 = arith.constant dense<0.000000e+00> : vector<1xf32>
    %110 = vector.multi_reduction <add>, %109, %cst_55 [1] : vector<1x128xf32> to vector<1xf32>
    %111 = vector.shape_cast %110 : vector<1xf32> to vector<1x1xf32>
    %112 = arith.mulf %103, %108 : vector<1x1xf32>
    %113 = math.rsqrt %112 : vector<1x1xf32>
    %114 = arith.mulf %111, %113 : vector<1x1xf32>
    %115 = tpu.iota {dimensions = array<i32: 1>} : vector<1x128xi32>
    %c0_i32 = arith.constant 0 : i32
    %116 = vector.broadcast %c0_i32 : i32 to vector<1x128xi32>
    %117 = arith.cmpi eq, %115, %116 : vector<1x128xi32>
    %cst_56 = arith.constant 0.000000e+00 : f32
    %118 = vector.shape_cast %90 : vector<1x1xf32> to vector<1x1xf32>
    %119 = vector.broadcast %118 : vector<1x1xf32> to vector<1x128xf32>
    %120 = vector.broadcast %cst_56 : f32 to vector<1x128xf32>
    %121 = arith.select %117, %119, %120 : vector<1x128xi1>, vector<1x128xf32>
    %c1_i32 = arith.constant 1 : i32
    %122 = vector.broadcast %c1_i32 : i32 to vector<1x128xi32>
    %123 = arith.cmpi eq, %115, %122 : vector<1x128xi32>
    %cst_57 = arith.constant 0.000000e+00 : f32
    %124 = vector.shape_cast %93 : vector<1x1xf32> to vector<1x1xf32>
    %125 = vector.broadcast %124 : vector<1x1xf32> to vector<1x128xf32>
    %126 = vector.broadcast %cst_57 : f32 to vector<1x128xf32>
    %127 = arith.select %123, %125, %126 : vector<1x128xi1>, vector<1x128xf32>
    %128 = arith.addf %121, %127 : vector<1x128xf32>
    %c2_i32 = arith.constant 2 : i32
    %129 = vector.broadcast %c2_i32 : i32 to vector<1x128xi32>
    %130 = arith.cmpi eq, %115, %129 : vector<1x128xi32>
    %cst_58 = arith.constant 0.000000e+00 : f32
    %131 = vector.shape_cast %114 : vector<1x1xf32> to vector<1x1xf32>
    %132 = vector.broadcast %131 : vector<1x1xf32> to vector<1x128xf32>
    %133 = vector.broadcast %cst_58 : f32 to vector<1x128xf32>
    %134 = arith.select %130, %132, %133 : vector<1x128xi1>, vector<1x128xf32>
    %135 = arith.addf %128, %134 : vector<1x128xf32>
    %c3_i32 = arith.constant 3 : i32
    %136 = vector.broadcast %c3_i32 : i32 to vector<1x128xi32>
    %137 = arith.cmpi eq, %115, %136 : vector<1x128xi32>
    %cst_59 = arith.constant 0.000000e+00 : f32
    %138 = vector.shape_cast %96 : vector<1x1xf32> to vector<1x1xf32>
    %139 = vector.broadcast %138 : vector<1x1xf32> to vector<1x128xf32>
    %140 = vector.broadcast %cst_59 : f32 to vector<1x128xf32>
    %141 = arith.select %137, %139, %140 : vector<1x128xi1>, vector<1x128xf32>
    %142 = arith.addf %135, %141 : vector<1x128xf32>
    %c0_60 = arith.constant 0 : index
    %c0_61 = arith.constant 0 : index
    %c0_62 = arith.constant 0 : index
    %143 = vector.load %arg9[%c0_60, %c0_61, %c0_62] : memref<1x1x128xf32, #tpu.memory_space<vmem>>, vector<1x1x128xf32>
    %144 = vector.shape_cast %143 : vector<1x1x128xf32> to vector<1x128xf32>
    %145 = vector.shape_cast %142 : vector<1x128xf32> to vector<1x1x128xf32>
    tpu.vector_store %arg9[%c0_60, %c0_61, %c0_62], %145 {strides = array<i32>} : memref<1x1x128xf32, #tpu.memory_space<vmem>>, vector<1x1x128xf32>,
    return
  }
  func.func @transform_0(%arg0: i32) -> (i32, i32, i32) {
    %c0_i32 = arith.constant 0 : i32
    %c0_i32_0 = arith.constant 0 : i32
    %c0_i32_1 = arith.constant 0 : i32
    return %arg0, %c0_i32, %c0_i32_0 : i32, i32, i32
  }
  func.func @transform_1(%arg0: i32) -> (i32, i32, i32) {
    %c0_i32 = arith.constant 0 : i32
    %c0_i32_0 = arith.constant 0 : i32
    %c0_i32_1 = arith.constant 0 : i32
    return %arg0, %c0_i32, %c0_i32_0 : i32, i32, i32
  }
  func.func @transform_2(%arg0: i32) -> (i32, i32, i32) {
    %c0_i32 = arith.constant 0 : i32
    %c0_i32_0 = arith.constant 0 : i32
    %c0_i32_1 = arith.constant 0 : i32
    return %arg0, %c0_i32, %c0_i32_0 : i32, i32, i32
  }
  func.func @transform_3(%arg0: i32) -> (i32, i32, i32) {
    %c0_i32 = arith.constant 0 : i32
    %c0_i32_0 = arith.constant 0 : i32
    %c0_i32_1 = arith.constant 0 : i32
    return %arg0, %c0_i32, %c0_i32_0 : i32, i32, i32
  }
  func.func @transform_4(%arg0: i32) -> (i32, i32) {
    %c0_i32 = arith.constant 0 : i32
    %c0_i32_0 = arith.constant 0 : i32
    %c0_i32_1 = arith.constant 0 : i32
    return %c0_i32, %c0_i32_0 : i32, i32
  }
  func.func @transform_5(%arg0: i32) -> (i32, i32) {
    %c0_i32 = arith.constant 0 : i32
    %c0_i32_0 = arith.constant 0 : i32
    %c0_i32_1 = arith.constant 0 : i32
    return %c0_i32, %c0_i32_0 : i32, i32
  }
  func.func @transform_6(%arg0: i32) -> (i32, i32) {
    %c0_i32 = arith.constant 0 : i32
    %c0_i32_0 = arith.constant 0 : i32
    %c0_i32_1 = arith.constant 0 : i32
    return %c0_i32, %c0_i32_0 : i32, i32
  }
  func.func @transform_7(%arg0: i32) -> (i32, i32) {
    %c0_i32 = arith.constant 0 : i32
    %c0_i32_0 = arith.constant 0 : i32
    %c0_i32_1 = arith.constant 0 : i32
    return %c0_i32, %c0_i32_0 : i32, i32
  }
  func.func @transform_8(%arg0: i32) -> (i32, i32, i32) {
    %c0_i32 = arith.constant 0 : i32
    %c0_i32_0 = arith.constant 0 : i32
    %c0_i32_1 = arith.constant 0 : i32
    return %arg0, %c0_i32, %c0_i32_0 : i32, i32, i32
  }
}

</mosaic_0001>

<llo_original>
// kernel: clip_similarity_forward.1
$region0: #{clip_similarity_forward.1}
  #allocation0 [shape = 'u32[]', space=smem, size = 0x4, offset = 0x4, fixed_abs, tag = 'smem constant byte address 0x4 - core index']
  #allocation1 [shape = 'u32[144,128]{1,0:T(1,128)}', space=vmem, size = 0x12000, scoped, tag = 'internal scratch']
  %s0 = inlined_call_operand.vmem [shape: bf16[2,256,640], index: 0, kind: input, shape index: {}]
  %s1 = inlined_call_operand.vmem [shape: bf16[2,256,640], index: 1, kind: input, shape index: {}]
  %s2 = inlined_call_operand.vmem [shape: bf16[2,80,128], index: 2, kind: input, shape index: {}]
  %s3 = inlined_call_operand.vmem [shape: bf16[2,80,128], index: 3, kind: input, shape index: {}]
  %s4 = inlined_call_operand.vmem [shape: bf16[640,128], index: 4, kind: input, shape index: {}]
  %s5 = inlined_call_operand.vmem [shape: f32[1,128], index: 5, kind: input, shape index: {}]
  %s6 = inlined_call_operand.vmem [shape: bf16[128,128], index: 6, kind: input, shape index: {}]
  %s7 = inlined_call_operand.vmem [shape: bf16[128,128], index: 7, kind: input, shape index: {}]
  %s8 = inlined_call_operand.vmem [shape: f32[2,1,128], index: 8, kind: output, shape index: {}]
  %s9 = sld [smem:[#allocation0]]
  $region65: #{clip_similarity_forward.1} parent=0
    _
  %s11 = ssub.s32 1, %s9
  %s12 = scalar_select 0, %s11, %s9
  loop: start=0, step=1, limit=4
  $region2: #{clip_similarity_forward.1} parent=0 // loop_pre_header
    _
  $region3: #{clip_similarity_forward.1} parent=0 // loop_header
    %s14 = sphi 0, %s18
    %p15 = scmp.ge.s32.totalorder %s14, 4
    %s24 = sphi 0, %s26
    %s27 = sphi 0, %s24
    %s28 = sphi 0, %s27
    %s44 = sphi 0, %s28
    %s50 = sphi 0, %s52
    %s53 = sphi 0, %s50
    %s54 = sphi 0, %s53
    %s70 = sphi 0, %s54
    %s76 = sphi 0, %s78
    %s79 = sphi 0, %s76
    %s80 = sphi 0, %s79
    %s96 = sphi 0, %s80
    %s102 = sphi 0, %s104
    %s105 = sphi 0, %s102
    %s106 = sphi 0, %s105
    %s122 = sphi 0, %s106
    %s126 = sphi 0, %s126
    %s128 = sphi 0, %s126
    %s129 = sphi 0, %s128
    %s143 = sphi 0, %s129
    %s147 = sphi 0, %s147
    %s149 = sphi 0, %s147
    %s150 = sphi 0, %s149
    %s164 = sphi 0, %s150
    %s168 = sphi 0, %s168
    %s170 = sphi 0, %s168
    %s171 = sphi 0, %s170
    %s185 = sphi 0, %s171
    %s189 = sphi 0, %s189
    %s191 = sphi 0, %s189
    %s192 = sphi 0, %s191
    %s206 = sphi 0, %s192
    %s212 = sphi 0, %s214
    %s215 = sphi 0, %s212
    %s216 = sphi 0, %s215
    %s232 = sphi 0, %s216
  $region4: #{clip_similarity_forward.1} parent=0 // loop_header_branch
    %17 = sbr.rel (%p15) target = $region8
  $region5: #{clip_similarity_forward.1} parent=0 // loop_body
    %s19 = ssub.s32 %s14, 1
    %s20 = ssub.s32 %s14, 2
    %s21 = sadd.s32 %s14, 1
    %s22 = ssub.s32 %s14, %s21
    %p23 = scmp.eq.s32.totalorder %s22, 0
    %s25 = sadd.s32 %s24, 1
    %s26 = scalar_select %p23, %s24, %s25
    %p29 = pneg %p23
    %p30 = scmp.eq.s32.totalorder %s14, 1
    %p31 = por %p29, %p30
    %p32 = scmp.ne.s32.totalorder %s24, %s27
    %p33 = scmp.eq.s32.totalorder %s14, 0
    %p34 = por %p32, %p33
    %p35 = scmp.ne.s32.totalorder %s24, %s27
    %p36 = scmp.eq.s32.totalorder %s19, 1
    %p37 = por %p35, %p36
    %p38 = scmp.ne.s32.totalorder %s27, %s28
    %p39 = scmp.eq.s32.totalorder %s19, 0
    %p40 = por %p38, %p39
    %p41 = scmp.ne.s32.totalorder %s27, %s28
    %p42 = scmp.eq.s32.totalorder %s20, 1
    %p43 = por %p41, %p42
    %p45 = scmp.ne.s32.totalorder %s28, %s44
    %p46 = scmp.eq.s32.totalorder %s20, 0
    %p47 = por %p45, %p46
    %s48 = ssub.s32 %s14, %s21
    %p49 = scmp.eq.s32.totalorder %s48, 0
    %s51 = sadd.s32 %s50, 1
    %s52 = scalar_select %p49, %s50, %s51
    %p55 = pneg %p49
    %p56 = scmp.eq.s32.totalorder %s14, 1
    %p57 = por %p55, %p56
    %p58 = scmp.ne.s32.totalorder %s50, %s53
    %p59 = scmp.eq.s32.totalorder %s14, 0
    %p60 = por %p58, %p59
    %p61 = scmp.ne.s32.totalorder %s50, %s53
    %p62 = scmp.eq.s32.totalorder %s19, 1
    %p63 = por %p61, %p62
    %p64 = scmp.ne.s32.totalorder %s53, %s54
    %p65 = scmp.eq.s32.totalorder %s19, 0
    %p66 = por %p64, %p65
    %p67 = scmp.ne.s32.totalorder %s53, %s54
    %p68 = scmp.eq.s32.totalorder %s20, 1
    %p69 = por %p67, %p68
    %p71 = scmp.ne.s32.totalorder %s54, %s70
    %p72 = scmp.eq.s32.totalorder %s20, 0
    %p73 = por %p71, %p72
    %s74 = ssub.s32 %s14, %s21
    %p75 = scmp.eq.s32.totalorder %s74, 0
    %s77 = sadd.s32 %s76, 1
    %s78 = scalar_select %p75, %s76, %s77
    %p81 = pneg %p75
    %p82 = scmp.eq.s32.totalorder %s14, 1
    %p83 = por %p81, %p82
    %p84 = scmp.ne.s32.totalorder %s76, %s79
    %p85 = scmp.eq.s32.totalorder %s14, 0
    %p86 = por %p84, %p85
    %p87 = scmp.ne.s32.totalorder %s76, %s79
    %p88 = scmp.eq.s32.totalorder %s19, 1
    %p89 = por %p87, %p88
    %p90 = scmp.ne.s32.totalorder %s79, %s80
    %p91 = scmp.eq.s32.totalorder %s19, 0
    %p92 = por %p90, %p91
    %p93 = scmp.ne.s32.totalorder %s79, %s80
    %p94 = scmp.eq.s32.totalorder %s20, 1
    %p95 = por %p93, %p94
    %p97 = scmp.ne.s32.totalorder %s80, %s96
    %p98 = scmp.eq.s32.totalorder %s20, 0
    %p99 = por %p97, %p98
    %s100 = ssub.s32 %s14, %s21
    %p101 = scmp.eq.s32.totalorder %s100, 0
    %s103 = sadd.s32 %s102, 1
    %s104 = scalar_select %p101, %s102, %s103
    %p107 = pneg %p101
    %p108 = scmp.eq.s32.totalorder %s14, 1
    %p109 = por %p107, %p108
    %p110 = scmp.ne.s32.totalorder %s102, %s105
    %p111 = scmp.eq.s32.totalorder %s14, 0
    %p112 = por %p110, %p111
    %p113 = scmp.ne.s32.totalorder %s102, %s105
    %p114 = scmp.eq.s32.totalorder %s19, 1
    %p115 = por %p113, %p114
    %p116 = scmp.ne.s32.totalorder %s105, %s106
    %p117 = scmp.eq.s32.totalorder %s19, 0
    %p118 = por %p116, %p117
    %p119 = scmp.ne.s32.totalorder %s105, %s106
    %p120 = scmp.eq.s32.totalorder %s20, 1
    %p121 = por %p119, %p120
    %p123 = scmp.ne.s32.totalorder %s106, %s122
    %p124 = scmp.eq.s32.totalorder %s20, 0
    %p125 = por %p123, %p124
    %s127 = sadd.s32 %s126, 1
    %p130 = scmp.eq.s32.totalorder %s14, 1
    %p131 = scmp.ne.s32.totalorder %s126, %s128
    %p132 = scmp.eq.s32.totalorder %s14, 0
    %p133 = por %p131, %p132
    %p134 = scmp.ne.s32.totalorder %s126, %s128
    %p135 = scmp.eq.s32.totalorder %s19, 1
    %p136 = por %p134, %p135
    %p137 = scmp.ne.s32.totalorder %s128, %s129
    %p138 = scmp.eq.s32.totalorder %s19, 0
    %p139 = por %p137, %p138
    %p140 = scmp.ne.s32.totalorder %s128, %s129
    %p141 = scmp.eq.s32.totalorder %s20, 1
    %p142 = por %p140, %p141
    %p144 = scmp.ne.s32.totalorder %s129, %s143
    %p145 = scmp.eq.s32.totalorder %s20, 0
    %p146 = por %p144, %p145
    %s148 = sadd.s32 %s147, 1
    %p151 = scmp.eq.s32.totalorder %s14, 1
    %p152 = scmp.ne.s32.totalorder %s147, %s149
    %p153 = scmp.eq.s32.totalorder %s14, 0
    %p154 = por %p152, %p153
    %p155 = scmp.ne.s32.totalorder %s147, %s149
    %p156 = scmp.eq.s32.totalorder %s19, 1
    %p157 = por %p155, %p156
    %p158 = scmp.ne.s32.totalorder %s149, %s150
    %p159 = scmp.eq.s32.totalorder %s19, 0
    %p160 = por %p158, %p159
    %p161 = scmp.ne.s32.totalorder %s149, %s150
    %p162 = scmp.eq.s32.totalorder %s20, 1
    %p163 = por %p161, %p162
    %p165 = scmp.ne.s32.totalorder %s150, %s164
    %p166 = scmp.eq.s32.totalorder %s20, 0
    %p167 = por %p165, %p166
    %s169 = sadd.s32 %s168, 1
    %p172 = scmp.eq.s32.totalorder %s14, 1
    %p173 = scmp.ne.s32.totalorder %s168, %s170
    %p174 = scmp.eq.s32.totalorder %s14, 0
    %p175 = por %p173, %p174
    %p176 = scmp.ne.s32.totalorder %s168, %s170
    %p177 = scmp.eq.s32.totalorder %s19, 1
    %p178 = por %p176, %p177
    %p179 = scmp.ne.s32.totalorder %s170, %s171
    %p180 = scmp.eq.s32.totalorder %s19, 0
    %p181 = por %p179, %p180
    %p182 = scmp.ne.s32.totalorder %s170, %s171
    %p183 = scmp.eq.s32.totalorder %s20, 1
    %p184 = por %p182, %p183
    %p186 = scmp.ne.s32.totalorder %s171, %s185
    %p187 = scmp.eq.s32.totalorder %s20, 0
    %p188 = por %p186, %p187
    %s190 = sadd.s32 %s189, 1
    %p193 = scmp.eq.s32.totalorder %s14, 1
    %p194 = scmp.ne.s32.totalorder %s189, %s191
    %p195 = scmp.eq.s32.totalorder %s14, 0
    %p196 = por %p194, %p195
    %p197 = scmp.ne.s32.totalorder %s189, %s191
    %p198 = scmp.eq.s32.totalorder %s19, 1
    %p199 = por %p197, %p198
    %p200 = scmp.ne.s32.totalorder %s191, %s192
    %p201 = scmp.eq.s32.totalorder %s19, 0
    %p202 = por %p200, %p201
    %p203 = scmp.ne.s32.totalorder %s191, %s192
    %p204 = scmp.eq.s32.totalorder %s20, 1
    %p205 = por %p203, %p204
    %p207 = scmp.ne.s32.totalorder %s192, %s206
    %p208 = scmp.eq.s32.totalorder %s20, 0
    %p209 = por %p207, %p208
    %s210 = ssub.s32 %s14, %s21
    %p211 = scmp.eq.s32.totalorder %s210, 0
    %s213 = sadd.s32 %s212, 1
    %s214 = scalar_select %p211, %s212, %s213
    %p217 = pneg %p211
    %p218 = scmp.eq.s32.totalorder %s14, 1
    %p219 = por %p217, %p218
    %p220 = scmp.ne.s32.totalorder %s212, %s215
    %p221 = scmp.eq.s32.totalorder %s14, 0
    %p222 = por %p220, %p221
    %p223 = scmp.ne.s32.totalorder %s212, %s215
    %p224 = scmp.eq.s32.totalorder %s19, 1
    %p225 = por %p223, %p224
    %p226 = scmp.ne.s32.totalorder %s215, %s216
    %p227 = scmp.eq.s32.totalorder %s19, 0
    %p228 = por %p226, %p227
    %p229 = scmp.ne.s32.totalorder %s215, %s216
    %p230 = scmp.eq.s32.totalorder %s20, 1
    %p231 = por %p229, %p230
    %p233 = scmp.ne.s32.totalorder %s216, %s232
    %p234 = scmp.eq.s32.totalorder %s20, 0
    %p235 = por %p233, %p234
    %p236 = scmp.le.s32.totalorder 1, %s14
    %p237 = scmp.lt.s32.totalorder %s14, 3
    %p238 = pnand %p236, %p237
    %p239 = pneg %p238
    // Predicated region
    $region9: #{clip_similarity_forward.1} parent=5 // pred_check
      _
    $region10: #{clip_similarity_forward.1} parent=5 // pred_check_branch
      %241 = sbr.rel (%p238) target = $region12
    $region11: #{clip_similarity_forward.1} parent=5 // pred_region
      %s242 = ssub.s32 %s14, 1
      // Predicated region
      $region13: #{clip_similarity_forward.1} parent=11 // pred_check
        %p243 = pneg %p139
      $region14: #{clip_similarity_forward.1} parent=11 // pred_check_branch
        %245 = sbr.rel (%p243) target = $region16
      $region15: #{clip_similarity_forward.1} parent=11 // pred_region
        _
      $region16: #{clip_similarity_forward.1} parent=11 // pred_fallthru
        _
      // Predicated region
      $region17: #{clip_similarity_forward.1} parent=11 // pred_check
        %p246 = pneg %p160
      $region18: #{clip_similarity_forward.1} parent=11 // pred_check_branch
        %248 = sbr.rel (%p246) target = $region20
      $region19: #{clip_similarity_forward.1} parent=11 // pred_region
        _
      $region20: #{clip_similarity_forward.1} parent=11 // pred_fallthru
        _
      // Predicated region
      $region21: #{clip_similarity_forward.1} parent=11 // pred_check
        %p249 = pneg %p181
      $region22: #{clip_similarity_forward.1} parent=11 // pred_check_branch
        %251 = sbr.rel (%p249) target = $region24
      $region23: #{clip_similarity_forward.1} parent=11 // pred_region
        _
      $region24: #{clip_similarity_forward.1} parent=11 // pred_fallthru
        _
      // Predicated region
      $region25: #{clip_similarity_forward.1} parent=11 // pred_check
        %p252 = pneg %p202
      $region26: #{clip_similarity_forward.1} parent=11 // pred_check_branch
        %254 = sbr.rel (%p252) target = $region28
      $region27: #{clip_similarity_forward.1} parent=11 // pred_region
        _
      $region28: #{clip_similarity_forward.1} parent=11 // pred_fallthru
        _
    $region12: #{clip_similarity_forward.1} parent=5 // pred_fallthru
      _
    %p255 = scmp.lt.s32.totalorder %s14, 2
    // Predicated region
    $region29: #{clip_similarity_forward.1} parent=5 // pred_check
      %p256 = pneg %p255
    $region30: #{clip_similarity_forward.1} parent=5 // pred_check_branch
      %258 = sbr.rel (%p256) target = $region32
    $region31: #{clip_similarity_forward.1} parent=5 // pred_region
      // Predicated region
      $region33: #{clip_similarity_forward.1} parent=31 // pred_check
        %p259 = pneg %p34
      $region34: #{clip_similarity_forward.1} parent=31 // pred_check_branch
        %261 = sbr.rel (%p259) target = $region36
      $region35: #{clip_similarity_forward.1} parent=31 // pred_region
        %p262 = scmp.lt.s32.totalorder %s14, 1
        %s263 = scalar_select %p262, %s14, 1
        %s264 = smul.addr %s263, 160
        %s265 = smul.addr %s264, 4
        %s266 = scalar_lea.vmem %s0, %s265
      $region36: #{clip_similarity_forward.1} parent=31 // pred_fallthru
        _
      // Predicated region
      $region37: #{clip_similarity_forward.1} parent=31 // pred_check
        %p267 = pneg %p60
      $region38: #{clip_similarity_forward.1} parent=31 // pred_check_branch
        %269 = sbr.rel (%p267) target = $region40
      $region39: #{clip_similarity_forward.1} parent=31 // pred_region
        %p270 = scmp.lt.s32.totalorder %s14, 1
        %s271 = scalar_select %p270, %s14, 1
        %s272 = smul.addr %s271, 160
        %s273 = smul.addr %s272, 4
        %s274 = scalar_lea.vmem %s1, %s273
      $region40: #{clip_similarity_forward.1} parent=31 // pred_fallthru
        _
      // Predicated region
      $region41: #{clip_similarity_forward.1} parent=31 // pred_check
        %p275 = pneg %p86
      $region42: #{clip_similarity_forward.1} parent=31 // pred_check_branch
        %277 = sbr.rel (%p275) target = $region44
      $region43: #{clip_similarity_forward.1} parent=31 // pred_region
        %p278 = scmp.lt.s32.totalorder %s14, 1
        %s279 = scalar_select %p278, %s14, 1
        %s280 = smul.addr %s279, 10
        %s281 = smul.addr %s280, 4
        %s282 = scalar_lea.vmem %s2, %s281
      $region44: #{clip_similarity_forward.1} parent=31 // pred_fallthru
        _
      // Predicated region
      $region45: #{clip_similarity_forward.1} parent=31 // pred_check
        %p283 = pneg %p112
      $region46: #{clip_similarity_forward.1} parent=31 // pred_check_branch
        %285 = sbr.rel (%p283) target = $region48
      $region47: #{clip_similarity_forward.1} parent=31 // pred_region
        %p286 = scmp.lt.s32.totalorder %s14, 1
        %s287 = scalar_select %p286, %s14, 1
        %s288 = smul.addr %s287, 10
        %s289 = smul.addr %s288, 4
        %s290 = scalar_lea.vmem %s3, %s289
      $region48: #{clip_similarity_forward.1} parent=31 // pred_fallthru
        _
    $region32: #{clip_similarity_forward.1} parent=5 // pred_fallthru
      _
    %p291 = scmp.le.s32.totalorder 1, %s14
    %p292 = scmp.lt.s32.totalorder %s14, 3
    %p293 = pnand %p291, %p292
    %p294 = pneg %p293
    // Predicated region
    $region49: #{clip_similarity_forward.1} parent=5 // pred_check
      _
    $region50: #{clip_similarity_forward.1} parent=5 // pred_check_branch
      %296 = sbr.rel (%p293) target = $region52
    $region51: #{clip_similarity_forward.1} parent=5 // pred_region
      %s297 = ssub.s32 %s14, 1
      %p298 = scmp.lt.s32.totalorder %s19, 1
      %s299 = scalar_select %p298, %s19, 1
      %s300 = smul.addr %s299, 160
      %s301 = smul.addr %s300, 4
      %s302 = scalar_lea.vmem %s0, %s301
      %p303 = pneg %p40
      %p304 = pneg %p37
      %p305 = scmp.lt.s32.totalorder %s19, 1
      %s306 = scalar_select %p305, %s19, 1
      %s307 = smul.addr %s306, 160
      %s308 = smul.addr %s307, 4
      %s309 = scalar_lea.vmem %s1, %s308
      %p310 = pneg %p66
      %p311 = pneg %p63
      %p312 = scmp.lt.s32.totalorder %s19, 1
      %s313 = scalar_select %p312, %s19, 1
      %s314 = smul.addr %s313, 10
      %s315 = smul.addr %s314, 4
      %s316 = scalar_lea.vmem %s2, %s315
      %p317 = pneg %p92
      %p318 = pneg %p89
      %p319 = scmp.lt.s32.totalorder %s19, 1
      %s320 = scalar_select %p319, %s19, 1
      %s321 = smul.addr %s320, 10
      %s322 = smul.addr %s321, 4
      %s323 = scalar_lea.vmem %s3, %s322
      %p324 = pneg %p118
      %p325 = pneg %p115
      %p326 = pneg %p139
      %p327 = pneg %p136
      %p328 = pneg %p160
      %p329 = pneg %p157
      %p330 = pneg %p181
      %p331 = pneg %p178
      %p332 = pneg %p202
      %p333 = pneg %p199
      %p334 = pneg %p228
      %p335 = pneg %p225
      %p336 = scmp.lt.s32.totalorder %s19, 1
      %s337 = scalar_select %p336, %s19, 1
      %s338 = scalar_lea.vmem %s8, %s337
      %p339 = scmp.lt.s32.totalorder %s19, 1
      %s340 = scalar_select %p339, %s19, 1
      %s341 = smul.addr %s340, 160
      %s342 = smul.addr %s341, 4
      %s343 = scalar_lea.vmem %s0, %s342
      %p344 = scmp.lt.s32.totalorder %s19, 1
      %s345 = scalar_select %p344, %s19, 1
      %s346 = smul.addr %s345, 160
      %s347 = smul.addr %s346, 4
      %s348 = scalar_lea.vmem %s1, %s347
      %p349 = scmp.lt.s32.totalorder %s19, 1
      %s350 = scalar_select %p349, %s19, 1
      %s351 = smul.addr %s350, 10
      %s352 = smul.addr %s351, 4
      %s353 = scalar_lea.vmem %s2, %s352
      %p354 = scmp.lt.s32.totalorder %s19, 1
      %s355 = scalar_select %p354, %s19, 1
      %s356 = smul.addr %s355, 10
      %s357 = smul.addr %s356, 4
      %s358 = scalar_lea.vmem %s3, %s357
      %p359 = scmp.lt.s32.totalorder %s19, 1
      %s360 = scalar_select %p359, %s19, 1
      %s361 = scalar_lea.vmem %s8, %s360
      %v363 = vld [vmem:[%s343] sm:$0xff]
      %v364 = vld [vmem:[%s343 + $0x8] sm:$0xff]
      %v365 = vld [vmem:[%s343 + $0x10] sm:$0xf]
      %v366 = vld [vmem:[%s343 + $0x14] sm:$0xff]
      %v367 = vld [vmem:[%s343 + $0x1c] sm:$0xff]
      %v368 = vld [vmem:[%s343 + $0x24] sm:$0xf]
      %v369 = vld [vmem:[%s343 + $0x28] sm:$0xff]
      %v370 = vld [vmem:[%s343 + $0x30] sm:$0xff]
      %v371 = vld [vmem:[%s343 + $0x38] sm:$0xf]
      %v372 = vld [vmem:[%s343 + $0x3c] sm:$0xff]
      %v373 = vld [vmem:[%s343 + $0x44] sm:$0xff]
      %v374 = vld [vmem:[%s343 + $0x4c] sm:$0xf]
      %v375 = vld [vmem:[%s343 + $0x50] sm:$0xff]
      %v376 = vld [vmem:[%s343 + $0x58] sm:$0xff]
      %v377 = vld [vmem:[%s343 + $0x60] sm:$0xf]
      %v378 = vld [vmem:[%s343 + $0x64] sm:$0xff]
      %v379 = vld [vmem:[%s343 + $0x6c] sm:$0xff]
      %v380 = vld [vmem:[%s343 + $0x74] sm:$0xf]
      %v381 = vld [vmem:[%s343 + $0x78] sm:$0xff]
      %v382 = vld [vmem:[%s343 + $0x80] sm:$0xff]
      %v383 = vld [vmem:[%s343 + $0x88] sm:$0xf]
      %v384 = vld [vmem:[%s343 + $0x8c] sm:$0xff]
      %v385 = vld [vmem:[%s343 + $0x94] sm:$0xff]
      %v386 = vld [vmem:[%s343 + $0x9c] sm:$0xf]
      %v387 = vld [vmem:[%s343 + $0xa0] sm:$0xff]
      %v388 = vld [vmem:[%s343 + $0xa8] sm:$0xff]
      %v389 = vld [vmem:[%s343 + $0xb0] sm:$0xf]
      %v390 = vld [vmem:[%s343 + $0xb4] sm:$0xff]
      %v391 = vld [vmem:[%s343 + $0xbc] sm:$0xff]
      %v392 = vld [vmem:[%s343 + $0xc4] sm:$0xf]
      %v393 = vld [vmem:[%s343 + $0xc8] sm:$0xff]
      %v394 = vld [vmem:[%s343 + $0xd0] sm:$0xff]
      %v395 = vld [vmem:[%s343 + $0xd8] sm:$0xf]
      %v396 = vld [vmem:[%s343 + $0xdc] sm:$0xff]
      %v397 = vld [vmem:[%s343 + $0xe4] sm:$0xff]
      %v398 = vld [vmem:[%s343 + $0xec] sm:$0xf]
      %v399 = vld [vmem:[%s343 + $0xf0] sm:$0xff]
      %v400 = vld [vmem:[%s343 + $0xf8] sm:$0xff]
      %v401 = vld [vmem:[%s343 + $0x100] sm:$0xf]
      %v402 = vld [vmem:[%s343 + $0x104] sm:$0xff]
      %v403 = vld [vmem:[%s343 + $0x10c] sm:$0xff]
      %v404 = vld [vmem:[%s343 + $0x114] sm:$0xf]
      %v405 = vld [vmem:[%s343 + $0x118] sm:$0xff]
      %v406 = vld [vmem:[%s343 + $0x120] sm:$0xff]
      %v407 = vld [vmem:[%s343 + $0x128] sm:$0xf]
      %v408 = vld [vmem:[%s343 + $0x12c] sm:$0xff]
      %v409 = vld [vmem:[%s343 + $0x134] sm:$0xff]
      %v410 = vld [vmem:[%s343 + $0x13c] sm:$0xf]
      %v411 = vld [vmem:[%s343 + $0x140] sm:$0xff]
      %v412 = vld [vmem:[%s343 + $0x148] sm:$0xff]
      %v413 = vld [vmem:[%s343 + $0x150] sm:$0xf]
      %v414 = vld [vmem:[%s343 + $0x154] sm:$0xff]
      %v415 = vld [vmem:[%s343 + $0x15c] sm:$0xff]
      %v416 = vld [vmem:[%s343 + $0x164] sm:$0xf]
      %v417 = vld [vmem:[%s343 + $0x168] sm:$0xff]
      %v418 = vld [vmem:[%s343 + $0x170] sm:$0xff]
      %v419 = vld [vmem:[%s343 + $0x178] sm:$0xf]
      %v420 = vld [vmem:[%s343 + $0x17c] sm:$0xff]
      %v421 = vld [vmem:[%s343 + $0x184] sm:$0xff]
      %v422 = vld [vmem:[%s343 + $0x18c] sm:$0xf]
      %v423 = vld [vmem:[%s343 + $0x190] sm:$0xff]
      %v424 = vld [vmem:[%s343 + $0x198] sm:$0xff]
      %v425 = vld [vmem:[%s343 + $0x1a0] sm:$0xf]
      %v426 = vld [vmem:[%s343 + $0x1a4] sm:$0xff]
      %v427 = vld [vmem:[%s343 + $0x1ac] sm:$0xff]
      %v428 = vld [vmem:[%s343 + $0x1b4] sm:$0xf]
      %v429 = vld [vmem:[%s343 + $0x1b8] sm:$0xff]
      %v430 = vld [vmem:[%s343 + $0x1c0] sm:$0xff]
      %v431 = vld [vmem:[%s343 + $0x1c8] sm:$0xf]
      %v432 = vld [vmem:[%s343 + $0x1cc] sm:$0xff]
      %v433 = vld [vmem:[%s343 + $0x1d4] sm:$0xff]
      %v434 = vld [vmem:[%s343 + $0x1dc] sm:$0xf]
      %v435 = vld [vmem:[%s343 + $0x1e0] sm:$0xff]
      %v436 = vld [vmem:[%s343 + $0x1e8] sm:$0xff]
      %v437 = vld [vmem:[%s343 + $0x1f0] sm:$0xf]
      %v438 = vld [vmem:[%s343 + $0x1f4] sm:$0xff]
      %v439 = vld [vmem:[%s343 + $0x1fc] sm:$0xff]
      %v440 = vld [vmem:[%s343 + $0x204] sm:$0xf]
      %v441 = vld [vmem:[%s343 + $0x208] sm:$0xff]
      %v442 = vld [vmem:[%s343 + $0x210] sm:$0xff]
      %v443 = vld [vmem:[%s343 + $0x218] sm:$0xf]
      %v444 = vld [vmem:[%s343 + $0x21c] sm:$0xff]
      %v445 = vld [vmem:[%s343 + $0x224] sm:$0xff]
      %v446 = vld [vmem:[%s343 + $0x22c] sm:$0xf]
      %v447 = vld [vmem:[%s343 + $0x230] sm:$0xff]
      %v448 = vld [vmem:[%s343 + $0x238] sm:$0xff]
      %v449 = vld [vmem:[%s343 + $0x240] sm:$0xf]
      %v450 = vld [vmem:[%s343 + $0x244] sm:$0xff]
      %v451 = vld [vmem:[%s343 + $0x24c] sm:$0xff]
      %v452 = vld [vmem:[%s343 + $0x254] sm:$0xf]
      %v453 = vld [vmem:[%s343 + $0x258] sm:$0xff]
      %v454 = vld [vmem:[%s343 + $0x260] sm:$0xff]
      %v455 = vld [vmem:[%s343 + $0x268] sm:$0xf]
      %v456 = vld [vmem:[%s343 + $0x26c] sm:$0xff]
      %v457 = vld [vmem:[%s343 + $0x274] sm:$0xff]
      %v458 = vld [vmem:[%s343 + $0x27c] sm:$0xf]
      %v459 = vld [vmem:[%s4] sm:$0xf]
      %v460 = vld [vmem:[%s4 + $0x4] sm:$0xf]
      %v461 = vld [vmem:[%s4 + $0x8] sm:$0xf]
      %v462 = vld [vmem:[%s4 + $0xc] sm:$0xf]
      %v463 = vld [vmem:[%s4 + $0x10] sm:$0xf]
      %v464 = vld [vmem:[%s4 + $0x14] sm:$0xf]
      %v465 = vld [vmem:[%s4 + $0x18] sm:$0xf]
      %v466 = vld [vmem:[%s4 + $0x1c] sm:$0xf]
      %v467 = vld [vmem:[%s4 + $0x20] sm:$0xf]
      %v468 = vld [vmem:[%s4 + $0x24] sm:$0xf]
      %v469 = vld [vmem:[%s4 + $0x28] sm:$0xf]
      %v470 = vld [vmem:[%s4 + $0x2c] sm:$0xf]
      %v471 = vld [vmem:[%s4 + $0x30] sm:$0xf]
      %v472 = vld [vmem:[%s4 + $0x34] sm:$0xf]
      %v473 = vld [vmem:[%s4 + $0x38] sm:$0xf]
      %v474 = vld [vmem:[%s4 + $0x3c] sm:$0xf]
      %v475 = vld [vmem:[%s4 + $0x40] sm:$0xf]
      %v476 = vld [vmem:[%s4 + $0x44] sm:$0xf]
      %v477 = vld [vmem:[%s4 + $0x48] sm:$0xf]
      %v478 = vld [vmem:[%s4 + $0x4c] sm:$0xf]
      %v479 = vld [vmem:[%s4 + $0x50] sm:$0xf]
      %v480 = vld [vmem:[%s4 + $0x54] sm:$0xf]
      %v481 = vld [vmem:[%s4 + $0x58] sm:$0xf]
      %v482 = vld [vmem:[%s4 + $0x5c] sm:$0xf]
      %v483 = vld [vmem:[%s4 + $0x60] sm:$0xf]
      %v484 = vld [vmem:[%s4 + $0x64] sm:$0xf]
      %v485 = vld [vmem:[%s4 + $0x68] sm:$0xf]
      %v486 = vld [vmem:[%s4 + $0x6c] sm:$0xf]
      %v487 = vld [vmem:[%s4 + $0x70] sm:$0xf]
      %v488 = vld [vmem:[%s4 + $0x74] sm:$0xf]
      %v489 = vld [vmem:[%s4 + $0x78] sm:$0xf]
      %v490 = vld [vmem:[%s4 + $0x7c] sm:$0xf]
      %v491 = vld [vmem:[%s4 + $0x80] sm:$0xf]
      %v492 = vld [vmem:[%s4 + $0x84] sm:$0xf]
      %v493 = vld [vmem:[%s4 + $0x88] sm:$0xf]
      %v494 = vld [vmem:[%s4 + $0x8c] sm:$0xf]
      %v495 = vld [vmem:[%s4 + $0x90] sm:$0xf]
      %v496 = vld [vmem:[%s4 + $0x94] sm:$0xf]
      %v497 = vld [vmem:[%s4 + $0x98] sm:$0xf]
      %v498 = vld [vmem:[%s4 + $0x9c] sm:$0xf]
      %v499 = vld [vmem:[%s4 + $0xa0] sm:$0xf]
      %v500 = vld [vmem:[%s4 + $0xa4] sm:$0xf]
      %v501 = vld [vmem:[%s4 + $0xa8] sm:$0xf]
      %v502 = vld [vmem:[%s4 + $0xac] sm:$0xf]
      %v503 = vld [vmem:[%s4 + $0xb0] sm:$0xf]
      %v504 = vld [vmem:[%s4 + $0xb4] sm:$0xf]
      %v505 = vld [vmem:[%s4 + $0xb8] sm:$0xf]
      %v506 = vld [vmem:[%s4 + $0xbc] sm:$0xf]
      %v507 = vld [vmem:[%s4 + $0xc0] sm:$0xf]
      %v508 = vld [vmem:[%s4 + $0xc4] sm:$0xf]
      %v509 = vld [vmem:[%s4 + $0xc8] sm:$0xf]
      %v510 = vld [vmem:[%s4 + $0xcc] sm:$0xf]
      %v511 = vld [vmem:[%s4 + $0xd0] sm:$0xf]
      %v512 = vld [vmem:[%s4 + $0xd4] sm:$0xf]
      %v513 = vld [vmem:[%s4 + $0xd8] sm:$0xf]
      %v514 = vld [vmem:[%s4 + $0xdc] sm:$0xf]
      %v515 = vld [vmem:[%s4 + $0xe0] sm:$0xf]
      %v516 = vld [vmem:[%s4 + $0xe4] sm:$0xf]
      %v517 = vld [vmem:[%s4 + $0xe8] sm:$0xf]
      %v518 = vld [vmem:[%s4 + $0xec] sm:$0xf]
      %v519 = vld [vmem:[%s4 + $0xf0] sm:$0xf]
      %v520 = vld [vmem:[%s4 + $0xf4] sm:$0xf]
      %v521 = vld [vmem:[%s4 + $0xf8] sm:$0xf]
      %v522 = vld [vmem:[%s4 + $0xfc] sm:$0xf]
      %v523 = vld [vmem:[%s4 + $0x100] sm:$0xf]
      %v524 = vld [vmem:[%s4 + $0x104] sm:$0xf]
      %v525 = vld [vmem:[%s4 + $0x108] sm:$0xf]
      %v526 = vld [vmem:[%s4 + $0x10c] sm:$0xf]
      %v527 = vld [vmem:[%s4 + $0x110] sm:$0xf]
      %v528 = vld [vmem:[%s4 + $0x114] sm:$0xf]
      %v529 = vld [vmem:[%s4 + $0x118] sm:$0xf]
      %v530 = vld [vmem:[%s4 + $0x11c] sm:$0xf]
      %v531 = vld [vmem:[%s4 + $0x120] sm:$0xf]
      %v532 = vld [vmem:[%s4 + $0x124] sm:$0xf]
      %v533 = vld [vmem:[%s4 + $0x128] sm:$0xf]
      %v534 = vld [vmem:[%s4 + $0x12c] sm:$0xf]
      %v535 = vld [vmem:[%s4 + $0x130] sm:$0xf]
      %v536 = vld [vmem:[%s4 + $0x134] sm:$0xf]
      %v537 = vld [vmem:[%s4 + $0x138] sm:$0xf]
      %v538 = vld [vmem:[%s4 + $0x13c] sm:$0xf]
      %v539 = vld [vmem:[%s5] sm:$0x1]
      %v541 = vlaneseq
      %v542 = vshrl.u32 %v541, 7
      %v543 = vsub.s32 0, %v542
      %v544 = vrot.slane %v539, %v543
      %v642 = vunpack.c.l.b16 %v363
      %v643 = vunpack.c.h.b16 %v363
      %v644 = vunpack.c.l.b16 %v364
      %v645 = vunpack.c.h.b16 %v364
      %v646 = vunpack.c.l.b16 %v365
      %v647 = vunpack.c.l.b16 %v366
      %v648 = vunpack.c.h.b16 %v366
      %v649 = vunpack.c.l.b16 %v367
      %v650 = vunpack.c.h.b16 %v367
      %v651 = vunpack.c.l.b16 %v368
      %v652 = vunpack.c.l.b16 %v369
      %v653 = vunpack.c.h.b16 %v369
      %v654 = vunpack.c.l.b16 %v370
      %v655 = vunpack.c.h.b16 %v370
      %v656 = vunpack.c.l.b16 %v371
      %v657 = vunpack.c.l.b16 %v372
      %v658 = vunpack.c.h.b16 %v372
      %v659 = vunpack.c.l.b16 %v373
      %v660 = vunpack.c.h.b16 %v373
      %v661 = vunpack.c.l.b16 %v374
      %v662 = vunpack.c.l.b16 %v375
      %v663 = vunpack.c.h.b16 %v375
      %v664 = vunpack.c.l.b16 %v376
      %v665 = vunpack.c.h.b16 %v376
      %v666 = vunpack.c.l.b16 %v377
      %v667 = vunpack.c.l.b16 %v378
      %v668 = vunpack.c.h.b16 %v378
      %v669 = vunpack.c.l.b16 %v379
      %v670 = vunpack.c.h.b16 %v379
      %v671 = vunpack.c.l.b16 %v380
      %v672 = vunpack.c.l.b16 %v381
      %v673 = vunpack.c.h.b16 %v381
      %v674 = vunpack.c.l.b16 %v382
      %v675 = vunpack.c.h.b16 %v382
      %v676 = vunpack.c.l.b16 %v383
      %v677 = vunpack.c.l.b16 %v384
      %v678 = vunpack.c.h.b16 %v384
      %v679 = vunpack.c.l.b16 %v385
      %v680 = vunpack.c.h.b16 %v385
      %v681 = vunpack.c.l.b16 %v386
      %v682 = vunpack.c.l.b16 %v387
      %v683 = vunpack.c.h.b16 %v387
      %v684 = vunpack.c.l.b16 %v388
      %v685 = vunpack.c.h.b16 %v388
      %v686 = vunpack.c.l.b16 %v389
      %v687 = vunpack.c.l.b16 %v390
      %v688 = vunpack.c.h.b16 %v390
      %v689 = vunpack.c.l.b16 %v391
      %v690 = vunpack.c.h.b16 %v391
      %v691 = vunpack.c.l.b16 %v392
      %v692 = vunpack.c.l.b16 %v393
      %v693 = vunpack.c.h.b16 %v393
      %v694 = vunpack.c.l.b16 %v394
      %v695 = vunpack.c.h.b16 %v394
      %v696 = vunpack.c.l.b16 %v395
      %v697 = vunpack.c.l.b16 %v396
      %v698 = vunpack.c.h.b16 %v396
      %v699 = vunpack.c.l.b16 %v397
      %v700 = vunpack.c.h.b16 %v397
      %v701 = vunpack.c.l.b16 %v398
      %v702 = vunpack.c.l.b16 %v399
      %v703 = vunpack.c.h.b16 %v399
      %v704 = vunpack.c.l.b16 %v400
      %v705 = vunpack.c.h.b16 %v400
      %v706 = vunpack.c.l.b16 %v401
      %v707 = vunpack.c.l.b16 %v402
      %v708 = vunpack.c.h.b16 %v402
      %v709 = vunpack.c.l.b16 %v403
      %v710 = vunpack.c.h.b16 %v403
      %v711 = vunpack.c.l.b16 %v404
      %v712 = vunpack.c.l.b16 %v405
      %v713 = vunpack.c.h.b16 %v405
      %v714 = vunpack.c.l.b16 %v406
      %v715 = vunpack.c.h.b16 %v406
      %v716 = vunpack.c.l.b16 %v407
      %v717 = vunpack.c.l.b16 %v408
      %v718 = vunpack.c.h.b16 %v408
      %v719 = vunpack.c.l.b16 %v409
      %v720 = vunpack.c.h.b16 %v409
      %v721 = vunpack.c.l.b16 %v410
      %v722 = vunpack.c.l.b16 %v411
      %v723 = vunpack.c.h.b16 %v411
      %v724 = vunpack.c.l.b16 %v412
      %v725 = vunpack.c.h.b16 %v412
      %v726 = vunpack.c.l.b16 %v413
      %v727 = vunpack.c.l.b16 %v414
      %v728 = vunpack.c.h.b16 %v414
      %v729 = vunpack.c.l.b16 %v415
      %v730 = vunpack.c.h.b16 %v415
      %v731 = vunpack.c.l.b16 %v416
      %v732 = vunpack.c.l.b16 %v417
      %v733 = vunpack.c.h.b16 %v417
      %v734 = vunpack.c.l.b16 %v418
      %v735 = vunpack.c.h.b16 %v418
      %v736 = vunpack.c.l.b16 %v419
      %v737 = vunpack.c.l.b16 %v420
      %v738 = vunpack.c.h.b16 %v420
      %v739 = vunpack.c.l.b16 %v421
      %v740 = vunpack.c.h.b16 %v421
      %v741 = vunpack.c.l.b16 %v422
      %v742 = vunpack.c.l.b16 %v423
      %v743 = vunpack.c.h.b16 %v423
      %v744 = vunpack.c.l.b16 %v424
      %v745 = vunpack.c.h.b16 %v424
      %v746 = vunpack.c.l.b16 %v425
      %v747 = vunpack.c.l.b16 %v426
      %v748 = vunpack.c.h.b16 %v426
      %v749 = vunpack.c.l.b16 %v427
      %v750 = vunpack.c.h.b16 %v427
      %v751 = vunpack.c.l.b16 %v428
      %v752 = vunpack.c.l.b16 %v429
      %v753 = vunpack.c.h.b16 %v429
      %v754 = vunpack.c.l.b16 %v430
      %v755 = vunpack.c.h.b16 %v430
      %v756 = vunpack.c.l.b16 %v431
      %v757 = vunpack.c.l.b16 %v432
      %v758 = vunpack.c.h.b16 %v432
      %v759 = vunpack.c.l.b16 %v433
      %v760 = vunpack.c.h.b16 %v433
      %v761 = vunpack.c.l.b16 %v434
      %v762 = vunpack.c.l.b16 %v435
      %v763 = vunpack.c.h.b16 %v435
      %v764 = vunpack.c.l.b16 %v436
      %v765 = vunpack.c.h.b16 %v436
      %v766 = vunpack.c.l.b16 %v437
      %v767 = vunpack.c.l.b16 %v438
      %v768 = vunpack.c.h.b16 %v438
      %v769 = vunpack.c.l.b16 %v439
      %v770 = vunpack.c.h.b16 %v439
      %v771 = vunpack.c.l.b16 %v440
      %v772 = vunpack.c.l.b16 %v441
      %v773 = vunpack.c.h.b16 %v441
      %v774 = vunpack.c.l.b16 %v442
      %v775 = vunpack.c.h.b16 %v442
      %v776 = vunpack.c.l.b16 %v443
      %v777 = vunpack.c.l.b16 %v444
      %v778 = vunpack.c.h.b16 %v444
      %v779 = vunpack.c.l.b16 %v445
      %v780 = vunpack.c.h.b16 %v445
      %v781 = vunpack.c.l.b16 %v446
      %v782 = vunpack.c.l.b16 %v447
      %v783 = vunpack.c.h.b16 %v447
      %v784 = vunpack.c.l.b16 %v448
      %v785 = vunpack.c.h.b16 %v448
      %v786 = vunpack.c.l.b16 %v449
      %v787 = vunpack.c.l.b16 %v450
      %v788 = vunpack.c.h.b16 %v450
      %v789 = vunpack.c.l.b16 %v451
      %v790 = vunpack.c.h.b16 %v451
      %v791 = vunpack.c.l.b16 %v452
      %v792 = vunpack.c.l.b16 %v453
      %v793 = vunpack.c.h.b16 %v453
      %v794 = vunpack.c.l.b16 %v454
      %v795 = vunpack.c.h.b16 %v454
      %v796 = vunpack.c.l.b16 %v455
      %v797 = vunpack.c.l.b16 %v456
      %v798 = vunpack.c.h.b16 %v456
      %v799 = vunpack.c.l.b16 %v457
      %v800 = vunpack.c.h.b16 %v457
      %v801 = vunpack.c.l.b16 %v458
      %v802 = vpack.c.b16 %v647, %v642
      %v803 = vpack.c.b16 %v648, %v643
      %v804 = vpack.c.b16 %v649, %v644
      %v805 = vpack.c.b16 %v650, %v645
      %v806 = vpack.c.b16 %v651, %v646
      %v807 = vpack.c.b16 %v657, %v652
      %v808 = vpack.c.b16 %v658, %v653
      %v809 = vpack.c.b16 %v659, %v654
      %v810 = vpack.c.b16 %v660, %v655
      %v811 = vpack.c.b16 %v661, %v656
      %v812 = vpack.c.b16 %v667, %v662
      %v813 = vpack.c.b16 %v668, %v663
      %v814 = vpack.c.b16 %v669, %v664
      %v815 = vpack.c.b16 %v670, %v665
      %v816 = vpack.c.b16 %v671, %v666
      %v817 = vpack.c.b16 %v677, %v672
      %v818 = vpack.c.b16 %v678, %v673
      %v819 = vpack.c.b16 %v679, %v674
      %v820 = vpack.c.b16 %v680, %v675
      %v821 = vpack.c.b16 %v681, %v676
      %v822 = vpack.c.b16 %v687, %v682
      %v823 = vpack.c.b16 %v688, %v683
      %v824 = vpack.c.b16 %v689, %v684
      %v825 = vpack.c.b16 %v690, %v685
      %v826 = vpack.c.b16 %v691, %v686
      %v827 = vpack.c.b16 %v697, %v692
      %v828 = vpack.c.b16 %v698, %v693
      %v829 = vpack.c.b16 %v699, %v694
      %v830 = vpack.c.b16 %v700, %v695
      %v831 = vpack.c.b16 %v701, %v696
      %v832 = vpack.c.b16 %v707, %v702
      %v833 = vpack.c.b16 %v708, %v703
      %v834 = vpack.c.b16 %v709, %v704
      %v835 = vpack.c.b16 %v710, %v705
      %v836 = vpack.c.b16 %v711, %v706
      %v837 = vpack.c.b16 %v717, %v712
      %v838 = vpack.c.b16 %v718, %v713
      %v839 = vpack.c.b16 %v719, %v714
      %v840 = vpack.c.b16 %v720, %v715
      %v841 = vpack.c.b16 %v721, %v716
      %v842 = vpack.c.b16 %v727, %v722
      %v843 = vpack.c.b16 %v728, %v723
      %v844 = vpack.c.b16 %v729, %v724
      %v845 = vpack.c.b16 %v730, %v725
      %v846 = vpack.c.b16 %v731, %v726
      %v847 = vpack.c.b16 %v737, %v732
      %v848 = vpack.c.b16 %v738, %v733
      %v849 = vpack.c.b16 %v739, %v734
      %v850 = vpack.c.b16 %v740, %v735
      %v851 = vpack.c.b16 %v741, %v736
      %v852 = vpack.c.b16 %v747, %v742
      %v853 = vpack.c.b16 %v748, %v743
      %v854 = vpack.c.b16 %v749, %v744
      %v855 = vpack.c.b16 %v750, %v745
      %v856 = vpack.c.b16 %v751, %v746
      %v857 = vpack.c.b16 %v757, %v752
      %v858 = vpack.c.b16 %v758, %v753
      %v859 = vpack.c.b16 %v759, %v754
      %v860 = vpack.c.b16 %v760, %v755
      %v861 = vpack.c.b16 %v761, %v756
      %v862 = vpack.c.b16 %v767, %v762
      %v863 = vpack.c.b16 %v768, %v763
      %v864 = vpack.c.b16 %v769, %v764
      %v865 = vpack.c.b16 %v770, %v765
      %v866 = vpack.c.b16 %v771, %v766
      %v867 = vpack.c.b16 %v777, %v772
      %v868 = vpack.c.b16 %v778, %v773
      %v869 = vpack.c.b16 %v779, %v774
      %v870 = vpack.c.b16 %v780, %v775
      %v871 = vpack.c.b16 %v781, %v776
      %v872 = vpack.c.b16 %v787, %v782
      %v873 = vpack.c.b16 %v788, %v783
      %v874 = vpack.c.b16 %v789, %v784
      %v875 = vpack.c.b16 %v790, %v785
      %v876 = vpack.c.b16 %v791, %v786
      %v877 = vpack.c.b16 %v797, %v792
      %v878 = vpack.c.b16 %v798, %v793
      %v879 = vpack.c.b16 %v799, %v794
      %v880 = vpack.c.b16 %v800, %v795
      %v881 = vpack.c.b16 %v801, %v796
      %v1042 = vunpack.c.l.b16 %v459
      %v1043 = vunpack.c.l.b16 %v460
      %v1044 = vunpack.c.l.b16 %v461
      %v1045 = vunpack.c.l.b16 %v462
      %v1046 = vunpack.c.l.b16 %v463
      %v1047 = vunpack.c.l.b16 %v464
      %v1048 = vunpack.c.l.b16 %v465
      %v1049 = vunpack.c.l.b16 %v466
      %v1050 = vunpack.c.l.b16 %v467
      %v1051 = vunpack.c.l.b16 %v468
      %v1052 = vunpack.c.l.b16 %v469
      %v1053 = vunpack.c.l.b16 %v470
      %v1054 = vunpack.c.l.b16 %v471
      %v1055 = vunpack.c.l.b16 %v472
      %v1056 = vunpack.c.l.b16 %v473
      %v1057 = vunpack.c.l.b16 %v474
      %v1058 = vunpack.c.l.b16 %v475
      %v1059 = vunpack.c.l.b16 %v476
      %v1060 = vunpack.c.l.b16 %v477
      %v1061 = vunpack.c.l.b16 %v478
      %v1062 = vunpack.c.l.b16 %v479
      %v1063 = vunpack.c.l.b16 %v480
      %v1064 = vunpack.c.l.b16 %v481
      %v1065 = vunpack.c.l.b16 %v482
      %v1066 = vunpack.c.l.b16 %v483
      %v1067 = vunpack.c.l.b16 %v484
      %v1068 = vunpack.c.l.b16 %v485
      %v1069 = vunpack.c.l.b16 %v486
      %v1070 = vunpack.c.l.b16 %v487
      %v1071 = vunpack.c.l.b16 %v488
      %v1072 = vunpack.c.l.b16 %v489
      %v1073 = vunpack.c.l.b16 %v490
      %v1074 = vunpack.c.l.b16 %v491
      %v1075 = vunpack.c.l.b16 %v492
      %v1076 = vunpack.c.l.b16 %v493
      %v1077 = vunpack.c.l.b16 %v494
      %v1078 = vunpack.c.l.b16 %v495
      %v1079 = vunpack.c.l.b16 %v496
      %v1080 = vunpack.c.l.b16 %v497
      %v1081 = vunpack.c.l.b16 %v498
      %v1082 = vunpack.c.l.b16 %v499
      %v1083 = vunpack.c.l.b16 %v500
      %v1084 = vunpack.c.l.b16 %v501
      %v1085 = vunpack.c.l.b16 %v502
      %v1086 = vunpack.c.l.b16 %v503
      %v1087 = vunpack.c.l.b16 %v504
      %v1088 = vunpack.c.l.b16 %v505
      %v1089 = vunpack.c.l.b16 %v506
      %v1090 = vunpack.c.l.b16 %v507
      %v1091 = vunpack.c.l.b16 %v508
      %v1092 = vunpack.c.l.b16 %v509
      %v1093 = vunpack.c.l.b16 %v510
      %v1094 = vunpack.c.l.b16 %v511
      %v1095 = vunpack.c.l.b16 %v512
      %v1096 = vunpack.c.l.b16 %v513
      %v1097 = vunpack.c.l.b16 %v514
      %v1098 = vunpack.c.l.b16 %v515
      %v1099 = vunpack.c.l.b16 %v516
      %v1100 = vunpack.c.l.b16 %v517
      %v1101 = vunpack.c.l.b16 %v518
      %v1102 = vunpack.c.l.b16 %v519
      %v1103 = vunpack.c.l.b16 %v520
      %v1104 = vunpack.c.l.b16 %v521
      %v1105 = vunpack.c.l.b16 %v522
      %v1106 = vunpack.c.l.b16 %v523
      %v1107 = vunpack.c.l.b16 %v524
      %v1108 = vunpack.c.l.b16 %v525
      %v1109 = vunpack.c.l.b16 %v526
      %v1110 = vunpack.c.l.b16 %v527
      %v1111 = vunpack.c.l.b16 %v528
      %v1112 = vunpack.c.l.b16 %v529
      %v1113 = vunpack.c.l.b16 %v530
      %v1114 = vunpack.c.l.b16 %v531
      %v1115 = vunpack.c.l.b16 %v532
      %v1116 = vunpack.c.l.b16 %v533
      %v1117 = vunpack.c.l.b16 %v534
      %v1118 = vunpack.c.l.b16 %v535
      %v1119 = vunpack.c.l.b16 %v536
      %v1120 = vunpack.c.l.b16 %v537
      %v1121 = vunpack.c.l.b16 %v538
      %v1122 = vpack.c.b16 %v1043, %v1042
      %v1123 = vpack.c.b16 %v1045, %v1044
      %v1124 = vpack.c.b16 %v1047, %v1046
      %v1125 = vpack.c.b16 %v1049, %v1048
      %v1126 = vpack.c.b16 %v1051, %v1050
      %v1127 = vpack.c.b16 %v1053, %v1052
      %v1128 = vpack.c.b16 %v1055, %v1054
      %v1129 = vpack.c.b16 %v1057, %v1056
      %v1130 = vpack.c.b16 %v1059, %v1058
      %v1131 = vpack.c.b16 %v1061, %v1060
      %v1132 = vpack.c.b16 %v1063, %v1062
      %v1133 = vpack.c.b16 %v1065, %v1064
      %v1134 = vpack.c.b16 %v1067, %v1066
      %v1135 = vpack.c.b16 %v1069, %v1068
      %v1136 = vpack.c.b16 %v1071, %v1070
      %v1137 = vpack.c.b16 %v1073, %v1072
      %v1138 = vpack.c.b16 %v1075, %v1074
      %v1139 = vpack.c.b16 %v1077, %v1076
      %v1140 = vpack.c.b16 %v1079, %v1078
      %v1141 = vpack.c.b16 %v1081, %v1080
      %v1142 = vpack.c.b16 %v1083, %v1082
      %v1143 = vpack.c.b16 %v1085, %v1084
      %v1144 = vpack.c.b16 %v1087, %v1086
      %v1145 = vpack.c.b16 %v1089, %v1088
      %v1146 = vpack.c.b16 %v1091, %v1090
      %v1147 = vpack.c.b16 %v1093, %v1092
      %v1148 = vpack.c.b16 %v1095, %v1094
      %v1149 = vpack.c.b16 %v1097, %v1096
      %v1150 = vpack.c.b16 %v1099, %v1098
      %v1151 = vpack.c.b16 %v1101, %v1100
      %v1152 = vpack.c.b16 %v1103, %v1102
      %v1153 = vpack.c.b16 %v1105, %v1104
      %v1154 = vpack.c.b16 %v1107, %v1106
      %v1155 = vpack.c.b16 %v1109, %v1108
      %v1156 = vpack.c.b16 %v1111, %v1110
      %v1157 = vpack.c.b16 %v1113, %v1112
      %v1158 = vpack.c.b16 %v1115, %v1114
      %v1159 = vpack.c.b16 %v1117, %v1116
      %v1160 = vpack.c.b16 %v1119, %v1118
      %v1161 = vpack.c.b16 %v1121, %v1120
      %1202 = vmatprep.subr.bf16.mxu0 0
      %1203 = vmatpush1.bf16.msra.mxu0 %v1122
      %1204 = vmatprep.subr.bf16.mxu0 0
      %1205 = vmatpush1.bf16.msra.mxu0 %v1123
      %1206 = vmatprep.subr.bf16.mxu0 0
      %1207 = vmatpush1.bf16.msra.mxu0 %v1124
      %1208 = vmatprep.subr.bf16.mxu0 0
      %1209 = vmatpush1.bf16.msra.mxu0 %v1125
      %1210 = vmatprep.subr.bf16.mxu0 0
      %1211 = vmatpush1.bf16.msra.mxu0 %v1126
      %1212 = vmatprep.subr.bf16.mxu0 0
      %1213 = vmatpush1.bf16.msra.mxu0 %v1127
      %1214 = vmatprep.subr.bf16.mxu0 0
      %1215 = vmatpush1.bf16.msra.mxu0 %v1128
      %1216 = vmatprep.subr.bf16.mxu0 0
      %1217 = vmatpush1.bf16.msra.mxu0 %v1129
      %1218 = vmatprep.subr.bf16.mxu0 0
      %1219 = vmatpush1.bf16.msra.mxu0 %v1130
      %1220 = vmatprep.subr.bf16.mxu0 0
      %1221 = vmatpush1.bf16.msra.mxu0 %v1131
      %1222 = vmatprep.subr.bf16.mxu0 0
      %1223 = vmatpush1.bf16.msra.mxu0 %v1132
      %1224 = vmatprep.subr.bf16.mxu0 0
      %1225 = vmatpush1.bf16.msra.mxu0 %v1133
      %1226 = vmatprep.subr.bf16.mxu0 0
      %1227 = vmatpush1.bf16.msra.mxu0 %v1134
      %1228 = vmatprep.subr.bf16.mxu0 0
      %1229 = vmatpush1.bf16.msra.mxu0 %v1135
      %1230 = vmatprep.subr.bf16.mxu0 0
      %1231 = vmatpush1.bf16.msra.mxu0 %v1136
      %1232 = vmatprep.subr.bf16.mxu0 0
      %1233 = vmatpush1.bf16.msra.mxu0 %v1137
      %1234 = vmatprep.mubr.bf16.mxu0 %v803
      %1235 = vmatmul.mubr.bf16.gmra.mrb[0].mxu0 %v802
      %v1236 = vpop.f32.mrb[0].mxu0
      %v1237 = vadd.f32 %v544, %v1236
      %v1238 = vpop.f32.mrb[0].mxu0
      %v1239 = vpop.f32.mrb[0].mxu0
      %v1240 = vadd.f32 %v544, %v1239
      %v1241 = vpop.f32.mrb[0].mxu0
      %1242 = vmatprep.mubr.bf16.mxu0 %v808
      %1243 = vmatmul.mubr.bf16.gmra.mrb[0].mxu0 %v807
      %v1244 = vpop.f32.mrb[0].mxu0
      %v1245 = vadd.f32 %v544, %v1244
      %v1246 = vpop.f32.mrb[0].mxu0
      %v1247 = vpop.f32.mrb[0].mxu0
      %v1248 = vadd.f32 %v544, %v1247
      %v1249 = vpop.f32.mrb[0].mxu0
      %1250 = vmatprep.mubr.bf16.mxu0 %v813
      %1251 = vmatmul.mubr.bf16.gmra.mrb[0].mxu0 %v812
      %v1252 = vpop.f32.mrb[0].mxu0
      %v1253 = vadd.f32 %v544, %v1252
      %v1254 = vpop.f32.mrb[0].mxu0
      %v1255 = vpop.f32.mrb[0].mxu0
      %v1256 = vadd.f32 %v544, %v1255
      %v1257 = vpop.f32.mrb[0].mxu0
      %1258 = vmatprep.mubr.bf16.mxu0 %v818
      %1259 = vmatmul.mubr.bf16.gmra.mrb[0].mxu0 %v817
      %v1260 = vpop.f32.mrb[0].mxu0
      %v1261 = vadd.f32 %v544, %v1260
      %v1262 = vpop.f32.mrb[0].mxu0
      %v1263 = vpop.f32.mrb[0].mxu0
      %v1264 = vadd.f32 %v544, %v1263
      %v1265 = vpop.f32.mrb[0].mxu0
      %1266 = vmatprep.mubr.bf16.mxu0 %v823
      %1267 = vmatmul.mubr.bf16.gmra.mrb[0].mxu0 %v822
      %v1268 = vpop.f32.mrb[0].mxu0
      %v1269 = vadd.f32 %v544, %v1268
      %v1270 = vpop.f32.mrb[0].mxu0
      %v1271 = vpop.f32.mrb[0].mxu0
      %v1272 = vadd.f32 %v544, %v1271
      %v1273 = vpop.f32.mrb[0].mxu0
      %1274 = vmatprep.mubr.bf16.mxu0 %v828
      %1275 = vmatmul.mubr.bf16.gmra.mrb[0].mxu0 %v827
      %v1276 = vpop.f32.mrb[0].mxu0
      %v1277 = vadd.f32 %v544, %v1276
      %v1278 = vpop.f32.mrb[0].mxu0
      %v1279 = vpop.f32.mrb[0].mxu0
      %v1280 = vadd.f32 %v544, %v1279
      %v1281 = vpop.f32.mrb[0].mxu0
      %1282 = vmatprep.mubr.bf16.mxu0 %v833
      %1283 = vmatmul.mubr.bf16.gmra.mrb[0].mxu0 %v832
      %v1284 = vpop.f32.mrb[0].mxu0
      %v1285 = vadd.f32 %v544, %v1284
      %v1286 = vpop.f32.mrb[0].mxu0
      %v1287 = vpop.f32.mrb[0].mxu0
      %v1288 = vadd.f32 %v544, %v1287
      %v1289 = vpop.f32.mrb[0].mxu0
      %1290 = vmatprep.mubr.bf16.mxu0 %v838
      %1291 = vmatmul.mubr.bf16.gmra.mrb[0].mxu0 %v837
      %v1292 = vpop.f32.mrb[0].mxu0
      %v1293 = vadd.f32 %v544, %v1292
      %v1294 = vpop.f32.mrb[0].mxu0
      %v1295 = vpop.f32.mrb[0].mxu0
      %v1296 = vadd.f32 %v544, %v1295
      %v1297 = vpop.f32.mrb[0].mxu0
      %1298 = vmatprep.mubr.bf16.mxu0 %v843
      %1299 = vmatmul.mubr.bf16.gmra.mrb[0].mxu0 %v842
      %v1300 = vpop.f32.mrb[0].mxu0
      %v1301 = vadd.f32 %v544, %v1300
      %v1302 = vpop.f32.mrb[0].mxu0
      %v1303 = vpop.f32.mrb[0].mxu0
      %v1304 = vadd.f32 %v544, %v1303
      %v1305 = vpop.f32.mrb[0].mxu0
      %1306 = vmatprep.mubr.bf16.mxu0 %v848
      %1307 = vmatmul.mubr.bf16.gmra.mrb[0].mxu0 %v847
      %v1308 = vpop.f32.mrb[0].mxu0
      %v1309 = vadd.f32 %v544, %v1308
      %v1310 = vpop.f32.mrb[0].mxu0
      %v1311 = vpop.f32.mrb[0].mxu0
      %v1312 = vadd.f32 %v544, %v1311
      %v1313 = vpop.f32.mrb[0].mxu0
      %1314 = vmatprep.mubr.bf16.mxu0 %v853
      %1315 = vmatmul.mubr.bf16.gmra.mrb[0].mxu0 %v852
      %v1316 = vpop.f32.mrb[0].mxu0
      %v1317 = vadd.f32 %v544, %v1316
      %v1318 = vpop.f32.mrb[0].mxu0
      %v1319 = vpop.f32.mrb[0].mxu0
      %v1320 = vadd.f32 %v544, %v1319
      %v1321 = vpop.f32.mrb[0].mxu0
      %1322 = vmatprep.mubr.bf16.mxu0 %v858
      %1323 = vmatmul.mubr.bf16.gmra.mrb[0].mxu0 %v857
      %v1324 = vpop.f32.mrb[0].mxu0
      %v1325 = vadd.f32 %v544, %v1324
      %v1326 = vpop.f32.mrb[0].mxu0
      %v1327 = vpop.f32.mrb[0].mxu0
      %v1328 = vadd.f32 %v544, %v1327
      %v1329 = vpop.f32.mrb[0].mxu0
      %1330 = vmatprep.mubr.bf16.mxu0 %v863
      %1331 = vmatmul.mubr.bf16.gmra.mrb[0].mxu0 %v862
      %v1332 = vpop.f32.mrb[0].mxu0
      %v1333 = vadd.f32 %v544, %v1332
      %v1334 = vpop.f32.mrb[0].mxu0
      %v1335 = vpop.f32.mrb[0].mxu0
      %v1336 = vadd.f32 %v544, %v1335
      %v1337 = vpop.f32.mrb[0].mxu0
      %1338 = vmatprep.mubr.bf16.mxu0 %v868
      %1339 = vmatmul.mubr.bf16.gmra.mrb[0].mxu0 %v867
      %v1340 = vpop.f32.mrb[0].mxu0
      %v1341 = vadd.f32 %v544, %v1340
      %v1342 = vpop.f32.mrb[0].mxu0
      %v1343 = vpop.f32.mrb[0].mxu0
      %v1344 = vadd.f32 %v544, %v1343
      %v1345 = vpop.f32.mrb[0].mxu0
      %1346 = vmatprep.mubr.bf16.mxu0 %v873
      %1347 = vmatmul.mubr.bf16.gmra.mrb[0].mxu0 %v872
      %v1348 = vpop.f32.mrb[0].mxu0
      %v1349 = vadd.f32 %v544, %v1348
      %v1350 = vpop.f32.mrb[0].mxu0
      %v1351 = vpop.f32.mrb[0].mxu0
      %v1352 = vadd.f32 %v544, %v1351
      %v1353 = vpop.f32.mrb[0].mxu0
      %1354 = vmatprep.mubr.bf16.mxu0 %v878
      %1355 = vmatmul.mubr.bf16.gmra.mrb[0].mxu0 %v877
      %v1356 = vpop.f32.mrb[0].mxu0
      %v1357 = vadd.f32 %v544, %v1356
      %v1358 = vpop.f32.mrb[0].mxu0
      %v1359 = vpop.f32.mrb[0].mxu0
      %v1360 = vadd.f32 %v544, %v1359
      %v1361 = vpop.f32.mrb[0].mxu0
      %1362 = vdwg.mxu0
      %1363 = vmatprep.subr.bf16.mxu0 0
      %1364 = vmatpush1.bf16.msra.mxu0 %v1138
      %1365 = vmatprep.subr.bf16.mxu0 0
      %1366 = vmatpush1.bf16.msra.mxu0 %v1139
      %1367 = vmatprep.subr.bf16.mxu0 0
      %1368 = vmatpush1.bf16.msra.mxu0 %v1140
      %1369 = vmatprep.subr.bf16.mxu0 0
      %1370 = vmatpush1.bf16.msra.mxu0 %v1141
      %1371 = vmatprep.subr.bf16.mxu0 0
      %1372 = vmatpush1.bf16.msra.mxu0 %v1142
      %1373 = vmatprep.subr.bf16.mxu0 0
      %1374 = vmatpush1.bf16.msra.mxu0 %v1143
      %1375 = vmatprep.subr.bf16.mxu0 0
      %1376 = vmatpush1.bf16.msra.mxu0 %v1144
      %1377 = vmatprep.subr.bf16.mxu0 0
      %1378 = vmatpush1.bf16.msra.mxu0 %v1145
      %1379 = vmatprep.subr.bf16.mxu0 0
      %1380 = vmatpush1.bf16.msra.mxu0 %v1146
      %1381 = vmatprep.subr.bf16.mxu0 0
      %1382 = vmatpush1.bf16.msra.mxu0 %v1147
      %1383 = vmatprep.subr.bf16.mxu0 0
      %1384 = vmatpush1.bf16.msra.mxu0 %v1148
      %1385 = vmatprep.subr.bf16.mxu0 0
      %1386 = vmatpush1.bf16.msra.mxu0 %v1149
      %1387 = vmatprep.subr.bf16.mxu0 0
      %1388 = vmatpush1.bf16.msra.mxu0 %v1150
      %1389 = vmatprep.subr.bf16.mxu0 0
      %1390 = vmatpush1.bf16.msra.mxu0 %v1151
      %1391 = vmatprep.subr.bf16.mxu0 0
      %1392 = vmatpush1.bf16.msra.mxu0 %v1152
      %1393 = vmatprep.subr.bf16.mxu0 0
      %1394 = vmatpush1.bf16.msra.mxu0 %v1153
      %1395 = vmatprep.mubr.bf16.mxu0 %v805
      %1396 = vmatmul.mubr.bf16.gmra.mrb[0].mxu0 %v804
      %v1397 = vpop.f32.mrb[0].mxu0
      %v1398 = vadd.f32 %v1237, %v1397
      %v1399 = vpop.f32.mrb[0].mxu0
      %v1400 = vpop.f32.mrb[0].mxu0
      %v1401 = vadd.f32 %v1240, %v1400
      %v1402 = vpop.f32.mrb[0].mxu0
      %1403 = vmatprep.mubr.bf16.mxu0 %v810
      %1404 = vmatmul.mubr.bf16.gmra.mrb[0].mxu0 %v809
      %v1405 = vpop.f32.mrb[0].mxu0
      %v1406 = vadd.f32 %v1245, %v1405
      %v1407 = vpop.f32.mrb[0].mxu0
      %v1408 = vpop.f32.mrb[0].mxu0
      %v1409 = vadd.f32 %v1248, %v1408
      %v1410 = vpop.f32.mrb[0].mxu0
      %1411 = vmatprep.mubr.bf16.mxu0 %v815
      %1412 = vmatmul.mubr.bf16.gmra.mrb[0].mxu0 %v814
      %v1413 = vpop.f32.mrb[0].mxu0
      %v1414 = vadd.f32 %v1253, %v1413
      %v1415 = vpop.f32.mrb[0].mxu0
      %v1416 = vpop.f32.mrb[0].mxu0
      %v1417 = vadd.f32 %v1256, %v1416
      %v1418 = vpop.f32.mrb[0].mxu0
      %1419 = vmatprep.mubr.bf16.mxu0 %v820
      %1420 = vmatmul.mubr.bf16.gmra.mrb[0].mxu0 %v819
      %v1421 = vpop.f32.mrb[0].mxu0
      %v1422 = vadd.f32 %v1261, %v1421
      %v1423 = vpop.f32.mrb[0].mxu0
      %v1424 = vpop.f32.mrb[0].mxu0
      %v1425 = vadd.f32 %v1264, %v1424
      %v1426 = vpop.f32.mrb[0].mxu0
      %1427 = vmatprep.mubr.bf16.mxu0 %v825
      %1428 = vmatmul.mubr.bf16.gmra.mrb[0].mxu0 %v824
      %v1429 = vpop.f32.mrb[0].mxu0
      %v1430 = vadd.f32 %v1269, %v1429
      %v1431 = vpop.f32.mrb[0].mxu0
      %v1432 = vpop.f32.mrb[0].mxu0
      %v1433 = vadd.f32 %v1272, %v1432
      %v1434 = vpop.f32.mrb[0].mxu0
      %1435 = vmatprep.mubr.bf16.mxu0 %v830
      %1436 = vmatmul.mubr.bf16.gmra.mrb[0].mxu0 %v829
      %v1437 = vpop.f32.mrb[0].mxu0
      %v1438 = vadd.f32 %v1277, %v1437
      %v1439 = vpop.f32.mrb[0].mxu0
      %v1440 = vpop.f32.mrb[0].mxu0
      %v1441 = vadd.f32 %v1280, %v1440
      %v1442 = vpop.f32.mrb[0].mxu0
      %1443 = vmatprep.mubr.bf16.mxu0 %v835
      %1444 = vmatmul.mubr.bf16.gmra.mrb[0].mxu0 %v834
      %v1445 = vpop.f32.mrb[0].mxu0
      %v1446 = vadd.f32 %v1285, %v1445
      %v1447 = vpop.f32.mrb[0].mxu0
      %v1448 = vpop.f32.mrb[0].mxu0
      %v1449 = vadd.f32 %v1288, %v1448
      %v1450 = vpop.f32.mrb[0].mxu0
      %1451 = vmatprep.mubr.bf16.mxu0 %v840
      %1452 = vmatmul.mubr.bf16.gmra.mrb[0].mxu0 %v839
      %v1453 = vpop.f32.mrb[0].mxu0
      %v1454 = vadd.f32 %v1293, %v1453
      %v1455 = vpop.f32.mrb[0].mxu0
      %v1456 = vpop.f32.mrb[0].mxu0
      %v1457 = vadd.f32 %v1296, %v1456
      %v1458 = vpop.f32.mrb[0].mxu0
      %1459 = vmatprep.mubr.bf16.mxu0 %v845
      %1460 = vmatmul.mubr.bf16.gmra.mrb[0].mxu0 %v844
      %v1461 = vpop.f32.mrb[0].mxu0
      %v1462 = vadd.f32 %v1301, %v1461
      %v1463 = vpop.f32.mrb[0].mxu0
      %v1464 = vpop.f32.mrb[0].mxu0
      %v1465 = vadd.f32 %v1304, %v1464
      %v1466 = vpop.f32.mrb[0].mxu0
      %1467 = vmatprep.mubr.bf16.mxu0 %v850
      %1468 = vmatmul.mubr.bf16.gmra.mrb[0].mxu0 %v849
      %v1469 = vpop.f32.mrb[0].mxu0
      %v1470 = vadd.f32 %v1309, %v1469
      %v1471 = vpop.f32.mrb[0].mxu0
      %v1472 = vpop.f32.mrb[0].mxu0
      %v1473 = vadd.f32 %v1312, %v1472
      %v1474 = vpop.f32.mrb[0].mxu0
      %1475 = vmatprep.mubr.bf16.mxu0 %v855
      %1476 = vmatmul.mubr.bf16.gmra.mrb[0].mxu0 %v854
      %v1477 = vpop.f32.mrb[0].mxu0
      %v1478 = vadd.f32 %v1317, %v1477
      %v1479 = vpop.f32.mrb[0].mxu0
      %v1480 = vpop.f32.mrb[0].mxu0
      %v1481 = vadd.f32 %v1320, %v1480
      %v1482 = vpop.f32.mrb[0].mxu0
      %1483 = vmatprep.mubr.bf16.mxu0 %v860
      %1484 = vmatmul.mubr.bf16.gmra.mrb[0].mxu0 %v859
      %v1485 = vpop.f32.mrb[0].mxu0
      %v1486 = vadd.f32 %v1325, %v1485
      %v1487 = vpop.f32.mrb[0].mxu0
      %v1488 = vpop.f32.mrb[0].mxu0
      %v1489 = vadd.f32 %v1328, %v1488
      %v1490 = vpop.f32.mrb[0].mxu0
      %1491 = vmatprep.mubr.bf16.mxu0 %v865
      %1492 = vmatmul.mubr.bf16.gmra.mrb[0].mxu0 %v864
      %v1493 = vpop.f32.mrb[0].mxu0
      %v1494 = vadd.f32 %v1333, %v1493
      %v1495 = vpop.f32.mrb[0].mxu0
      %v1496 = vpop.f32.mrb[0].mxu0
      %v1497 = vadd.f32 %v1336, %v1496
      %v1498 = vpop.f32.mrb[0].mxu0
      %1499 = vmatprep.mubr.bf16.mxu0 %v870
      %1500 = vmatmul.mubr.bf16.gmra.mrb[0].mxu0 %v869
      %v1501 = vpop.f32.mrb[0].mxu0
      %v1502 = vadd.f32 %v1341, %v1501
      %v1503 = vpop.f32.mrb[0].mxu0
      %v1504 = vpop.f32.mrb[0].mxu0
      %v1505 = vadd.f32 %v1344, %v1504
      %v1506 = vpop.f32.mrb[0].mxu0
      %1507 = vmatprep.mubr.bf16.mxu0 %v875
      %1508 = vmatmul.mubr.bf16.gmra.mrb[0].mxu0 %v874
      %v1509 = vpop.f32.mrb[0].mxu0
      %v1510 = vadd.f32 %v1349, %v1509
      %v1511 = vpop.f32.mrb[0].mxu0
      %v1512 = vpop.f32.mrb[0].mxu0
      %v1513 = vadd.f32 %v1352, %v1512
      %v1514 = vpop.f32.mrb[0].mxu0
      %1515 = vmatprep.mubr.bf16.mxu0 %v880
      %1516 = vmatmul.mubr.bf16.gmra.mrb[0].mxu0 %v879
      %v1517 = vpop.f32.mrb[0].mxu0
      %v1518 = vadd.f32 %v1357, %v1517
      %v1519 = vpop.f32.mrb[0].mxu0
      %v1520 = vpop.f32.mrb[0].mxu0
      %v1521 = vadd.f32 %v1360, %v1520
      %v1522 = vpop.f32.mrb[0].mxu0
      %1523 = vdwg.mxu0
      %1524 = vmatprep.subr.bf16.mxu0 0
      %1525 = vmatpush1.bf16.msra.mxu0 %v1154
      %1526 = vmatprep.subr.bf16.mxu0 0
      %1527 = vmatpush1.bf16.msra.mxu0 %v1155
      %1528 = vmatprep.subr.bf16.mxu0 0
      %1529 = vmatpush1.bf16.msra.mxu0 %v1156
      %1530 = vmatprep.subr.bf16.mxu0 0
      %1531 = vmatpush1.bf16.msra.mxu0 %v1157
      %1532 = vmatprep.subr.bf16.mxu0 0
      %1533 = vmatpush1.bf16.msra.mxu0 %v1158
      %1534 = vmatprep.subr.bf16.mxu0 0
      %1535 = vmatpush1.bf16.msra.mxu0 %v1159
      %1536 = vmatprep.subr.bf16.mxu0 0
      %1537 = vmatpush1.bf16.msra.mxu0 %v1160
      %1538 = vmatprep.subr.bf16.mxu0 0
      %1539 = vmatpush1.bf16.msra.mxu0 %v1161
      %1540 = vmatprep.subr.bf16.mxu0 0
      %1541 = vmatpush1.bf16.msra.mxu0 0
      %1542 = vmatprep.subr.bf16.mxu0 0
      %1543 = vmatpush1.bf16.msra.mxu0 0
      %1544 = vmatprep.subr.bf16.mxu0 0
      %1545 = vmatpush1.bf16.msra.mxu0 0
      %1546 = vmatprep.subr.bf16.mxu0 0
      %1547 = vmatpush1.bf16.msra.mxu0 0
      %1548 = vmatprep.subr.bf16.mxu0 0
      %1549 = vmatpush1.bf16.msra.mxu0 0
      %1550 = vmatprep.subr.bf16.mxu0 0
      %1551 = vmatpush1.bf16.msra.mxu0 0
      %1552 = vmatprep.subr.bf16.mxu0 0
      %1553 = vmatpush1.bf16.msra.mxu0 0
      %1554 = vmatprep.subr.bf16.mxu0 0
      %1555 = vmatpush1.bf16.msra.mxu0 0
      %1556 = vmatprep.mubr.bf16.mxu0 0
      %1557 = vmatmul.mubr.bf16.gmra.mrb[0].mxu0 %v806
      %v1558 = vpop.f32.mrb[0].mxu0
      %v1559 = vadd.f32 %v1398, %v1558
      %v1560 = vpop.f32.mrb[0].mxu0
      %v1561 = vpop.f32.mrb[0].mxu0
      %v1562 = vadd.f32 %v1401, %v1561
      %v1563 = vpop.f32.mrb[0].mxu0
      %1564 = vmatprep.mubr.bf16.mxu0 0
      %1565 = vmatmul.mubr.bf16.gmra.mrb[0].mxu0 %v811
      %v1566 = vpop.f32.mrb[0].mxu0
      %v1567 = vadd.f32 %v1406, %v1566
      %v1568 = vpop.f32.mrb[0].mxu0
      %v1569 = vpop.f32.mrb[0].mxu0
      %v1570 = vadd.f32 %v1409, %v1569
      %v1571 = vpop.f32.mrb[0].mxu0
      %1572 = vmatprep.mubr.bf16.mxu0 0
      %1573 = vmatmul.mubr.bf16.gmra.mrb[0].mxu0 %v816
      %v1574 = vpop.f32.mrb[0].mxu0
      %v1575 = vadd.f32 %v1414, %v1574
      %v1576 = vpop.f32.mrb[0].mxu0
      %v1577 = vpop.f32.mrb[0].mxu0
      %v1578 = vadd.f32 %v1417, %v1577
      %v1579 = vpop.f32.mrb[0].mxu0
      %1580 = vmatprep.mubr.bf16.mxu0 0
      %1581 = vmatmul.mubr.bf16.gmra.mrb[0].mxu0 %v821
      %v1582 = vpop.f32.mrb[0].mxu0
      %v1583 = vadd.f32 %v1422, %v1582
      %v1584 = vpop.f32.mrb[0].mxu0
      %v1585 = vpop.f32.mrb[0].mxu0
      %v1586 = vadd.f32 %v1425, %v1585
      %v1587 = vpop.f32.mrb[0].mxu0
      %1588 = vmatprep.mubr.bf16.mxu0 0
      %1589 = vmatmul.mubr.bf16.gmra.mrb[0].mxu0 %v826
      %v1590 = vpop.f32.mrb[0].mxu0
      %v1591 = vadd.f32 %v1430, %v1590
      %v1592 = vpop.f32.mrb[0].mxu0
      %v1593 = vpop.f32.mrb[0].mxu0
      %v1594 = vadd.f32 %v1433, %v1593
      %v1595 = vpop.f32.mrb[0].mxu0
      %1596 = vmatprep.mubr.bf16.mxu0 0
      %1597 = vmatmul.mubr.bf16.gmra.mrb[0].mxu0 %v831
      %v1598 = vpop.f32.mrb[0].mxu0
      %v1599 = vadd.f32 %v1438, %v1598
      %v1600 = vpop.f32.mrb[0].mxu0
      %v1601 = vpop.f32.mrb[0].mxu0
      %v1602 = vadd.f32 %v1441, %v1601
      %v1603 = vpop.f32.mrb[0].mxu0
      %1604 = vmatprep.mubr.bf16.mxu0 0
      %1605 = vmatmul.mubr.bf16.gmra.mrb[0].mxu0 %v836
      %v1606 = vpop.f32.mrb[0].mxu0
      %v1607 = vadd.f32 %v1446, %v1606
      %v1608 = vpop.f32.mrb[0].mxu0
      %v1609 = vpop.f32.mrb[0].mxu0
      %v1610 = vadd.f32 %v1449, %v1609
      %v1611 = vpop.f32.mrb[0].mxu0
      %1612 = vmatprep.mubr.bf16.mxu0 0
      %1613 = vmatmul.mubr.bf16.gmra.mrb[0].mxu0 %v841
      %v1614 = vpop.f32.mrb[0].mxu0
      %v1615 = vadd.f32 %v1454, %v1614
      %v1616 = vpop.f32.mrb[0].mxu0
      %v1617 = vpop.f32.mrb[0].mxu0
      %v1618 = vadd.f32 %v1457, %v1617
      %v1619 = vpop.f32.mrb[0].mxu0
      %1620 = vmatprep.mubr.bf16.mxu0 0
      %1621 = vmatmul.mubr.bf16.gmra.mrb[0].mxu0 %v846
      %v1622 = vpop.f32.mrb[0].mxu0
      %v1623 = vadd.f32 %v1462, %v1622
      %v1624 = vpop.f32.mrb[0].mxu0
      %v1625 = vpop.f32.mrb[0].mxu0
      %v1626 = vadd.f32 %v1465, %v1625
      %v1627 = vpop.f32.mrb[0].mxu0
      %1628 = vmatprep.mubr.bf16.mxu0 0
      %1629 = vmatmul.mubr.bf16.gmra.mrb[0].mxu0 %v851
      %v1630 = vpop.f32.mrb[0].mxu0
      %v1631 = vadd.f32 %v1470, %v1630
      %v1632 = vpop.f32.mrb[0].mxu0
      %v1633 = vpop.f32.mrb[0].mxu0
      %v1634 = vadd.f32 %v1473, %v1633
      %v1635 = vpop.f32.mrb[0].mxu0
      %1636 = vmatprep.mubr.bf16.mxu0 0
      %1637 = vmatmul.mubr.bf16.gmra.mrb[0].mxu0 %v856
      %v1638 = vpop.f32.mrb[0].mxu0
      %v1639 = vadd.f32 %v1478, %v1638
      %v1640 = vpop.f32.mrb[0].mxu0
      %v1641 = vpop.f32.mrb[0].mxu0
      %v1642 = vadd.f32 %v1481, %v1641
      %v1643 = vpop.f32.mrb[0].mxu0
      %1644 = vmatprep.mubr.bf16.mxu0 0
      %1645 = vmatmul.mubr.bf16.gmra.mrb[0].mxu0 %v861
      %v1646 = vpop.f32.mrb[0].mxu0
      %v1647 = vadd.f32 %v1486, %v1646
      %v1648 = vpop.f32.mrb[0].mxu0
      %v1649 = vpop.f32.mrb[0].mxu0
      %v1650 = vadd.f32 %v1489, %v1649
      %v1651 = vpop.f32.mrb[0].mxu0
      %1652 = vmatprep.mubr.bf16.mxu0 0
      %1653 = vmatmul.mubr.bf16.gmra.mrb[0].mxu0 %v866
      %v1654 = vpop.f32.mrb[0].mxu0
      %v1655 = vadd.f32 %v1494, %v1654
      %v1656 = vpop.f32.mrb[0].mxu0
      %v1657 = vpop.f32.mrb[0].mxu0
      %v1658 = vadd.f32 %v1497, %v1657
      %v1659 = vpop.f32.mrb[0].mxu0
      %1660 = vmatprep.mubr.bf16.mxu0 0
      %1661 = vmatmul.mubr.bf16.gmra.mrb[0].mxu0 %v871
      %v1662 = vpop.f32.mrb[0].mxu0
      %v1663 = vadd.f32 %v1502, %v1662
      %v1664 = vpop.f32.mrb[0].mxu0
      %v1665 = vpop.f32.mrb[0].mxu0
      %v1666 = vadd.f32 %v1505, %v1665
      %v1667 = vpop.f32.mrb[0].mxu0
      %1668 = vmatprep.mubr.bf16.mxu0 0
      %1669 = vmatmul.mubr.bf16.gmra.mrb[0].mxu0 %v876
      %v1670 = vpop.f32.mrb[0].mxu0
      %v1671 = vadd.f32 %v1510, %v1670
      %v1672 = vpop.f32.mrb[0].mxu0
      %v1673 = vpop.f32.mrb[0].mxu0
      %v1674 = vadd.f32 %v1513, %v1673
      %v1675 = vpop.f32.mrb[0].mxu0
      %1676 = vmatprep.mubr.bf16.mxu0 0
      %1677 = vmatmul.mubr.bf16.gmra.mrb[0].mxu0 %v881
      %v1678 = vpop.f32.mrb[0].mxu0
      %v1679 = vadd.f32 %v1518, %v1678
      %v1680 = vpop.f32.mrb[0].mxu0
      %v1681 = vpop.f32.mrb[0].mxu0
      %v1682 = vadd.f32 %v1521, %v1681
      %v1683 = vpop.f32.mrb[0].mxu0
      %1684 = vdwg.mxu0
      %v1685 = vmul.f32 %v1559, 1.702
      %v1686 = vmul.f32 %v1562, 1.702
      %v1687 = vmul.f32 %v1567, 1.702
      %v1688 = vmul.f32 %v1570, 1.702
      %v1689 = vmul.f32 %v1575, 1.702
      %v1690 = vmul.f32 %v1578, 1.702
      %v1691 = vmul.f32 %v1583, 1.702
      %v1692 = vmul.f32 %v1586, 1.702
      %v1693 = vmul.f32 %v1591, 1.702
      %v1694 = vmul.f32 %v1594, 1.702
      %v1695 = vmul.f32 %v1599, 1.702
      %v1696 = vmul.f32 %v1602, 1.702
      %v1697 = vmul.f32 %v1607, 1.702
      %v1698 = vmul.f32 %v1610, 1.702
      %v1699 = vmul.f32 %v1615, 1.702
      %v1700 = vmul.f32 %v1618, 1.702
      %v1701 = vmul.f32 %v1623, 1.702
      %v1702 = vmul.f32 %v1626, 1.702
      %v1703 = vmul.f32 %v1631, 1.702
      %v1704 = vmul.f32 %v1634, 1.702
      %v1705 = vmul.f32 %v1639, 1.702
      %v1706 = vmul.f32 %v1642, 1.702
      %v1707 = vmul.f32 %v1647, 1.702
      %v1708 = vmul.f32 %v1650, 1.702
      %v1709 = vmul.f32 %v1655, 1.702
      %v1710 = vmul.f32 %v1658, 1.702
      %v1711 = vmul.f32 %v1663, 1.702
      %v1712 = vmul.f32 %v1666, 1.702
      %v1713 = vmul.f32 %v1671, 1.702
      %v1714 = vmul.f32 %v1674, 1.702
      %v1715 = vmul.f32 %v1679, 1.702
      %v1716 = vmul.f32 %v1682, 1.702
      %v1717 = vxor.u32 %v1685, 2147483648
      %v1718 = vxor.u32 %v1686, 2147483648
      %v1719 = vxor.u32 %v1687, 2147483648
      %v1720 = vxor.u32 %v1688, 2147483648
      %v1721 = vxor.u32 %v1689, 2147483648
      %v1722 = vxor.u32 %v1690, 2147483648
      %v1723 = vxor.u32 %v1691, 2147483648
      %v1724 = vxor.u32 %v1692, 2147483648
      %v1725 = vxor.u32 %v1693, 2147483648
      %v1726 = vxor.u32 %v1694, 2147483648
      %v1727 = vxor.u32 %v1695, 2147483648
      %v1728 = vxor.u32 %v1696, 2147483648
      %v1729 = vxor.u32 %v1697, 2147483648
      %v1730 = vxor.u32 %v1698, 2147483648
      %v1731 = vxor.u32 %v1699, 2147483648
      %v1732 = vxor.u32 %v1700, 2147483648
      %v1733 = vxor.u32 %v1701, 2147483648
      %v1734 = vxor.u32 %v1702, 2147483648
      %v1735 = vxor.u32 %v1703, 2147483648
      %v1736 = vxor.u32 %v1704, 2147483648
      %v1737 = vxor.u32 %v1705, 2147483648
      %v1738 = vxor.u32 %v1706, 2147483648
      %v1739 = vxor.u32 %v1707, 2147483648
      %v1740 = vxor.u32 %v1708, 2147483648
      %v1741 = vxor.u32 %v1709, 2147483648
      %v1742 = vxor.u32 %v1710, 2147483648
      %v1743 = vxor.u32 %v1711, 2147483648
      %v1744 = vxor.u32 %v1712, 2147483648
      %v1745 = vxor.u32 %v1713, 2147483648
      %v1746 = vxor.u32 %v1714, 2147483648
      %v1747 = vxor.u32 %v1715, 2147483648
      %v1748 = vxor.u32 %v1716, 2147483648
      %v1749 = vmul.f32 %v1717, 1.442695
      %v1750 = vpow.pop %v1749
      %v1751 = vmul.f32 %v1718, 1.442695
      %v1752 = vpow.pop %v1751
      %v1753 = vmul.f32 %v1719, 1.442695
      %v1754 = vpow.pop %v1753
      %v1755 = vmul.f32 %v1720, 1.442695
      %v1756 = vpow.pop %v1755
      %v1757 = vmul.f32 %v1721, 1.442695
      %v1758 = vpow.pop %v1757
      %v1759 = vmul.f32 %v1722, 1.442695
      %v1760 = vpow.pop %v1759
      %v1761 = vmul.f32 %v1723, 1.442695
      %v1762 = vpow.pop %v1761
      %v1763 = vmul.f32 %v1724, 1.442695
      %v1764 = vpow.pop %v1763
      %v1765 = vmul.f32 %v1725, 1.442695
      %v1766 = vpow.pop %v1765
      %v1767 = vmul.f32 %v1726, 1.442695
      %v1768 = vpow.pop %v1767
      %v1769 = vmul.f32 %v1727, 1.442695
      %v1770 = vpow.pop %v1769
      %v1771 = vmul.f32 %v1728, 1.442695
      %v1772 = vpow.pop %v1771
      %v1773 = vmul.f32 %v1729, 1.442695
      %v1774 = vpow.pop %v1773
      %v1775 = vmul.f32 %v1730, 1.442695
      %v1776 = vpow.pop %v1775
      %v1777 = vmul.f32 %v1731, 1.442695
      %v1778 = vpow.pop %v1777
      %v1779 = vmul.f32 %v1732, 1.442695
      %v1780 = vpow.pop %v1779
      %v1781 = vmul.f32 %v1733, 1.442695
      %v1782 = vpow.pop %v1781
      %v1783 = vmul.f32 %v1734, 1.442695
      %v1784 = vpow.pop %v1783
      %v1785 = vmul.f32 %v1735, 1.442695
      %v1786 = vpow.pop %v1785
      %v1787 = vmul.f32 %v1736, 1.442695
      %v1788 = vpow.pop %v1787
      %v1789 = vmul.f32 %v1737, 1.442695
      %v1790 = vpow.pop %v1789
      %v1791 = vmul.f32 %v1738, 1.442695
      %v1792 = vpow.pop %v1791
      %v1793 = vmul.f32 %v1739, 1.442695
      %v1794 = vpow.pop %v1793
      %v1795 = vmul.f32 %v1740, 1.442695
      %v1796 = vpow.pop %v1795
      %v1797 = vmul.f32 %v1741, 1.442695
      %v1798 = vpow.pop %v1797
      %v1799 = vmul.f32 %v1742, 1.442695
      %v1800 = vpow.pop %v1799
      %v1801 = vmul.f32 %v1743, 1.442695
      %v1802 = vpow.pop %v1801
      %v1803 = vmul.f32 %v1744, 1.442695
      %v1804 = vpow.pop %v1803
      %v1805 = vmul.f32 %v1745, 1.442695
      %v1806 = vpow.pop %v1805
      %v1807 = vmul.f32 %v1746, 1.442695
      %v1808 = vpow.pop %v1807
      %v1809 = vmul.f32 %v1747, 1.442695
      %v1810 = vpow.pop %v1809
      %v1811 = vmul.f32 %v1748, 1.442695
      %v1812 = vpow.pop %v1811
      %v1813 = vadd.f32 %v1750, 1.0
      %v1814 = vadd.f32 %v1752, 1.0
      %v1815 = vadd.f32 %v1754, 1.0
      %v1816 = vadd.f32 %v1756, 1.0
      %v1817 = vadd.f32 %v1758, 1.0
      %v1818 = vadd.f32 %v1760, 1.0
      %v1819 = vadd.f32 %v1762, 1.0
      %v1820 = vadd.f32 %v1764, 1.0
      %v1821 = vadd.f32 %v1766, 1.0
      %v1822 = vadd.f32 %v1768, 1.0
      %v1823 = vadd.f32 %v1770, 1.0
      %v1824 = vadd.f32 %v1772, 1.0
      %v1825 = vadd.f32 %v1774, 1.0
      %v1826 = vadd.f32 %v1776, 1.0
      %v1827 = vadd.f32 %v1778, 1.0
      %v1828 = vadd.f32 %v1780, 1.0
      %v1829 = vadd.f32 %v1782, 1.0
      %v1830 = vadd.f32 %v1784, 1.0
      %v1831 = vadd.f32 %v1786, 1.0
      %v1832 = vadd.f32 %v1788, 1.0
      %v1833 = vadd.f32 %v1790, 1.0
      %v1834 = vadd.f32 %v1792, 1.0
      %v1835 = vadd.f32 %v1794, 1.0
      %v1836 = vadd.f32 %v1796, 1.0
      %v1837 = vadd.f32 %v1798, 1.0
      %v1838 = vadd.f32 %v1800, 1.0
      %v1839 = vadd.f32 %v1802, 1.0
      %v1840 = vadd.f32 %v1804, 1.0
      %v1841 = vadd.f32 %v1806, 1.0
      %v1842 = vadd.f32 %v1808, 1.0
      %v1843 = vadd.f32 %v1810, 1.0
      %v1844 = vadd.f32 %v1812, 1.0
      %v1845 = vrcp.pop %v1813
      %v1846 = vmul.f32 1.0, %v1845
      %v1847 = vrcp.pop %v1814
      %v1848 = vmul.f32 1.0, %v1847
      %v1849 = vrcp.pop %v1815
      %v1850 = vmul.f32 1.0, %v1849
      %v1851 = vrcp.pop %v1816
      %v1852 = vmul.f32 1.0, %v1851
      %v1853 = vrcp.pop %v1817
      %v1854 = vmul.f32 1.0, %v1853
      %v1855 = vrcp.pop %v1818
      %v1856 = vmul.f32 1.0, %v1855
      %v1857 = vrcp.pop %v1819
      %v1858 = vmul.f32 1.0, %v1857
      %v1859 = vrcp.pop %v1820
      %v1860 = vmul.f32 1.0, %v1859
      %v1861 = vrcp.pop %v1821
      %v1862 = vmul.f32 1.0, %v1861
      %v1863 = vrcp.pop %v1822
      %v1864 = vmul.f32 1.0, %v1863
      %v1865 = vrcp.pop %v1823
      %v1866 = vmul.f32 1.0, %v1865
      %v1867 = vrcp.pop %v1824
      %v1868 = vmul.f32 1.0, %v1867
      %v1869 = vrcp.pop %v1825
      %v1870 = vmul.f32 1.0, %v1869
      %v1871 = vrcp.pop %v1826
      %v1872 = vmul.f32 1.0, %v1871
      %v1873 = vrcp.pop %v1827
      %v1874 = vmul.f32 1.0, %v1873
      %v1875 = vrcp.pop %v1828
      %v1876 = vmul.f32 1.0, %v1875
      %v1877 = vrcp.pop %v1829
      %v1878 = vmul.f32 1.0, %v1877
      %v1879 = vrcp.pop %v1830
      %v1880 = vmul.f32 1.0, %v1879
      %v1881 = vrcp.pop %v1831
      %v1882 = vmul.f32 1.0, %v1881
      %v1883 = vrcp.pop %v1832
      %v1884 = vmul.f32 1.0, %v1883
      %v1885 = vrcp.pop %v1833
      %v1886 = vmul.f32 1.0, %v1885
      %v1887 = vrcp.pop %v1834
      %v1888 = vmul.f32 1.0, %v1887
      %v1889 = vrcp.pop %v1835
      %v1890 = vmul.f32 1.0, %v1889
      %v1891 = vrcp.pop %v1836
      %v1892 = vmul.f32 1.0, %v1891
      %v1893 = vrcp.pop %v1837
      %v1894 = vmul.f32 1.0, %v1893
      %v1895 = vrcp.pop %v1838
      %v1896 = vmul.f32 1.0, %v1895
      %v1897 = vrcp.pop %v1839
      %v1898 = vmul.f32 1.0, %v1897
      %v1899 = vrcp.pop %v1840
      %v1900 = vmul.f32 1.0, %v1899
      %v1901 = vrcp.pop %v1841
      %v1902 = vmul.f32 1.0, %v1901
      %v1903 = vrcp.pop %v1842
      %v1904 = vmul.f32 1.0, %v1903
      %v1905 = vrcp.pop %v1843
      %v1906 = vmul.f32 1.0, %v1905
      %v1907 = vrcp.pop %v1844
      %v1908 = vmul.f32 1.0, %v1907
      %v1909 = vmul.f32 %v1559, %v1846
      %v1910 = vmul.f32 %v1562, %v1848
      %v1911 = vmul.f32 %v1567, %v1850
      %v1912 = vmul.f32 %v1570, %v1852
      %v1913 = vmul.f32 %v1575, %v1854
      %v1914 = vmul.f32 %v1578, %v1856
      %v1915 = vmul.f32 %v1583, %v1858
      %v1916 = vmul.f32 %v1586, %v1860
      %v1917 = vmul.f32 %v1591, %v1862
      %v1918 = vmul.f32 %v1594, %v1864
      %v1919 = vmul.f32 %v1599, %v1866
      %v1920 = vmul.f32 %v1602, %v1868
      %v1921 = vmul.f32 %v1607, %v1870
      %v1922 = vmul.f32 %v1610, %v1872
      %v1923 = vmul.f32 %v1615, %v1874
      %v1924 = vmul.f32 %v1618, %v1876
      %v1925 = vmul.f32 %v1623, %v1878
      %v1926 = vmul.f32 %v1626, %v1880
      %v1927 = vmul.f32 %v1631, %v1882
      %v1928 = vmul.f32 %v1634, %v1884
      %v1929 = vmul.f32 %v1639, %v1886
      %v1930 = vmul.f32 %v1642, %v1888
      %v1931 = vmul.f32 %v1647, %v1890
      %v1932 = vmul.f32 %v1650, %v1892
      %v1933 = vmul.f32 %v1655, %v1894
      %v1934 = vmul.f32 %v1658, %v1896
      %v1935 = vmul.f32 %v1663, %v1898
      %v1936 = vmul.f32 %v1666, %v1900
      %v1937 = vmul.f32 %v1671, %v1902
      %v1938 = vmul.f32 %v1674, %v1904
      %v1939 = vmul.f32 %v1679, %v1906
      %v1940 = vmul.f32 %v1682, %v1908
      %v1941 = vadd.f32 %v1909, %v1910
      %v1942 = vadd.f32 %v1941, %v1911
      %v1943 = vadd.f32 %v1942, %v1912
      %v1944 = vadd.f32 %v1943, %v1913
      %v1945 = vadd.f32 %v1944, %v1914
      %v1946 = vadd.f32 %v1945, %v1915
      %v1947 = vadd.f32 %v1946, %v1916
      %v1948 = vadd.f32 %v1947, %v1917
      %v1949 = vadd.f32 %v1948, %v1918
      %v1950 = vadd.f32 %v1949, %v1919
      %v1951 = vadd.f32 %v1950, %v1920
      %v1952 = vadd.f32 %v1951, %v1921
      %v1953 = vadd.f32 %v1952, %v1922
      %v1954 = vadd.f32 %v1953, %v1923
      %v1955 = vadd.f32 %v1954, %v1924
      %v1956 = vadd.f32 %v1955, %v1925
      %v1957 = vadd.f32 %v1956, %v1926
      %v1958 = vadd.f32 %v1957, %v1927
      %v1959 = vadd.f32 %v1958, %v1928
      %v1960 = vadd.f32 %v1959, %v1929
      %v1961 = vadd.f32 %v1960, %v1930
      %v1962 = vadd.f32 %v1961, %v1931
      %v1963 = vadd.f32 %v1962, %v1932
      %v1964 = vadd.f32 %v1963, %v1933
      %v1965 = vadd.f32 %v1964, %v1934
      %v1966 = vadd.f32 %v1965, %v1935
      %v1967 = vadd.f32 %v1966, %v1936
      %v1968 = vadd.f32 %v1967, %v1937
      %v1969 = vadd.f32 %v1968, %v1938
      %v1970 = vadd.f32 %v1969, %v1939
      %v1971 = vadd.f32 %v1970, %v1940
      %v1972 = vrot.slane %v1971, 4
      %v1973 = vadd.f32 %v1971, %v1972
      %v1974 = vrot.slane %v1973, 2
      %v1975 = vadd.f32 %v1973, %v1974
      %v1976 = vrot.slane %v1975, 1
      %v1977 = vadd.f32 %v1975, %v1976
      %v1978 = vpack.c.bf16 %v1977, %v1977
      %v1979 = vld [vmem:[%s6] sm:$0xf]
      %v1980 = vld [vmem:[%s6 + $0x4] sm:$0xf]
      %v1981 = vld [vmem:[%s6 + $0x8] sm:$0xf]
      %v1982 = vld [vmem:[%s6 + $0xc] sm:$0xf]
      %v1983 = vld [vmem:[%s6 + $0x10] sm:$0xf]
      %v1984 = vld [vmem:[%s6 + $0x14] sm:$0xf]
      %v1985 = vld [vmem:[%s6 + $0x18] sm:$0xf]
      %v1986 = vld [vmem:[%s6 + $0x1c] sm:$0xf]
      %v1987 = vld [vmem:[%s6 + $0x20] sm:$0xf]
      %v1988 = vld [vmem:[%s6 + $0x24] sm:$0xf]
      %v1989 = vld [vmem:[%s6 + $0x28] sm:$0xf]
      %v1990 = vld [vmem:[%s6 + $0x2c] sm:$0xf]
      %v1991 = vld [vmem:[%s6 + $0x30] sm:$0xf]
      %v1992 = vld [vmem:[%s6 + $0x34] sm:$0xf]
      %v1993 = vld [vmem:[%s6 + $0x38] sm:$0xf]
      %v1994 = vld [vmem:[%s6 + $0x3c] sm:$0xf]
      %v2011 = vunpack.c.l.b16 %v1979
      %v2012 = vunpack.c.l.b16 %v1980
      %v2013 = vunpack.c.l.b16 %v1981
      %v2014 = vunpack.c.l.b16 %v1982
      %v2015 = vunpack.c.l.b16 %v1983
      %v2016 = vunpack.c.l.b16 %v1984
      %v2017 = vunpack.c.l.b16 %v1985
      %v2018 = vunpack.c.l.b16 %v1986
      %v2019 = vunpack.c.l.b16 %v1987
      %v2020 = vunpack.c.l.b16 %v1988
      %v2021 = vunpack.c.l.b16 %v1989
      %v2022 = vunpack.c.l.b16 %v1990
      %v2023 = vunpack.c.l.b16 %v1991
      %v2024 = vunpack.c.l.b16 %v1992
      %v2025 = vunpack.c.l.b16 %v1993
      %v2026 = vunpack.c.l.b16 %v1994
      %v2027 = vpack.c.b16 %v2012, %v2011
      %v2028 = vpack.c.b16 %v2014, %v2013
      %v2029 = vpack.c.b16 %v2016, %v2015
      %v2030 = vpack.c.b16 %v2018, %v2017
      %v2031 = vpack.c.b16 %v2020, %v2019
      %v2032 = vpack.c.b16 %v2022, %v2021
      %v2033 = vpack.c.b16 %v2024, %v2023
      %v2034 = vpack.c.b16 %v2026, %v2025
      %2043 = vmatprep.subr.bf16.mxu0 0
      %2044 = vmatpush1.bf16.msra.mxu0 %v2027
      %2045 = vmatprep.subr.bf16.mxu0 0
      %2046 = vmatpush1.bf16.msra.mxu0 %v2028
      %2047 = vmatprep.subr.bf16.mxu0 0
      %2048 = vmatpush1.bf16.msra.mxu0 %v2029
      %2049 = vmatprep.subr.bf16.mxu0 0
      %2050 = vmatpush1.bf16.msra.mxu0 %v2030
      %2051 = vmatprep.subr.bf16.mxu0 0
      %2052 = vmatpush1.bf16.msra.mxu0 %v2031
      %2053 = vmatprep.subr.bf16.mxu0 0
      %2054 = vmatpush1.bf16.msra.mxu0 %v2032
      %2055 = vmatprep.subr.bf16.mxu0 0
      %2056 = vmatpush1.bf16.msra.mxu0 %v2033
      %2057 = vmatprep.subr.bf16.mxu0 0
      %2058 = vmatpush1.bf16.msra.mxu0 %v2034
      %2059 = vmatprep.subr.bf16.mxu0 0
      %2060 = vmatpush1.bf16.msra.mxu0 0
      %2061 = vmatprep.subr.bf16.mxu0 0
      %2062 = vmatpush1.bf16.msra.mxu0 0
      %2063 = vmatprep.subr.bf16.mxu0 0
      %2064 = vmatpush1.bf16.msra.mxu0 0
      %2065 = vmatprep.subr.bf16.mxu0 0
      %2066 = vmatpush1.bf16.msra.mxu0 0
      %2067 = vmatprep.subr.bf16.mxu0 0
      %2068 = vmatpush1.bf16.msra.mxu0 0
      %2069 = vmatprep.subr.bf16.mxu0 0
      %2070 = vmatpush1.bf16.msra.mxu0 0
      %2071 = vmatprep.subr.bf16.mxu0 0
      %2072 = vmatpush1.bf16.msra.mxu0 0
      %2073 = vmatprep.subr.bf16.mxu0 0
      %2074 = vmatpush1.bf16.msra.mxu0 0
      %2075 = vmatprep.mubr.bf16.mxu0 0
      %2076 = vmatmul.mubr.bf16.gmra.mrb[0].mxu0 %v1978
      %v2077 = vpop.f32.mrb[0].mxu0
      %v2078 = vadd.f32 0.0, %v2077
      %v2079 = vpop.f32.mrb[0].mxu0
      %v2080 = vpop.f32.mrb[0].mxu0
      %v2081 = vpop.f32.mrb[0].mxu0
      %2082 = vdwg.mxu0
      %v2083 = vmul.f32 %v2078, %v2078
      %vm2084 = vcmask 1040384
      %v2085 = vsel %vm2084, %v2083, 0.0
      %2086 = vadd.xlane.f32.xlu0 %v2085
      %v2087 = vpop.xlane.xlu0 %2086
      %v2088 = vmax.f32 %v2087, 1e-12
      %v2089 = vrsqrt.pop %v2088
      %v2090 = vmul.f32 %v2078, %v2089
      %v2091 = vld [vmem:[%s348] sm:$0xff]
      %v2092 = vld [vmem:[%s348 + $0x8] sm:$0xff]
      %v2093 = vld [vmem:[%s348 + $0x10] sm:$0xf]
      %v2094 = vld [vmem:[%s348 + $0x14] sm:$0xff]
      %v2095 = vld [vmem:[%s348 + $0x1c] sm:$0xff]
      %v2096 = vld [vmem:[%s348 + $0x24] sm:$0xf]
      %v2097 = vld [vmem:[%s348 + $0x28] sm:$0xff]
      %v2098 = vld [vmem:[%s348 + $0x30] sm:$0xff]
      %v2099 = vld [vmem:[%s348 + $0x38] sm:$0xf]
      %v2100 = vld [vmem:[%s348 + $0x3c] sm:$0xff]
      %v2101 = vld [vmem:[%s348 + $0x44] sm:$0xff]
      %v2102 = vld [vmem:[%s348 + $0x4c] sm:$0xf]
      %v2103 = vld [vmem:[%s348 + $0x50] sm:$0xff]
      %v2104 = vld [vmem:[%s348 + $0x58] sm:$0xff]
      %v2105 = vld [vmem:[%s348 + $0x60] sm:$0xf]
      %v2106 = vld [vmem:[%s348 + $0x64] sm:$0xff]
      %v2107 = vld [vmem:[%s348 + $0x6c] sm:$0xff]
      %v2108 = vld [vmem:[%s348 + $0x74] sm:$0xf]
      %v2109 = vld [vmem:[%s348 + $0x78] sm:$0xff]
      %v2110 = vld [vmem:[%s348 + $0x80] sm:$0xff]
      %v2111 = vld [vmem:[%s348 + $0x88] sm:$0xf]
      %v2112 = vld [vmem:[%s348 + $0x8c] sm:$0xff]
      %v2113 = vld [vmem:[%s348 + $0x94] sm:$0xff]
      %v2114 = vld [vmem:[%s348 + $0x9c] sm:$0xf]
      %v2115 = vld [vmem:[%s348 + $0xa0] sm:$0xff]
      %v2116 = vld [vmem:[%s348 + $0xa8] sm:$0xff]
      %v2117 = vld [vmem:[%s348 + $0xb0] sm:$0xf]
      %v2118 = vld [vmem:[%s348 + $0xb4] sm:$0xff]
      %v2119 = vld [vmem:[%s348 + $0xbc] sm:$0xff]
      %v2120 = vld [vmem:[%s348 + $0xc4] sm:$0xf]
      %v2121 = vld [vmem:[%s348 + $0xc8] sm:$0xff]
      %v2122 = vld [vmem:[%s348 + $0xd0] sm:$0xff]
      %v2123 = vld [vmem:[%s348 + $0xd8] sm:$0xf]
      %v2124 = vld [vmem:[%s348 + $0xdc] sm:$0xff]
      %v2125 = vld [vmem:[%s348 + $0xe4] sm:$0xff]
      %v2126 = vld [vmem:[%s348 + $0xec] sm:$0xf]
      %v2127 = vld [vmem:[%s348 + $0xf0] sm:$0xff]
      %v2128 = vld [vmem:[%s348 + $0xf8] sm:$0xff]
      %v2129 = vld [vmem:[%s348 + $0x100] sm:$0xf]
      %v2130 = vld [vmem:[%s348 + $0x104] sm:$0xff]
      %v2131 = vld [vmem:[%s348 + $0x10c] sm:$0xff]
      %v2132 = vld [vmem:[%s348 + $0x114] sm:$0xf]
      %v2133 = vld [vmem:[%s348 + $0x118] sm:$0xff]
      %v2134 = vld [vmem:[%s348 + $0x120] sm:$0xff]
      %v2135 = vld [vmem:[%s348 + $0x128] sm:$0xf]
      %v2136 = vld [vmem:[%s348 + $0x12c] sm:$0xff]
      %v2137 = vld [vmem:[%s348 + $0x134] sm:$0xff]
      %v2138 = vld [vmem:[%s348 + $0x13c] sm:$0xf]
      %v2139 = vld [vmem:[%s348 + $0x140] sm:$0xff]
      %v2140 = vld [vmem:[%s348 + $0x148] sm:$0xff]
      %v2141 = vld [vmem:[%s348 + $0x150] sm:$0xf]
      %v2142 = vld [vmem:[%s348 + $0x154] sm:$0xff]
      %v2143 = vld [vmem:[%s348 + $0x15c] sm:$0xff]
      %v2144 = vld [vmem:[%s348 + $0x164] sm:$0xf]
      %v2145 = vld [vmem:[%s348 + $0x168] sm:$0xff]
      %v2146 = vld [vmem:[%s348 + $0x170] sm:$0xff]
      %v2147 = vld [vmem:[%s348 + $0x178] sm:$0xf]
      %v2148 = vld [vmem:[%s348 + $0x17c] sm:$0xff]
      %v2149 = vld [vmem:[%s348 + $0x184] sm:$0xff]
      %v2150 = vld [vmem:[%s348 + $0x18c] sm:$0xf]
      %v2151 = vld [vmem:[%s348 + $0x190] sm:$0xff]
      %v2152 = vld [vmem:[%s348 + $0x198] sm:$0xff]
      %v2153 = vld [vmem:[%s348 + $0x1a0] sm:$0xf]
      %v2154 = vld [vmem:[%s348 + $0x1a4] sm:$0xff]
      %v2155 = vld [vmem:[%s348 + $0x1ac] sm:$0xff]
      %v2156 = vld [vmem:[%s348 + $0x1b4] sm:$0xf]
      %v2157 = vld [vmem:[%s348 + $0x1b8] sm:$0xff]
      %v2158 = vld [vmem:[%s348 + $0x1c0] sm:$0xff]
      %v2159 = vld [vmem:[%s348 + $0x1c8] sm:$0xf]
      %v2160 = vld [vmem:[%s348 + $0x1cc] sm:$0xff]
      %v2161 = vld [vmem:[%s348 + $0x1d4] sm:$0xff]
      %v2162 = vld [vmem:[%s348 + $0x1dc] sm:$0xf]
      %v2163 = vld [vmem:[%s348 + $0x1e0] sm:$0xff]
      %v2164 = vld [vmem:[%s348 + $0x1e8] sm:$0xff]
      %v2165 = vld [vmem:[%s348 + $0x1f0] sm:$0xf]
      %v2166 = vld [vmem:[%s348 + $0x1f4] sm:$0xff]
      %v2167 = vld [vmem:[%s348 + $0x1fc] sm:$0xff]
      %v2168 = vld [vmem:[%s348 + $0x204] sm:$0xf]
      %v2169 = vld [vmem:[%s348 + $0x208] sm:$0xff]
      %v2170 = vld [vmem:[%s348 + $0x210] sm:$0xff]
      %v2171 = vld [vmem:[%s348 + $0x218] sm:$0xf]
      %v2172 = vld [vmem:[%s348 + $0x21c] sm:$0xff]
      %v2173 = vld [vmem:[%s348 + $0x224] sm:$0xff]
      %v2174 = vld [vmem:[%s348 + $0x22c] sm:$0xf]
      %v2175 = vld [vmem:[%s348 + $0x230] sm:$0xff]
      %v2176 = vld [vmem:[%s348 + $0x238] sm:$0xff]
      %v2177 = vld [vmem:[%s348 + $0x240] sm:$0xf]
      %v2178 = vld [vmem:[%s348 + $0x244] sm:$0xff]
      %v2179 = vld [vmem:[%s348 + $0x24c] sm:$0xff]
      %v2180 = vld [vmem:[%s348 + $0x254] sm:$0xf]
      %v2181 = vld [vmem:[%s348 + $0x258] sm:$0xff]
      %v2182 = vld [vmem:[%s348 + $0x260] sm:$0xff]
      %v2183 = vld [vmem:[%s348 + $0x268] sm:$0xf]
      %v2184 = vld [vmem:[%s348 + $0x26c] sm:$0xff]
      %v2185 = vld [vmem:[%s348 + $0x274] sm:$0xff]
      %v2186 = vld [vmem:[%s348 + $0x27c] sm:$0xf]
      %v2283 = vunpack.c.l.b16 %v2091
      %v2284 = vunpack.c.h.b16 %v2091
      %v2285 = vunpack.c.l.b16 %v2092
      %v2286 = vunpack.c.h.b16 %v2092
      %v2287 = vunpack.c.l.b16 %v2093
      %v2288 = vunpack.c.l.b16 %v2094
      %v2289 = vunpack.c.h.b16 %v2094
      %v2290 = vunpack.c.l.b16 %v2095
      %v2291 = vunpack.c.h.b16 %v2095
      %v2292 = vunpack.c.l.b16 %v2096
      %v2293 = vunpack.c.l.b16 %v2097
      %v2294 = vunpack.c.h.b16 %v2097
      %v2295 = vunpack.c.l.b16 %v2098
      %v2296 = vunpack.c.h.b16 %v2098
      %v2297 = vunpack.c.l.b16 %v2099
      %v2298 = vunpack.c.l.b16 %v2100
      %v2299 = vunpack.c.h.b16 %v2100
      %v2300 = vunpack.c.l.b16 %v2101
      %v2301 = vunpack.c.h.b16 %v2101
      %v2302 = vunpack.c.l.b16 %v2102
      %v2303 = vunpack.c.l.b16 %v2103
      %v2304 = vunpack.c.h.b16 %v2103
      %v2305 = vunpack.c.l.b16 %v2104
      %v2306 = vunpack.c.h.b16 %v2104
      %v2307 = vunpack.c.l.b16 %v2105
      %v2308 = vunpack.c.l.b16 %v2106
      %v2309 = vunpack.c.h.b16 %v2106
      %v2310 = vunpack.c.l.b16 %v2107
      %v2311 = vunpack.c.h.b16 %v2107
      %v2312 = vunpack.c.l.b16 %v2108
      %v2313 = vunpack.c.l.b16 %v2109
      %v2314 = vunpack.c.h.b16 %v2109
      %v2315 = vunpack.c.l.b16 %v2110
      %v2316 = vunpack.c.h.b16 %v2110
      %v2317 = vunpack.c.l.b16 %v2111
      %v2318 = vunpack.c.l.b16 %v2112
      %v2319 = vunpack.c.h.b16 %v2112
      %v2320 = vunpack.c.l.b16 %v2113
      %v2321 = vunpack.c.h.b16 %v2113
      %v2322 = vunpack.c.l.b16 %v2114
      %v2323 = vunpack.c.l.b16 %v2115
      %v2324 = vunpack.c.h.b16 %v2115
      %v2325 = vunpack.c.l.b16 %v2116
      %v2326 = vunpack.c.h.b16 %v2116
      %v2327 = vunpack.c.l.b16 %v2117
      %v2328 = vunpack.c.l.b16 %v2118
      %v2329 = vunpack.c.h.b16 %v2118
      %v2330 = vunpack.c.l.b16 %v2119
      %v2331 = vunpack.c.h.b16 %v2119
      %v2332 = vunpack.c.l.b16 %v2120
      %v2333 = vunpack.c.l.b16 %v2121
      %v2334 = vunpack.c.h.b16 %v2121
      %v2335 = vunpack.c.l.b16 %v2122
      %v2336 = vunpack.c.h.b16 %v2122
      %v2337 = vunpack.c.l.b16 %v2123
      %v2338 = vunpack.c.l.b16 %v2124
      %v2339 = vunpack.c.h.b16 %v2124
      %v2340 = vunpack.c.l.b16 %v2125
      %v2341 = vunpack.c.h.b16 %v2125
      %v2342 = vunpack.c.l.b16 %v2126
      %v2343 = vunpack.c.l.b16 %v2127
      %v2344 = vunpack.c.h.b16 %v2127
      %v2345 = vunpack.c.l.b16 %v2128
      %v2346 = vunpack.c.h.b16 %v2128
      %v2347 = vunpack.c.l.b16 %v2129
      %v2348 = vunpack.c.l.b16 %v2130
      %v2349 = vunpack.c.h.b16 %v2130
      %v2350 = vunpack.c.l.b16 %v2131
      %v2351 = vunpack.c.h.b16 %v2131
      %v2352 = vunpack.c.l.b16 %v2132
      %v2353 = vunpack.c.l.b16 %v2133
      %v2354 = vunpack.c.h.b16 %v2133
      %v2355 = vunpack.c.l.b16 %v2134
      %v2356 = vunpack.c.h.b16 %v2134
      %v2357 = vunpack.c.l.b16 %v2135
      %v2358 = vunpack.c.l.b16 %v2136
      %v2359 = vunpack.c.h.b16 %v2136
      %v2360 = vunpack.c.l.b16 %v2137
      %v2361 = vunpack.c.h.b16 %v2137
      %v2362 = vunpack.c.l.b16 %v2138
      %v2363 = vunpack.c.l.b16 %v2139
      %v2364 = vunpack.c.h.b16 %v2139
      %v2365 = vunpack.c.l.b16 %v2140
      %v2366 = vunpack.c.h.b16 %v2140
      %v2367 = vunpack.c.l.b16 %v2141
      %v2368 = vunpack.c.l.b16 %v2142
      %v2369 = vunpack.c.h.b16 %v2142
      %v2370 = vunpack.c.l.b16 %v2143
      %v2371 = vunpack.c.h.b16 %v2143
      %v2372 = vunpack.c.l.b16 %v2144
      %v2373 = vunpack.c.l.b16 %v2145
      %v2374 = vunpack.c.h.b16 %v2145
      %v2375 = vunpack.c.l.b16 %v2146
      %v2376 = vunpack.c.h.b16 %v2146
      %v2377 = vunpack.c.l.b16 %v2147
      %v2378 = vunpack.c.l.b16 %v2148
      %v2379 = vunpack.c.h.b16 %v2148
      %v2380 = vunpack.c.l.b16 %v2149
      %v2381 = vunpack.c.h.b16 %v2149
      %v2382 = vunpack.c.l.b16 %v2150
      %v2383 = vunpack.c.l.b16 %v2151
      %v2384 = vunpack.c.h.b16 %v2151
      %v2385 = vunpack.c.l.b16 %v2152
      %v2386 = vunpack.c.h.b16 %v2152
      %v2387 = vunpack.c.l.b16 %v2153
      %v2388 = vunpack.c.l.b16 %v2154
      %v2389 = vunpack.c.h.b16 %v2154
      %v2390 = vunpack.c.l.b16 %v2155
      %v2391 = vunpack.c.h.b16 %v2155
      %v2392 = vunpack.c.l.b16 %v2156
      %v2393 = vunpack.c.l.b16 %v2157
      %v2394 = vunpack.c.h.b16 %v2157
      %v2395 = vunpack.c.l.b16 %v2158
      %v2396 = vunpack.c.h.b16 %v2158
      %v2397 = vunpack.c.l.b16 %v2159
      %v2398 = vunpack.c.l.b16 %v2160
      %v2399 = vunpack.c.h.b16 %v2160
      %v2400 = vunpack.c.l.b16 %v2161
      %v2401 = vunpack.c.h.b16 %v2161
      %v2402 = vunpack.c.l.b16 %v2162
      %v2403 = vunpack.c.l.b16 %v2163
      %v2404 = vunpack.c.h.b16 %v2163
      %v2405 = vunpack.c.l.b16 %v2164
      %v2406 = vunpack.c.h.b16 %v2164
      %v2407 = vunpack.c.l.b16 %v2165
      %v2408 = vunpack.c.l.b16 %v2166
      %v2409 = vunpack.c.h.b16 %v2166
      %v2410 = vunpack.c.l.b16 %v2167
      %v2411 = vunpack.c.h.b16 %v2167
      %v2412 = vunpack.c.l.b16 %v2168
      %v2413 = vunpack.c.l.b16 %v2169
      %v2414 = vunpack.c.h.b16 %v2169
      %v2415 = vunpack.c.l.b16 %v2170
      %v2416 = vunpack.c.h.b16 %v2170
      %v2417 = vunpack.c.l.b16 %v2171
      %v2418 = vunpack.c.l.b16 %v2172
      %v2419 = vunpack.c.h.b16 %v2172
      %v2420 = vunpack.c.l.b16 %v2173
      %v2421 = vunpack.c.h.b16 %v2173
      %v2422 = vunpack.c.l.b16 %v2174
      %v2423 = vunpack.c.l.b16 %v2175
      %v2424 = vunpack.c.h.b16 %v2175
      %v2425 = vunpack.c.l.b16 %v2176
      %v2426 = vunpack.c.h.b16 %v2176
      %v2427 = vunpack.c.l.b16 %v2177
      %v2428 = vunpack.c.l.b16 %v2178
      %v2429 = vunpack.c.h.b16 %v2178
      %v2430 = vunpack.c.l.b16 %v2179
      %v2431 = vunpack.c.h.b16 %v2179
      %v2432 = vunpack.c.l.b16 %v2180
      %v2433 = vunpack.c.l.b16 %v2181
      %v2434 = vunpack.c.h.b16 %v2181
      %v2435 = vunpack.c.l.b16 %v2182
      %v2436 = vunpack.c.h.b16 %v2182
      %v2437 = vunpack.c.l.b16 %v2183
      %v2438 = vunpack.c.l.b16 %v2184
      %v2439 = vunpack.c.h.b16 %v2184
      %v2440 = vunpack.c.l.b16 %v2185
      %v2441 = vunpack.c.h.b16 %v2185
      %v2442 = vunpack.c.l.b16 %v2186
      %v2443 = vpack.c.b16 %v2288, %v2283
      %v2444 = vpack.c.b16 %v2289, %v2284
      %v2445 = vpack.c.b16 %v2290, %v2285
      %v2446 = vpack.c.b16 %v2291, %v2286
      %v2447 = vpack.c.b16 %v2292, %v2287
      %v2448 = vpack.c.b16 %v2298, %v2293
      %v2449 = vpack.c.b16 %v2299, %v2294
      %v2450 = vpack.c.b16 %v2300, %v2295
      %v2451 = vpack.c.b16 %v2301, %v2296
      %v2452 = vpack.c.b16 %v2302, %v2297
      %v2453 = vpack.c.b16 %v2308, %v2303
      %v2454 = vpack.c.b16 %v2309, %v2304
      %v2455 = vpack.c.b16 %v2310, %v2305
      %v2456 = vpack.c.b16 %v2311, %v2306
      %v2457 = vpack.c.b16 %v2312, %v2307
      %v2458 = vpack.c.b16 %v2318, %v2313
      %v2459 = vpack.c.b16 %v2319, %v2314
      %v2460 = vpack.c.b16 %v2320, %v2315
      %v2461 = vpack.c.b16 %v2321, %v2316
      %v2462 = vpack.c.b16 %v2322, %v2317
      %v2463 = vpack.c.b16 %v2328, %v2323
      %v2464 = vpack.c.b16 %v2329, %v2324
      %v2465 = vpack.c.b16 %v2330, %v2325
      %v2466 = vpack.c.b16 %v2331, %v2326
      %v2467 = vpack.c.b16 %v2332, %v2327
      %v2468 = vpack.c.b16 %v2338, %v2333
      %v2469 = vpack.c.b16 %v2339, %v2334
      %v2470 = vpack.c.b16 %v2340, %v2335
      %v2471 = vpack.c.b16 %v2341, %v2336
      %v2472 = vpack.c.b16 %v2342, %v2337
      %v2473 = vpack.c.b16 %v2348, %v2343
      %v2474 = vpack.c.b16 %v2349, %v2344
      %v2475 = vpack.c.b16 %v2350, %v2345
      %v2476 = vpack.c.b16 %v2351, %v2346
      %v2477 = vpack.c.b16 %v2352, %v2347
      %v2478 = vpack.c.b16 %v2358, %v2353
      %v2479 = vpack.c.b16 %v2359, %v2354
      %v2480 = vpack.c.b16 %v2360, %v2355
      %v2481 = vpack.c.b16 %v2361, %v2356
      %v2482 = vpack.c.b16 %v2362, %v2357
      %v2483 = vpack.c.b16 %v2368, %v2363
      %v2484 = vpack.c.b16 %v2369, %v2364
      %v2485 = vpack.c.b16 %v2370, %v2365
      %v2486 = vpack.c.b16 %v2371, %v2366
      %v2487 = vpack.c.b16 %v2372, %v2367
      %v2488 = vpack.c.b16 %v2378, %v2373
      %v2489 = vpack.c.b16 %v2379, %v2374
      %v2490 = vpack.c.b16 %v2380, %v2375
      %v2491 = vpack.c.b16 %v2381, %v2376
      %v2492 = vpack.c.b16 %v2382, %v2377
      %v2493 = vpack.c.b16 %v2388, %v2383
      %v2494 = vpack.c.b16 %v2389, %v2384
      %v2495 = vpack.c.b16 %v2390, %v2385
      %v2496 = vpack.c.b16 %v2391, %v2386
      %v2497 = vpack.c.b16 %v2392, %v2387
      %v2498 = vpack.c.b16 %v2398, %v2393
      %v2499 = vpack.c.b16 %v2399, %v2394
      %v2500 = vpack.c.b16 %v2400, %v2395
      %v2501 = vpack.c.b16 %v2401, %v2396
      %v2502 = vpack.c.b16 %v2402, %v2397
      %v2503 = vpack.c.b16 %v2408, %v2403
      %v2504 = vpack.c.b16 %v2409, %v2404
      %v2505 = vpack.c.b16 %v2410, %v2405
      %v2506 = vpack.c.b16 %v2411, %v2406
      %v2507 = vpack.c.b16 %v2412, %v2407
      %v2508 = vpack.c.b16 %v2418, %v2413
      %v2509 = vpack.c.b16 %v2419, %v2414
      %v2510 = vpack.c.b16 %v2420, %v2415
      %v2511 = vpack.c.b16 %v2421, %v2416
      %v2512 = vpack.c.b16 %v2422, %v2417
      %v2513 = vpack.c.b16 %v2428, %v2423
      %v2514 = vpack.c.b16 %v2429, %v2424
      %v2515 = vpack.c.b16 %v2430, %v2425
      %v2516 = vpack.c.b16 %v2431, %v2426
      %v2517 = vpack.c.b16 %v2432, %v2427
      %v2518 = vpack.c.b16 %v2438, %v2433
      %v2519 = vpack.c.b16 %v2439, %v2434
      %v2520 = vpack.c.b16 %v2440, %v2435
      %v2521 = vpack.c.b16 %v2441, %v2436
      %v2522 = vpack.c.b16 %v2442, %v2437
      %2603 = vmatprep.subr.bf16.mxu0 0
      %2604 = vmatpush1.bf16.msra.mxu0 %v1122
      %2605 = vmatprep.subr.bf16.mxu0 0
      %2606 = vmatpush1.bf16.msra.mxu0 %v1123
      %2607 = vmatprep.subr.bf16.mxu0 0
      %2608 = vmatpush1.bf16.msra.mxu0 %v1124
      %2609 = vmatprep.subr.bf16.mxu0 0
      %2610 = vmatpush1.bf16.msra.mxu0 %v1125
      %2611 = vmatprep.subr.bf16.mxu0 0
      %2612 = vmatpush1.bf16.msra.mxu0 %v1126
      %2613 = vmatprep.subr.bf16.mxu0 0
      %2614 = vmatpush1.bf16.msra.mxu0 %v1127
      %2615 = vmatprep.subr.bf16.mxu0 0
      %2616 = vmatpush1.bf16.msra.mxu0 %v1128
      %2617 = vmatprep.subr.bf16.mxu0 0
      %2618 = vmatpush1.bf16.msra.mxu0 %v1129
      %2619 = vmatprep.subr.bf16.mxu0 0
      %2620 = vmatpush1.bf16.msra.mxu0 %v1130
      %2621 = vmatprep.subr.bf16.mxu0 0
      %2622 = vmatpush1.bf16.msra.mxu0 %v1131
      %2623 = vmatprep.subr.bf16.mxu0 0
      %2624 = vmatpush1.bf16.msra.mxu0 %v1132
      %2625 = vmatprep.subr.bf16.mxu0 0
      %2626 = vmatpush1.bf16.msra.mxu0 %v1133
      %2627 = vmatprep.subr.bf16.mxu0 0
      %2628 = vmatpush1.bf16.msra.mxu0 %v1134
      %2629 = vmatprep.subr.bf16.mxu0 0
      %2630 = vmatpush1.bf16.msra.mxu0 %v1135
      %2631 = vmatprep.subr.bf16.mxu0 0
      %2632 = vmatpush1.bf16.msra.mxu0 %v1136
      %2633 = vmatprep.subr.bf16.mxu0 0
      %2634 = vmatpush1.bf16.msra.mxu0 %v1137
      %2635 = vmatprep.mubr.bf16.mxu0 %v2444
      %2636 = vmatmul.mubr.bf16.gmra.mrb[0].mxu0 %v2443
      %v2637 = vpop.f32.mrb[0].mxu0
      %v2638 = vadd.f32 %v544, %v2637
      %v2639 = vpop.f32.mrb[0].mxu0
      %v2640 = vpop.f32.mrb[0].mxu0
      %v2641 = vadd.f32 %v544, %v2640
      %v2642 = vpop.f32.mrb[0].mxu0
      %2643 = vmatprep.mubr.bf16.mxu0 %v2449
      %2644 = vmatmul.mubr.bf16.gmra.mrb[0].mxu0 %v2448
      %v2645 = vpop.f32.mrb[0].mxu0
      %v2646 = vadd.f32 %v544, %v2645
      %v2647 = vpop.f32.mrb[0].mxu0
      %v2648 = vpop.f32.mrb[0].mxu0
      %v2649 = vadd.f32 %v544, %v2648
      %v2650 = vpop.f32.mrb[0].mxu0
      %2651 = vmatprep.mubr.bf16.mxu0 %v2454
      %2652 = vmatmul.mubr.bf16.gmra.mrb[0].mxu0 %v2453
      %v2653 = vpop.f32.mrb[0].mxu0
      %v2654 = vadd.f32 %v544, %v2653
      %v2655 = vpop.f32.mrb[0].mxu0
      %v2656 = vpop.f32.mrb[0].mxu0
      %v2657 = vadd.f32 %v544, %v2656
      %v2658 = vpop.f32.mrb[0].mxu0
      %2659 = vmatprep.mubr.bf16.mxu0 %v2459
      %2660 = vmatmul.mubr.bf16.gmra.mrb[0].mxu0 %v2458
      %v2661 = vpop.f32.mrb[0].mxu0
      %v2662 = vadd.f32 %v544, %v2661
      %v2663 = vpop.f32.mrb[0].mxu0
      %v2664 = vpop.f32.mrb[0].mxu0
      %v2665 = vadd.f32 %v544, %v2664
      %v2666 = vpop.f32.mrb[0].mxu0
      %2667 = vmatprep.mubr.bf16.mxu0 %v2464
      %2668 = vmatmul.mubr.bf16.gmra.mrb[0].mxu0 %v2463
      %v2669 = vpop.f32.mrb[0].mxu0
      %v2670 = vadd.f32 %v544, %v2669
      %v2671 = vpop.f32.mrb[0].mxu0
      %v2672 = vpop.f32.mrb[0].mxu0
      %v2673 = vadd.f32 %v544, %v2672
      %v2674 = vpop.f32.mrb[0].mxu0
      %2675 = vmatprep.mubr.bf16.mxu0 %v2469
      %2676 = vmatmul.mubr.bf16.gmra.mrb[0].mxu0 %v2468
      %v2677 = vpop.f32.mrb[0].mxu0
      %v2678 = vadd.f32 %v544, %v2677
      %v2679 = vpop.f32.mrb[0].mxu0
      %v2680 = vpop.f32.mrb[0].mxu0
      %v2681 = vadd.f32 %v544, %v2680
      %v2682 = vpop.f32.mrb[0].mxu0
      %2683 = vmatprep.mubr.bf16.mxu0 %v2474
      %2684 = vmatmul.mubr.bf16.gmra.mrb[0].mxu0 %v2473
      %v2685 = vpop.f32.mrb[0].mxu0
      %v2686 = vadd.f32 %v544, %v2685
      %v2687 = vpop.f32.mrb[0].mxu0
      %v2688 = vpop.f32.mrb[0].mxu0
      %v2689 = vadd.f32 %v544, %v2688
      %v2690 = vpop.f32.mrb[0].mxu0
      %2691 = vmatprep.mubr.bf16.mxu0 %v2479
      %2692 = vmatmul.mubr.bf16.gmra.mrb[0].mxu0 %v2478
      %v2693 = vpop.f32.mrb[0].mxu0
      %v2694 = vadd.f32 %v544, %v2693
      %v2695 = vpop.f32.mrb[0].mxu0
      %v2696 = vpop.f32.mrb[0].mxu0
      %v2697 = vadd.f32 %v544, %v2696
      %v2698 = vpop.f32.mrb[0].mxu0
      %2699 = vmatprep.mubr.bf16.mxu0 %v2484
      %2700 = vmatmul.mubr.bf16.gmra.mrb[0].mxu0 %v2483
      %v2701 = vpop.f32.mrb[0].mxu0
      %v2702 = vadd.f32 %v544, %v2701
      %v2703 = vpop.f32.mrb[0].mxu0
      %v2704 = vpop.f32.mrb[0].mxu0
      %v2705 = vadd.f32 %v544, %v2704
      %v2706 = vpop.f32.mrb[0].mxu0
      %2707 = vmatprep.mubr.bf16.mxu0 %v2489
      %2708 = vmatmul.mubr.bf16.gmra.mrb[0].mxu0 %v2488
      %v2709 = vpop.f32.mrb[0].mxu0
      %v2710 = vadd.f32 %v544, %v2709
      %v2711 = vpop.f32.mrb[0].mxu0
      %v2712 = vpop.f32.mrb[0].mxu0
      %v2713 = vadd.f32 %v544, %v2712
      %v2714 = vpop.f32.mrb[0].mxu0
      %2715 = vmatprep.mubr.bf16.mxu0 %v2494
      %2716 = vmatmul.mubr.bf16.gmra.mrb[0].mxu0 %v2493
      %v2717 = vpop.f32.mrb[0].mxu0
      %v2718 = vadd.f32 %v544, %v2717
      %v2719 = vpop.f32.mrb[0].mxu0
      %v2720 = vpop.f32.mrb[0].mxu0
      %v2721 = vadd.f32 %v544, %v2720
      %v2722 = vpop.f32.mrb[0].mxu0
      %2723 = vmatprep.mubr.bf16.mxu0 %v2499
      %2724 = vmatmul.mubr.bf16.gmra.mrb[0].mxu0 %v2498
      %v2725 = vpop.f32.mrb[0].mxu0
      %v2726 = vadd.f32 %v544, %v2725
      %v2727 = vpop.f32.mrb[0].mxu0
      %v2728 = vpop.f32.mrb[0].mxu0
      %v2729 = vadd.f32 %v544, %v2728
      %v2730 = vpop.f32.mrb[0].mxu0
      %2731 = vmatprep.mubr.bf16.mxu0 %v2504
      %2732 = vmatmul.mubr.bf16.gmra.mrb[0].mxu0 %v2503
      %v2733 = vpop.f32.mrb[0].mxu0
      %v2734 = vadd.f32 %v544, %v2733
      %v2735 = vpop.f32.mrb[0].mxu0
      %v2736 = vpop.f32.mrb[0].mxu0
      %v2737 = vadd.f32 %v544, %v2736
      %v2738 = vpop.f32.mrb[0].mxu0
      %2739 = vmatprep.mubr.bf16.mxu0 %v2509
      %2740 = vmatmul.mubr.bf16.gmra.mrb[0].mxu0 %v2508
      %v2741 = vpop.f32.mrb[0].mxu0
      %v2742 = vadd.f32 %v544, %v2741
      %v2743 = vpop.f32.mrb[0].mxu0
      %v2744 = vpop.f32.mrb[0].mxu0
      %v2745 = vadd.f32 %v544, %v2744
      %v2746 = vpop.f32.mrb[0].mxu0
      %2747 = vmatprep.mubr.bf16.mxu0 %v2514
      %2748 = vmatmul.mubr.bf16.gmra.mrb[0].mxu0 %v2513
      %v2749 = vpop.f32.mrb[0].mxu0
      %v2750 = vadd.f32 %v544, %v2749
      %v2751 = vpop.f32.mrb[0].mxu0
      %v2752 = vpop.f32.mrb[0].mxu0
      %v2753 = vadd.f32 %v544, %v2752
      %v2754 = vpop.f32.mrb[0].mxu0
      %2755 = vmatprep.mubr.bf16.mxu0 %v2519
      %2756 = vmatmul.mubr.bf16.gmra.mrb[0].mxu0 %v2518
      %v2757 = vpop.f32.mrb[0].mxu0
      %v2758 = vadd.f32 %v544, %v2757
      %v2759 = vpop.f32.mrb[0].mxu0
      %v2760 = vpop.f32.mrb[0].mxu0
      %v2761 = vadd.f32 %v544, %v2760
      %v2762 = vpop.f32.mrb[0].mxu0
      %2763 = vdwg.mxu0
      %2764 = vmatprep.subr.bf16.mxu0 0
      %2765 = vmatpush1.bf16.msra.mxu0 %v1138
      %2766 = vmatprep.subr.bf16.mxu0 0
      %2767 = vmatpush1.bf16.msra.mxu0 %v1139
      %2768 = vmatprep.subr.bf16.mxu0 0
      %2769 = vmatpush1.bf16.msra.mxu0 %v1140
      %2770 = vmatprep.subr.bf16.mxu0 0
      %2771 = vmatpush1.bf16.msra.mxu0 %v1141
      %2772 = vmatprep.subr.bf16.mxu0 0
      %2773 = vmatpush1.bf16.msra.mxu0 %v1142
      %2774 = vmatprep.subr.bf16.mxu0 0
      %2775 = vmatpush1.bf16.msra.mxu0 %v1143
      %2776 = vmatprep.subr.bf16.mxu0 0
      %2777 = vmatpush1.bf16.msra.mxu0 %v1144
      %2778 = vmatprep.subr.bf16.mxu0 0
      %2779 = vmatpush1.bf16.msra.mxu0 %v1145
      %2780 = vmatprep.subr.bf16.mxu0 0
      %2781 = vmatpush1.bf16.msra.mxu0 %v1146
      %2782 = vmatprep.subr.bf16.mxu0 0
      %2783 = vmatpush1.bf16.msra.mxu0 %v1147
      %2784 = vmatprep.subr.bf16.mxu0 0
      %2785 = vmatpush1.bf16.msra.mxu0 %v1148
      %2786 = vmatprep.subr.bf16.mxu0 0
      %2787 = vmatpush1.bf16.msra.mxu0 %v1149
      %2788 = vmatprep.subr.bf16.mxu0 0
      %2789 = vmatpush1.bf16.msra.mxu0 %v1150
      %2790 = vmatprep.subr.bf16.mxu0 0
      %2791 = vmatpush1.bf16.msra.mxu0 %v1151
      %2792 = vmatprep.subr.bf16.mxu0 0
      %2793 = vmatpush1.bf16.msra.mxu0 %v1152
      %2794 = vmatprep.subr.bf16.mxu0 0
      %2795 = vmatpush1.bf16.msra.mxu0 %v1153
      %2796 = vmatprep.mubr.bf16.mxu0 %v2446
      %2797 = vmatmul.mubr.bf16.gmra.mrb[0].mxu0 %v2445
      %v2798 = vpop.f32.mrb[0].mxu0
      %v2799 = vadd.f32 %v2638, %v2798
      %v2800 = vpop.f32.mrb[0].mxu0
      %v2801 = vpop.f32.mrb[0].mxu0
      %v2802 = vadd.f32 %v2641, %v2801
      %v2803 = vpop.f32.mrb[0].mxu0
      %2804 = vmatprep.mubr.bf16.mxu0 %v2451
      %2805 = vmatmul.mubr.bf16.gmra.mrb[0].mxu0 %v2450
      %v2806 = vpop.f32.mrb[0].mxu0
      %v2807 = vadd.f32 %v2646, %v2806
      %v2808 = vpop.f32.mrb[0].mxu0
      %v2809 = vpop.f32.mrb[0].mxu0
      %v2810 = vadd.f32 %v2649, %v2809
      %v2811 = vpop.f32.mrb[0].mxu0
      %2812 = vmatprep.mubr.bf16.mxu0 %v2456
      %2813 = vmatmul.mubr.bf16.gmra.mrb[0].mxu0 %v2455
      %v2814 = vpop.f32.mrb[0].mxu0
      %v2815 = vadd.f32 %v2654, %v2814
      %v2816 = vpop.f32.mrb[0].mxu0
      %v2817 = vpop.f32.mrb[0].mxu0
      %v2818 = vadd.f32 %v2657, %v2817
      %v2819 = vpop.f32.mrb[0].mxu0
      %2820 = vmatprep.mubr.bf16.mxu0 %v2461
      %2821 = vmatmul.mubr.bf16.gmra.mrb[0].mxu0 %v2460
      %v2822 = vpop.f32.mrb[0].mxu0
      %v2823 = vadd.f32 %v2662, %v2822
      %v2824 = vpop.f32.mrb[0].mxu0
      %v2825 = vpop.f32.mrb[0].mxu0
      %v2826 = vadd.f32 %v2665, %v2825
      %v2827 = vpop.f32.mrb[0].mxu0
      %2828 = vmatprep.mubr.bf16.mxu0 %v2466
      %2829 = vmatmul.mubr.bf16.gmra.mrb[0].mxu0 %v2465
      %v2830 = vpop.f32.mrb[0].mxu0
      %v2831 = vadd.f32 %v2670, %v2830
      %v2832 = vpop.f32.mrb[0].mxu0
      %v2833 = vpop.f32.mrb[0].mxu0
      %v2834 = vadd.f32 %v2673, %v2833
      %v2835 = vpop.f32.mrb[0].mxu0
      %2836 = vmatprep.mubr.bf16.mxu0 %v2471
      %2837 = vmatmul.mubr.bf16.gmra.mrb[0].mxu0 %v2470
      %v2838 = vpop.f32.mrb[0].mxu0
      %v2839 = vadd.f32 %v2678, %v2838
      %v2840 = vpop.f32.mrb[0].mxu0
      %v2841 = vpop.f32.mrb[0].mxu0
      %v2842 = vadd.f32 %v2681, %v2841
      %v2843 = vpop.f32.mrb[0].mxu0
      %2844 = vmatprep.mubr.bf16.mxu0 %v2476
      %2845 = vmatmul.mubr.bf16.gmra.mrb[0].mxu0 %v2475
      %v2846 = vpop.f32.mrb[0].mxu0
      %v2847 = vadd.f32 %v2686, %v2846
      %v2848 = vpop.f32.mrb[0].mxu0
      %v2849 = vpop.f32.mrb[0].mxu0
      %v2850 = vadd.f32 %v2689, %v2849
      %v2851 = vpop.f32.mrb[0].mxu0
      %2852 = vmatprep.mubr.bf16.mxu0 %v2481
      %2853 = vmatmul.mubr.bf16.gmra.mrb[0].mxu0 %v2480
      %v2854 = vpop.f32.mrb[0].mxu0
      %v2855 = vadd.f32 %v2694, %v2854
      %v2856 = vpop.f32.mrb[0].mxu0
      %v2857 = vpop.f32.mrb[0].mxu0
      %v2858 = vadd.f32 %v2697, %v2857
      %v2859 = vpop.f32.mrb[0].mxu0
      %2860 = vmatprep.mubr.bf16.mxu0 %v2486
      %2861 = vmatmul.mubr.bf16.gmra.mrb[0].mxu0 %v2485
      %v2862 = vpop.f32.mrb[0].mxu0
      %v2863 = vadd.f32 %v2702, %v2862
      %v2864 = vpop.f32.mrb[0].mxu0
      %v2865 = vpop.f32.mrb[0].mxu0
      %v2866 = vadd.f32 %v2705, %v2865
      %v2867 = vpop.f32.mrb[0].mxu0
      %2868 = vmatprep.mubr.bf16.mxu0 %v2491
      %2869 = vmatmul.mubr.bf16.gmra.mrb[0].mxu0 %v2490
      %v2870 = vpop.f32.mrb[0].mxu0
      %v2871 = vadd.f32 %v2710, %v2870
      %v2872 = vpop.f32.mrb[0].mxu0
      %v2873 = vpop.f32.mrb[0].mxu0
      %v2874 = vadd.f32 %v2713, %v2873
      %v2875 = vpop.f32.mrb[0].mxu0
      %2876 = vmatprep.mubr.bf16.mxu0 %v2496
      %2877 = vmatmul.mubr.bf16.gmra.mrb[0].mxu0 %v2495
      %v2878 = vpop.f32.mrb[0].mxu0
      %v2879 = vadd.f32 %v2718, %v2878
      %v2880 = vpop.f32.mrb[0].mxu0
      %v2881 = vpop.f32.mrb[0].mxu0
      %v2882 = vadd.f32 %v2721, %v2881
      %v2883 = vpop.f32.mrb[0].mxu0
      %2884 = vmatprep.mubr.bf16.mxu0 %v2501
      %2885 = vmatmul.mubr.bf16.gmra.mrb[0].mxu0 %v2500
      %v2886 = vpop.f32.mrb[0].mxu0
      %v2887 = vadd.f32 %v2726, %v2886
      %v2888 = vpop.f32.mrb[0].mxu0
      %v2889 = vpop.f32.mrb[0].mxu0
      %v2890 = vadd.f32 %v2729, %v2889
      %v2891 = vpop.f32.mrb[0].mxu0
      %2892 = vmatprep.mubr.bf16.mxu0 %v2506
      %2893 = vmatmul.mubr.bf16.gmra.mrb[0].mxu0 %v2505
      %v2894 = vpop.f32.mrb[0].mxu0
      %v2895 = vadd.f32 %v2734, %v2894
      %v2896 = vpop.f32.mrb[0].mxu0
      %v2897 = vpop.f32.mrb[0].mxu0
      %v2898 = vadd.f32 %v2737, %v2897
      %v2899 = vpop.f32.mrb[0].mxu0
      %2900 = vmatprep.mubr.bf16.mxu0 %v2511
      %2901 = vmatmul.mubr.bf16.gmra.mrb[0].mxu0 %v2510
      %v2902 = vpop.f32.mrb[0].mxu0
      %v2903 = vadd.f32 %v2742, %v2902
      %v2904 = vpop.f32.mrb[0].mxu0
      %v2905 = vpop.f32.mrb[0].mxu0
      %v2906 = vadd.f32 %v2745, %v2905
      %v2907 = vpop.f32.mrb[0].mxu0
      %2908 = vmatprep.mubr.bf16.mxu0 %v2516
      %2909 = vmatmul.mubr.bf16.gmra.mrb[0].mxu0 %v2515
      %v2910 = vpop.f32.mrb[0].mxu0
      %v2911 = vadd.f32 %v2750, %v2910
      %v2912 = vpop.f32.mrb[0].mxu0
      %v2913 = vpop.f32.mrb[0].mxu0
      %v2914 = vadd.f32 %v2753, %v2913
      %v2915 = vpop.f32.mrb[0].mxu0
      %2916 = vmatprep.mubr.bf16.mxu0 %v2521
      %2917 = vmatmul.mubr.bf16.gmra.mrb[0].mxu0 %v2520
      %v2918 = vpop.f32.mrb[0].mxu0
      %v2919 = vadd.f32 %v2758, %v2918
      %v2920 = vpop.f32.mrb[0].mxu0
      %v2921 = vpop.f32.mrb[0].mxu0
      %v2922 = vadd.f32 %v2761, %v2921
      %v2923 = vpop.f32.mrb[0].mxu0
      %2924 = vdwg.mxu0
      %2925 = vmatprep.subr.bf16.mxu0 0
      %2926 = vmatpush1.bf16.msra.mxu0 %v1154
      %2927 = vmatprep.subr.bf16.mxu0 0
      %2928 = vmatpush1.bf16.msra.mxu0 %v1155
      %2929 = vmatprep.subr.bf16.mxu0 0
      %2930 = vmatpush1.bf16.msra.mxu0 %v1156
      %2931 = vmatprep.subr.bf16.mxu0 0
      %2932 = vmatpush1.bf16.msra.mxu0 %v1157
      %2933 = vmatprep.subr.bf16.mxu0 0
      %2934 = vmatpush1.bf16.msra.mxu0 %v1158
      %2935 = vmatprep.subr.bf16.mxu0 0
      %2936 = vmatpush1.bf16.msra.mxu0 %v1159
      %2937 = vmatprep.subr.bf16.mxu0 0
      %2938 = vmatpush1.bf16.msra.mxu0 %v1160
      %2939 = vmatprep.subr.bf16.mxu0 0
      %2940 = vmatpush1.bf16.msra.mxu0 %v1161
      %2941 = vmatprep.subr.bf16.mxu0 0
      %2942 = vmatpush1.bf16.msra.mxu0 0
      %2943 = vmatprep.subr.bf16.mxu0 0
      %2944 = vmatpush1.bf16.msra.mxu0 0
      %2945 = vmatprep.subr.bf16.mxu0 0
      %2946 = vmatpush1.bf16.msra.mxu0 0
      %2947 = vmatprep.subr.bf16.mxu0 0
      %2948 = vmatpush1.bf16.msra.mxu0 0
      %2949 = vmatprep.subr.bf16.mxu0 0
      %2950 = vmatpush1.bf16.msra.mxu0 0
      %2951 = vmatprep.subr.bf16.mxu0 0
      %2952 = vmatpush1.bf16.msra.mxu0 0
      %2953 = vmatprep.subr.bf16.mxu0 0
      %2954 = vmatpush1.bf16.msra.mxu0 0
      %2955 = vmatprep.subr.bf16.mxu0 0
      %2956 = vmatpush1.bf16.msra.mxu0 0
      %2957 = vmatprep.mubr.bf16.mxu0 0
      %2958 = vmatmul.mubr.bf16.gmra.mrb[0].mxu0 %v2447
      %v2959 = vpop.f32.mrb[0].mxu0
      %v2960 = vadd.f32 %v2799, %v2959
      %v2961 = vpop.f32.mrb[0].mxu0
      %v2962 = vpop.f32.mrb[0].mxu0
      %v2963 = vadd.f32 %v2802, %v2962
      %v2964 = vpop.f32.mrb[0].mxu0
      %2965 = vmatprep.mubr.bf16.mxu0 0
      %2966 = vmatmul.mubr.bf16.gmra.mrb[0].mxu0 %v2452
      %v2967 = vpop.f32.mrb[0].mxu0
      %v2968 = vadd.f32 %v2807, %v2967
      %v2969 = vpop.f32.mrb[0].mxu0
      %v2970 = vpop.f32.mrb[0].mxu0
      %v2971 = vadd.f32 %v2810, %v2970
      %v2972 = vpop.f32.mrb[0].mxu0
      %2973 = vmatprep.mubr.bf16.mxu0 0
      %2974 = vmatmul.mubr.bf16.gmra.mrb[0].mxu0 %v2457
      %v2975 = vpop.f32.mrb[0].mxu0
      %v2976 = vadd.f32 %v2815, %v2975
      %v2977 = vpop.f32.mrb[0].mxu0
      %v2978 = vpop.f32.mrb[0].mxu0
      %v2979 = vadd.f32 %v2818, %v2978
      %v2980 = vpop.f32.mrb[0].mxu0
      %2981 = vmatprep.mubr.bf16.mxu0 0
      %2982 = vmatmul.mubr.bf16.gmra.mrb[0].mxu0 %v2462
      %v2983 = vpop.f32.mrb[0].mxu0
      %v2984 = vadd.f32 %v2823, %v2983
      %v2985 = vpop.f32.mrb[0].mxu0
      %v2986 = vpop.f32.mrb[0].mxu0
      %v2987 = vadd.f32 %v2826, %v2986
      %v2988 = vpop.f32.mrb[0].mxu0
      %2989 = vmatprep.mubr.bf16.mxu0 0
      %2990 = vmatmul.mubr.bf16.gmra.mrb[0].mxu0 %v2467
      %v2991 = vpop.f32.mrb[0].mxu0
      %v2992 = vadd.f32 %v2831, %v2991
      %v2993 = vpop.f32.mrb[0].mxu0
      %v2994 = vpop.f32.mrb[0].mxu0
      %v2995 = vadd.f32 %v2834, %v2994
      %v2996 = vpop.f32.mrb[0].mxu0
      %2997 = vmatprep.mubr.bf16.mxu0 0
      %2998 = vmatmul.mubr.bf16.gmra.mrb[0].mxu0 %v2472
      %v2999 = vpop.f32.mrb[0].mxu0
      %v3000 = vadd.f32 %v2839, %v2999
      %v3001 = vpop.f32.mrb[0].mxu0
      %v3002 = vpop.f32.mrb[0].mxu0
      %v3003 = vadd.f32 %v2842, %v3002
      %v3004 = vpop.f32.mrb[0].mxu0
      %3005 = vmatprep.mubr.bf16.mxu0 0
      %3006 = vmatmul.mubr.bf16.gmra.mrb[0].mxu0 %v2477
      %v3007 = vpop.f32.mrb[0].mxu0
      %v3008 = vadd.f32 %v2847, %v3007
      %v3009 = vpop.f32.mrb[0].mxu0
      %v3010 = vpop.f32.mrb[0].mxu0
      %v3011 = vadd.f32 %v2850, %v3010
      %v3012 = vpop.f32.mrb[0].mxu0
      %3013 = vmatprep.mubr.bf16.mxu0 0
      %3014 = vmatmul.mubr.bf16.gmra.mrb[0].mxu0 %v2482
      %v3015 = vpop.f32.mrb[0].mxu0
      %v3016 = vadd.f32 %v2855, %v3015
      %v3017 = vpop.f32.mrb[0].mxu0
      %v3018 = vpop.f32.mrb[0].mxu0
      %v3019 = vadd.f32 %v2858, %v3018
      %v3020 = vpop.f32.mrb[0].mxu0
      %3021 = vmatprep.mubr.bf16.mxu0 0
      %3022 = vmatmul.mubr.bf16.gmra.mrb[0].mxu0 %v2487
      %v3023 = vpop.f32.mrb[0].mxu0
      %v3024 = vadd.f32 %v2863, %v3023
      %v3025 = vpop.f32.mrb[0].mxu0
      %v3026 = vpop.f32.mrb[0].mxu0
      %v3027 = vadd.f32 %v2866, %v3026
      %v3028 = vpop.f32.mrb[0].mxu0
      %3029 = vmatprep.mubr.bf16.mxu0 0
      %3030 = vmatmul.mubr.bf16.gmra.mrb[0].mxu0 %v2492
      %v3031 = vpop.f32.mrb[0].mxu0
      %v3032 = vadd.f32 %v2871, %v3031
      %v3033 = vpop.f32.mrb[0].mxu0
      %v3034 = vpop.f32.mrb[0].mxu0
      %v3035 = vadd.f32 %v2874, %v3034
      %v3036 = vpop.f32.mrb[0].mxu0
      %3037 = vmatprep.mubr.bf16.mxu0 0
      %3038 = vmatmul.mubr.bf16.gmra.mrb[0].mxu0 %v2497
      %v3039 = vpop.f32.mrb[0].mxu0
      %v3040 = vadd.f32 %v2879, %v3039
      %v3041 = vpop.f32.mrb[0].mxu0
      %v3042 = vpop.f32.mrb[0].mxu0
      %v3043 = vadd.f32 %v2882, %v3042
      %v3044 = vpop.f32.mrb[0].mxu0
      %3045 = vmatprep.mubr.bf16.mxu0 0
      %3046 = vmatmul.mubr.bf16.gmra.mrb[0].mxu0 %v2502
      %v3047 = vpop.f32.mrb[0].mxu0
      %v3048 = vadd.f32 %v2887, %v3047
      %v3049 = vpop.f32.mrb[0].mxu0
      %v3050 = vpop.f32.mrb[0].mxu0
      %v3051 = vadd.f32 %v2890, %v3050
      %v3052 = vpop.f32.mrb[0].mxu0
      %3053 = vmatprep.mubr.bf16.mxu0 0
      %3054 = vmatmul.mubr.bf16.gmra.mrb[0].mxu0 %v2507
      %v3055 = vpop.f32.mrb[0].mxu0
      %v3056 = vadd.f32 %v2895, %v3055
      %v3057 = vpop.f32.mrb[0].mxu0
      %v3058 = vpop.f32.mrb[0].mxu0
      %v3059 = vadd.f32 %v2898, %v3058
      %v3060 = vpop.f32.mrb[0].mxu0
      %3061 = vmatprep.mubr.bf16.mxu0 0
      %3062 = vmatmul.mubr.bf16.gmra.mrb[0].mxu0 %v2512
      %v3063 = vpop.f32.mrb[0].mxu0
      %v3064 = vadd.f32 %v2903, %v3063
      %v3065 = vpop.f32.mrb[0].mxu0
      %v3066 = vpop.f32.mrb[0].mxu0
      %v3067 = vadd.f32 %v2906, %v3066
      %v3068 = vpop.f32.mrb[0].mxu0
      %3069 = vmatprep.mubr.bf16.mxu0 0
      %3070 = vmatmul.mubr.bf16.gmra.mrb[0].mxu0 %v2517
      %v3071 = vpop.f32.mrb[0].mxu0
      %v3072 = vadd.f32 %v2911, %v3071
      %v3073 = vpop.f32.mrb[0].mxu0
      %v3074 = vpop.f32.mrb[0].mxu0
      %v3075 = vadd.f32 %v2914, %v3074
      %v3076 = vpop.f32.mrb[0].mxu0
      %3077 = vmatprep.mubr.bf16.mxu0 0
      %3078 = vmatmul.mubr.bf16.gmra.mrb[0].mxu0 %v2522
      %v3079 = vpop.f32.mrb[0].mxu0
      %v3080 = vadd.f32 %v2919, %v3079
      %v3081 = vpop.f32.mrb[0].mxu0
      %v3082 = vpop.f32.mrb[0].mxu0
      %v3083 = vadd.f32 %v2922, %v3082
      %v3084 = vpop.f32.mrb[0].mxu0
      %3085 = vdwg.mxu0
      %v3086 = vmul.f32 %v2960, 1.702
      %v3087 = vmul.f32 %v2963, 1.702
      %v3088 = vmul.f32 %v2968, 1.702
      %v3089 = vmul.f32 %v2971, 1.702
      %v3090 = vmul.f32 %v2976, 1.702
      %v3091 = vmul.f32 %v2979, 1.702
      %v3092 = vmul.f32 %v2984, 1.702
      %v3093 = vmul.f32 %v2987, 1.702
      %v3094 = vmul.f32 %v2992, 1.702
      %v3095 = vmul.f32 %v2995, 1.702
      %v3096 = vmul.f32 %v3000, 1.702
      %v3097 = vmul.f32 %v3003, 1.702
      %v3098 = vmul.f32 %v3008, 1.702
      %v3099 = vmul.f32 %v3011, 1.702
      %v3100 = vmul.f32 %v3016, 1.702
      %v3101 = vmul.f32 %v3019, 1.702
      %v3102 = vmul.f32 %v3024, 1.702
      %v3103 = vmul.f32 %v3027, 1.702
      %v3104 = vmul.f32 %v3032, 1.702
      %v3105 = vmul.f32 %v3035, 1.702
      %v3106 = vmul.f32 %v3040, 1.702
      %v3107 = vmul.f32 %v3043, 1.702
      %v3108 = vmul.f32 %v3048, 1.702
      %v3109 = vmul.f32 %v3051, 1.702
      %v3110 = vmul.f32 %v3056, 1.702
      %v3111 = vmul.f32 %v3059, 1.702
      %v3112 = vmul.f32 %v3064, 1.702
      %v3113 = vmul.f32 %v3067, 1.702
      %v3114 = vmul.f32 %v3072, 1.702
      %v3115 = vmul.f32 %v3075, 1.702
      %v3116 = vmul.f32 %v3080, 1.702
      %v3117 = vmul.f32 %v3083, 1.702
      %v3118 = vxor.u32 %v3086, 2147483648
      %v3119 = vxor.u32 %v3087, 2147483648
      %v3120 = vxor.u32 %v3088, 2147483648
      %v3121 = vxor.u32 %v3089, 2147483648
      %v3122 = vxor.u32 %v3090, 2147483648
      %v3123 = vxor.u32 %v3091, 2147483648
      %v3124 = vxor.u32 %v3092, 2147483648
      %v3125 = vxor.u32 %v3093, 2147483648
      %v3126 = vxor.u32 %v3094, 2147483648
      %v3127 = vxor.u32 %v3095, 2147483648
      %v3128 = vxor.u32 %v3096, 2147483648
      %v3129 = vxor.u32 %v3097, 2147483648
      %v3130 = vxor.u32 %v3098, 2147483648
      %v3131 = vxor.u32 %v3099, 2147483648
      %v3132 = vxor.u32 %v3100, 2147483648
      %v3133 = vxor.u32 %v3101, 2147483648
      %v3134 = vxor.u32 %v3102, 2147483648
      %v3135 = vxor.u32 %v3103, 2147483648
      %v3136 = vxor.u32 %v3104, 2147483648
      %v3137 = vxor.u32 %v3105, 2147483648
      %v3138 = vxor.u32 %v3106, 2147483648
      %v3139 = vxor.u32 %v3107, 2147483648
      %v3140 = vxor.u32 %v3108, 2147483648
      %v3141 = vxor.u32 %v3109, 2147483648
      %v3142 = vxor.u32 %v3110, 2147483648
      %v3143 = vxor.u32 %v3111, 2147483648
      %v3144 = vxor.u32 %v3112, 2147483648
      %v3145 = vxor.u32 %v3113, 2147483648
      %v3146 = vxor.u32 %v3114, 2147483648
      %v3147 = vxor.u32 %v3115, 2147483648
      %v3148 = vxor.u32 %v3116, 2147483648
      %v3149 = vxor.u32 %v3117, 2147483648
      %v3150 = vmul.f32 %v3118, 1.442695
      %v3151 = vpow.pop %v3150
      %v3152 = vmul.f32 %v3119, 1.442695
      %v3153 = vpow.pop %v3152
      %v3154 = vmul.f32 %v3120, 1.442695
      %v3155 = vpow.pop %v3154
      %v3156 = vmul.f32 %v3121, 1.442695
      %v3157 = vpow.pop %v3156
      %v3158 = vmul.f32 %v3122, 1.442695
      %v3159 = vpow.pop %v3158
      %v3160 = vmul.f32 %v3123, 1.442695
      %v3161 = vpow.pop %v3160
      %v3162 = vmul.f32 %v3124, 1.442695
      %v3163 = vpow.pop %v3162
      %v3164 = vmul.f32 %v3125, 1.442695
      %v3165 = vpow.pop %v3164
      %v3166 = vmul.f32 %v3126, 1.442695
      %v3167 = vpow.pop %v3166
      %v3168 = vmul.f32 %v3127, 1.442695
      %v3169 = vpow.pop %v3168
      %v3170 = vmul.f32 %v3128, 1.442695
      %v3171 = vpow.pop %v3170
      %v3172 = vmul.f32 %v3129, 1.442695
      %v3173 = vpow.pop %v3172
      %v3174 = vmul.f32 %v3130, 1.442695
      %v3175 = vpow.pop %v3174
      %v3176 = vmul.f32 %v3131, 1.442695
      %v3177 = vpow.pop %v3176
      %v3178 = vmul.f32 %v3132, 1.442695
      %v3179 = vpow.pop %v3178
      %v3180 = vmul.f32 %v3133, 1.442695
      %v3181 = vpow.pop %v3180
      %v3182 = vmul.f32 %v3134, 1.442695
      %v3183 = vpow.pop %v3182
      %v3184 = vmul.f32 %v3135, 1.442695
      %v3185 = vpow.pop %v3184
      %v3186 = vmul.f32 %v3136, 1.442695
      %v3187 = vpow.pop %v3186
      %v3188 = vmul.f32 %v3137, 1.442695
      %v3189 = vpow.pop %v3188
      %v3190 = vmul.f32 %v3138, 1.442695
      %v3191 = vpow.pop %v3190
      %v3192 = vmul.f32 %v3139, 1.442695
      %v3193 = vpow.pop %v3192
      %v3194 = vmul.f32 %v3140, 1.442695
      %v3195 = vpow.pop %v3194
      %v3196 = vmul.f32 %v3141, 1.442695
      %v3197 = vpow.pop %v3196
      %v3198 = vmul.f32 %v3142, 1.442695
      %v3199 = vpow.pop %v3198
      %v3200 = vmul.f32 %v3143, 1.442695
      %v3201 = vpow.pop %v3200
      %v3202 = vmul.f32 %v3144, 1.442695
      %v3203 = vpow.pop %v3202
      %v3204 = vmul.f32 %v3145, 1.442695
      %v3205 = vpow.pop %v3204
      %v3206 = vmul.f32 %v3146, 1.442695
      %v3207 = vpow.pop %v3206
      %v3208 = vmul.f32 %v3147, 1.442695
      %v3209 = vpow.pop %v3208
      %v3210 = vmul.f32 %v3148, 1.442695
      %v3211 = vpow.pop %v3210
      %v3212 = vmul.f32 %v3149, 1.442695
      %v3213 = vpow.pop %v3212
      %v3214 = vadd.f32 %v3151, 1.0
      %v3215 = vadd.f32 %v3153, 1.0
      %v3216 = vadd.f32 %v3155, 1.0
      %v3217 = vadd.f32 %v3157, 1.0
      %v3218 = vadd.f32 %v3159, 1.0
      %v3219 = vadd.f32 %v3161, 1.0
      %v3220 = vadd.f32 %v3163, 1.0
      %v3221 = vadd.f32 %v3165, 1.0
      %v3222 = vadd.f32 %v3167, 1.0
      %v3223 = vadd.f32 %v3169, 1.0
      %v3224 = vadd.f32 %v3171, 1.0
      %v3225 = vadd.f32 %v3173, 1.0
      %v3226 = vadd.f32 %v3175, 1.0
      %v3227 = vadd.f32 %v3177, 1.0
      %v3228 = vadd.f32 %v3179, 1.0
      %v3229 = vadd.f32 %v3181, 1.0
      %v3230 = vadd.f32 %v3183, 1.0
      %v3231 = vadd.f32 %v3185, 1.0
      %v3232 = vadd.f32 %v3187, 1.0
      %v3233 = vadd.f32 %v3189, 1.0
      %v3234 = vadd.f32 %v3191, 1.0
      %v3235 = vadd.f32 %v3193, 1.0
      %v3236 = vadd.f32 %v3195, 1.0
      %v3237 = vadd.f32 %v3197, 1.0
      %v3238 = vadd.f32 %v3199, 1.0
      %v3239 = vadd.f32 %v3201, 1.0
      %v3240 = vadd.f32 %v3203, 1.0
      %v3241 = vadd.f32 %v3205, 1.0
      %v3242 = vadd.f32 %v3207, 1.0
      %v3243 = vadd.f32 %v3209, 1.0
      %v3244 = vadd.f32 %v3211, 1.0
      %v3245 = vadd.f32 %v3213, 1.0
      %v3246 = vrcp.pop %v3214
      %v3247 = vmul.f32 1.0, %v3246
      %v3248 = vrcp.pop %v3215
      %v3249 = vmul.f32 1.0, %v3248
      %v3250 = vrcp.pop %v3216
      %v3251 = vmul.f32 1.0, %v3250
      %v3252 = vrcp.pop %v3217
      %v3253 = vmul.f32 1.0, %v3252
      %v3254 = vrcp.pop %v3218
      %v3255 = vmul.f32 1.0, %v3254
      %v3256 = vrcp.pop %v3219
      %v3257 = vmul.f32 1.0, %v3256
      %v3258 = vrcp.pop %v3220
      %v3259 = vmul.f32 1.0, %v3258
      %v3260 = vrcp.pop %v3221
      %v3261 = vmul.f32 1.0, %v3260
      %v3262 = vrcp.pop %v3222
      %v3263 = vmul.f32 1.0, %v3262
      %v3264 = vrcp.pop %v3223
      %v3265 = vmul.f32 1.0, %v3264
      %v3266 = vrcp.pop %v3224
      %v3267 = vmul.f32 1.0, %v3266
      %v3268 = vrcp.pop %v3225
      %v3269 = vmul.f32 1.0, %v3268
      %v3270 = vrcp.pop %v3226
      %v3271 = vmul.f32 1.0, %v3270
      %v3272 = vrcp.pop %v3227
      %v3273 = vmul.f32 1.0, %v3272
      %v3274 = vrcp.pop %v3228
      %v3275 = vmul.f32 1.0, %v3274
      %v3276 = vrcp.pop %v3229
      %v3277 = vmul.f32 1.0, %v3276
      %v3278 = vrcp.pop %v3230
      %v3279 = vmul.f32 1.0, %v3278
      %v3280 = vrcp.pop %v3231
      %v3281 = vmul.f32 1.0, %v3280
      %v3282 = vrcp.pop %v3232
      %v3283 = vmul.f32 1.0, %v3282
      %v3284 = vrcp.pop %v3233
      %v3285 = vmul.f32 1.0, %v3284
      %v3286 = vrcp.pop %v3234
      %v3287 = vmul.f32 1.0, %v3286
      %v3288 = vrcp.pop %v3235
      %v3289 = vmul.f32 1.0, %v3288
      %v3290 = vrcp.pop %v3236
      %v3291 = vmul.f32 1.0, %v3290
      %v3292 = vrcp.pop %v3237
      %v3293 = vmul.f32 1.0, %v3292
      %v3294 = vrcp.pop %v3238
      %v3295 = vmul.f32 1.0, %v3294
      %v3296 = vrcp.pop %v3239
      %v3297 = vmul.f32 1.0, %v3296
      %v3298 = vrcp.pop %v3240
      %v3299 = vmul.f32 1.0, %v3298
      %v3300 = vrcp.pop %v3241
      %v3301 = vmul.f32 1.0, %v3300
      %v3302 = vrcp.pop %v3242
      %v3303 = vmul.f32 1.0, %v3302
      %v3304 = vrcp.pop %v3243
      %v3305 = vmul.f32 1.0, %v3304
      %v3306 = vrcp.pop %v3244
      %v3307 = vmul.f32 1.0, %v3306
      %v3308 = vrcp.pop %v3245
      %v3309 = vmul.f32 1.0, %v3308
      %v3310 = vmul.f32 %v2960, %v3247
      %v3311 = vmul.f32 %v2963, %v3249
      %v3312 = vmul.f32 %v2968, %v3251
      %v3313 = vmul.f32 %v2971, %v3253
      %v3314 = vmul.f32 %v2976, %v3255
      %v3315 = vmul.f32 %v2979, %v3257
      %v3316 = vmul.f32 %v2984, %v3259
      %v3317 = vmul.f32 %v2987, %v3261
      %v3318 = vmul.f32 %v2992, %v3263
      %v3319 = vmul.f32 %v2995, %v3265
      %v3320 = vmul.f32 %v3000, %v3267
      %v3321 = vmul.f32 %v3003, %v3269
      %v3322 = vmul.f32 %v3008, %v3271
      %v3323 = vmul.f32 %v3011, %v3273
      %v3324 = vmul.f32 %v3016, %v3275
      %v3325 = vmul.f32 %v3019, %v3277
      %v3326 = vmul.f32 %v3024, %v3279
      %v3327 = vmul.f32 %v3027, %v3281
      %v3328 = vmul.f32 %v3032, %v3283
      %v3329 = vmul.f32 %v3035, %v3285
      %v3330 = vmul.f32 %v3040, %v3287
      %v3331 = vmul.f32 %v3043, %v3289
      %v3332 = vmul.f32 %v3048, %v3291
      %v3333 = vmul.f32 %v3051, %v3293
      %v3334 = vmul.f32 %v3056, %v3295
      %v3335 = vmul.f32 %v3059, %v3297
      %v3336 = vmul.f32 %v3064, %v3299
      %v3337 = vmul.f32 %v3067, %v3301
      %v3338 = vmul.f32 %v3072, %v3303
      %v3339 = vmul.f32 %v3075, %v3305
      %v3340 = vmul.f32 %v3080, %v3307
      %v3341 = vmul.f32 %v3083, %v3309
      %v3342 = vadd.f32 %v3310, %v3311
      %v3343 = vadd.f32 %v3342, %v3312
      %v3344 = vadd.f32 %v3343, %v3313
      %v3345 = vadd.f32 %v3344, %v3314
      %v3346 = vadd.f32 %v3345, %v3315
      %v3347 = vadd.f32 %v3346, %v3316
      %v3348 = vadd.f32 %v3347, %v3317
      %v3349 = vadd.f32 %v3348, %v3318
      %v3350 = vadd.f32 %v3349, %v3319
      %v3351 = vadd.f32 %v3350, %v3320
      %v3352 = vadd.f32 %v3351, %v3321
      %v3353 = vadd.f32 %v3352, %v3322
      %v3354 = vadd.f32 %v3353, %v3323
      %v3355 = vadd.f32 %v3354, %v3324
      %v3356 = vadd.f32 %v3355, %v3325
      %v3357 = vadd.f32 %v3356, %v3326
      %v3358 = vadd.f32 %v3357, %v3327
      %v3359 = vadd.f32 %v3358, %v3328
      %v3360 = vadd.f32 %v3359, %v3329
      %v3361 = vadd.f32 %v3360, %v3330
      %v3362 = vadd.f32 %v3361, %v3331
      %v3363 = vadd.f32 %v3362, %v3332
      %v3364 = vadd.f32 %v3363, %v3333
      %v3365 = vadd.f32 %v3364, %v3334
      %v3366 = vadd.f32 %v3365, %v3335
      %v3367 = vadd.f32 %v3366, %v3336
      %v3368 = vadd.f32 %v3367, %v3337
      %v3369 = vadd.f32 %v3368, %v3338
      %v3370 = vadd.f32 %v3369, %v3339
      %v3371 = vadd.f32 %v3370, %v3340
      %v3372 = vadd.f32 %v3371, %v3341
      %v3373 = vrot.slane %v3372, 4
      %v3374 = vadd.f32 %v3372, %v3373
      %v3375 = vrot.slane %v3374, 2
      %v3376 = vadd.f32 %v3374, %v3375
      %v3377 = vrot.slane %v3376, 1
      %v3378 = vadd.f32 %v3376, %v3377
      %v3379 = vpack.c.bf16 %v3378, %v3378
      %3380 = vmatprep.subr.bf16.mxu0 0
      %3381 = vmatpush1.bf16.msra.mxu0 %v2027
      %3382 = vmatprep.subr.bf16.mxu0 0
      %3383 = vmatpush1.bf16.msra.mxu0 %v2028
      %3384 = vmatprep.subr.bf16.mxu0 0
      %3385 = vmatpush1.bf16.msra.mxu0 %v2029
      %3386 = vmatprep.subr.bf16.mxu0 0
      %3387 = vmatpush1.bf16.msra.mxu0 %v2030
      %3388 = vmatprep.subr.bf16.mxu0 0
      %3389 = vmatpush1.bf16.msra.mxu0 %v2031
      %3390 = vmatprep.subr.bf16.mxu0 0
      %3391 = vmatpush1.bf16.msra.mxu0 %v2032
      %3392 = vmatprep.subr.bf16.mxu0 0
      %3393 = vmatpush1.bf16.msra.mxu0 %v2033
      %3394 = vmatprep.subr.bf16.mxu0 0
      %3395 = vmatpush1.bf16.msra.mxu0 %v2034
      %3396 = vmatprep.subr.bf16.mxu0 0
      %3397 = vmatpush1.bf16.msra.mxu0 0
      %3398 = vmatprep.subr.bf16.mxu0 0
      %3399 = vmatpush1.bf16.msra.mxu0 0
      %3400 = vmatprep.subr.bf16.mxu0 0
      %3401 = vmatpush1.bf16.msra.mxu0 0
      %3402 = vmatprep.subr.bf16.mxu0 0
      %3403 = vmatpush1.bf16.msra.mxu0 0
      %3404 = vmatprep.subr.bf16.mxu0 0
      %3405 = vmatpush1.bf16.msra.mxu0 0
      %3406 = vmatprep.subr.bf16.mxu0 0
      %3407 = vmatpush1.bf16.msra.mxu0 0
      %3408 = vmatprep.subr.bf16.mxu0 0
      %3409 = vmatpush1.bf16.msra.mxu0 0
      %3410 = vmatprep.subr.bf16.mxu0 0
      %3411 = vmatpush1.bf16.msra.mxu0 0
      %3412 = vmatprep.mubr.bf16.mxu0 0
      %3413 = vmatmul.mubr.bf16.gmra.mrb[0].mxu0 %v3379
      %v3414 = vpop.f32.mrb[0].mxu0
      %v3415 = vadd.f32 0.0, %v3414
      %v3416 = vpop.f32.mrb[0].mxu0
      %v3417 = vpop.f32.mrb[0].mxu0
      %v3418 = vpop.f32.mrb[0].mxu0
      %3419 = vdwg.mxu0
      %v3420 = vmul.f32 %v3415, %v3415
      %v3421 = vsel %vm2084, %v3420, 0.0
      %3422 = vadd.xlane.f32.xlu0 %v3421
      %v3423 = vpop.xlane.xlu0 %3422
      %v3424 = vmax.f32 %v3423, 1e-12
      %v3425 = vrsqrt.pop %v3424
      %v3426 = vmul.f32 %v3415, %v3425
      %v3427 = vld [vmem:[%s353] sm:$0xf]
      %v3428 = vld [vmem:[%s353 + $0x4] sm:$0xf]
      %v3429 = vld [vmem:[%s353 + $0x8] sm:$0xf]
      %v3430 = vld [vmem:[%s353 + $0xc] sm:$0xf]
      %v3431 = vld [vmem:[%s353 + $0x10] sm:$0xf]
      %v3432 = vld [vmem:[%s353 + $0x14] sm:$0xf]
      %v3433 = vld [vmem:[%s353 + $0x18] sm:$0xf]
      %v3434 = vld [vmem:[%s353 + $0x1c] sm:$0xf]
      %v3435 = vld [vmem:[%s353 + $0x20] sm:$0xf]
      %v3436 = vld [vmem:[%s353 + $0x24] sm:$0xf]
      %v3437 = vunpack.c.l.bf16 %v3427
      %v3438 = vunpack.c.l.bf16 %v3428
      %v3439 = vunpack.c.l.bf16 %v3429
      %v3440 = vunpack.c.l.bf16 %v3430
      %v3441 = vunpack.c.l.bf16 %v3431
      %v3442 = vunpack.c.l.bf16 %v3432
      %v3443 = vunpack.c.l.bf16 %v3433
      %v3444 = vunpack.c.l.bf16 %v3434
      %v3445 = vunpack.c.l.bf16 %v3435
      %v3446 = vunpack.c.l.bf16 %v3436
      %v3447 = vadd.f32 %v3437, %v3438
      %v3448 = vadd.f32 %v3447, %v3439
      %v3449 = vadd.f32 %v3448, %v3440
      %v3450 = vadd.f32 %v3449, %v3441
      %v3451 = vadd.f32 %v3450, %v3442
      %v3452 = vadd.f32 %v3451, %v3443
      %v3453 = vadd.f32 %v3452, %v3444
      %v3454 = vadd.f32 %v3453, %v3445
      %v3455 = vadd.f32 %v3454, %v3446
      %v3456 = vrot.slane %v3455, 4
      %v3457 = vadd.f32 %v3455, %v3456
      %v3458 = vrot.slane %v3457, 2
      %v3459 = vadd.f32 %v3457, %v3458
      %v3460 = vrot.slane %v3459, 1
      %v3461 = vadd.f32 %v3459, %v3460
      %v3462 = vpack.c.bf16 %v3461, %v3461
      %v3463 = vld [vmem:[%s7] sm:$0xf]
      %v3464 = vld [vmem:[%s7 + $0x4] sm:$0xf]
      %v3465 = vld [vmem:[%s7 + $0x8] sm:$0xf]
      %v3466 = vld [vmem:[%s7 + $0xc] sm:$0xf]
      %v3467 = vld [vmem:[%s7 + $0x10] sm:$0xf]
      %v3468 = vld [vmem:[%s7 + $0x14] sm:$0xf]
      %v3469 = vld [vmem:[%s7 + $0x18] sm:$0xf]
      %v3470 = vld [vmem:[%s7 + $0x1c] sm:$0xf]
      %v3471 = vld [vmem:[%s7 + $0x20] sm:$0xf]
      %v3472 = vld [vmem:[%s7 + $0x24] sm:$0xf]
      %v3473 = vld [vmem:[%s7 + $0x28] sm:$0xf]
      %v3474 = vld [vmem:[%s7 + $0x2c] sm:$0xf]
      %v3475 = vld [vmem:[%s7 + $0x30] sm:$0xf]
      %v3476 = vld [vmem:[%s7 + $0x34] sm:$0xf]
      %v3477 = vld [vmem:[%s7 + $0x38] sm:$0xf]
      %v3478 = vld [vmem:[%s7 + $0x3c] sm:$0xf]
      %v3495 = vunpack.c.l.b16 %v3463
      %v3496 = vunpack.c.l.b16 %v3464
      %v3497 = vunpack.c.l.b16 %v3465
      %v3498 = vunpack.c.l.b16 %v3466
      %v3499 = vunpack.c.l.b16 %v3467
      %v3500 = vunpack.c.l.b16 %v3468
      %v3501 = vunpack.c.l.b16 %v3469
      %v3502 = vunpack.c.l.b16 %v3470
      %v3503 = vunpack.c.l.b16 %v3471
      %v3504 = vunpack.c.l.b16 %v3472
      %v3505 = vunpack.c.l.b16 %v3473
      %v3506 = vunpack.c.l.b16 %v3474
      %v3507 = vunpack.c.l.b16 %v3475
      %v3508 = vunpack.c.l.b16 %v3476
      %v3509 = vunpack.c.l.b16 %v3477
      %v3510 = vunpack.c.l.b16 %v3478
      %v3511 = vpack.c.b16 %v3496, %v3495
      %v3512 = vpack.c.b16 %v3498, %v3497
      %v3513 = vpack.c.b16 %v3500, %v3499
      %v3514 = vpack.c.b16 %v3502, %v3501
      %v3515 = vpack.c.b16 %v3504, %v3503
      %v3516 = vpack.c.b16 %v3506, %v3505
      %v3517 = vpack.c.b16 %v3508, %v3507
      %v3518 = vpack.c.b16 %v3510, %v3509
      %3527 = vmatprep.subr.bf16.mxu0 0
      %3528 = vmatpush1.bf16.msra.mxu0 %v3511
      %3529 = vmatprep.subr.bf16.mxu0 0
      %3530 = vmatpush1.bf16.msra.mxu0 %v3512
      %3531 = vmatprep.subr.bf16.mxu0 0
      %3532 = vmatpush1.bf16.msra.mxu0 %v3513
      %3533 = vmatprep.subr.bf16.mxu0 0
      %3534 = vmatpush1.bf16.msra.mxu0 %v3514
      %3535 = vmatprep.subr.bf16.mxu0 0
      %3536 = vmatpush1.bf16.msra.mxu0 %v3515
      %3537 = vmatprep.subr.bf16.mxu0 0
      %3538 = vmatpush1.bf16.msra.mxu0 %v3516
      %3539 = vmatprep.subr.bf16.mxu0 0
      %3540 = vmatpush1.bf16.msra.mxu0 %v3517
      %3541 = vmatprep.subr.bf16.mxu0 0
      %3542 = vmatpush1.bf16.msra.mxu0 %v3518
      %3543 = vmatprep.subr.bf16.mxu0 0
      %3544 = vmatpush1.bf16.msra.mxu0 0
      %3545 = vmatprep.subr.bf16.mxu0 0
      %3546 = vmatpush1.bf16.msra.mxu0 0
      %3547 = vmatprep.subr.bf16.mxu0 0
      %3548 = vmatpush1.bf16.msra.mxu0 0
      %3549 = vmatprep.subr.bf16.mxu0 0
      %3550 = vmatpush1.bf16.msra.mxu0 0
      %3551 = vmatprep.subr.bf16.mxu0 0
      %3552 = vmatpush1.bf16.msra.mxu0 0
      %3553 = vmatprep.subr.bf16.mxu0 0
      %3554 = vmatpush1.bf16.msra.mxu0 0
      %3555 = vmatprep.subr.bf16.mxu0 0
      %3556 = vmatpush1.bf16.msra.mxu0 0
      %3557 = vmatprep.subr.bf16.mxu0 0
      %3558 = vmatpush1.bf16.msra.mxu0 0
      %3559 = vmatprep.mubr.bf16.mxu0 0
      %3560 = vmatmul.mubr.bf16.gmra.mrb[0].mxu0 %v3462
      %v3561 = vpop.f32.mrb[0].mxu0
      %v3562 = vadd.f32 0.0, %v3561
      %v3563 = vpop.f32.mrb[0].mxu0
      %v3564 = vpop.f32.mrb[0].mxu0
      %v3565 = vpop.f32.mrb[0].mxu0
      %3566 = vdwg.mxu0
      %v3567 = vmul.f32 %v3562, %v3562
      %v3568 = vsel %vm2084, %v3567, 0.0
      %3569 = vadd.xlane.f32.xlu0 %v3568
      %v3570 = vpop.xlane.xlu0 %3569
      %v3571 = vmax.f32 %v3570, 1e-12
      %v3572 = vrsqrt.pop %v3571
      %v3573 = vmul.f32 %v3562, %v3572
      %v3574 = vld [vmem:[%s358] sm:$0xf]
      %v3575 = vld [vmem:[%s358 + $0x4] sm:$0xf]
      %v3576 = vld [vmem:[%s358 + $0x8] sm:$0xf]
      %v3577 = vld [vmem:[%s358 + $0xc] sm:$0xf]
      %v3578 = vld [vmem:[%s358 + $0x10] sm:$0xf]
      %v3579 = vld [vmem:[%s358 + $0x14] sm:$0xf]
      %v3580 = vld [vmem:[%s358 + $0x18] sm:$0xf]
      %v3581 = vld [vmem:[%s358 + $0x1c] sm:$0xf]
      %v3582 = vld [vmem:[%s358 + $0x20] sm:$0xf]
      %v3583 = vld [vmem:[%s358 + $0x24] sm:$0xf]
      %v3584 = vunpack.c.l.bf16 %v3574
      %v3585 = vunpack.c.l.bf16 %v3575
      %v3586 = vunpack.c.l.bf16 %v3576
      %v3587 = vunpack.c.l.bf16 %v3577
      %v3588 = vunpack.c.l.bf16 %v3578
      %v3589 = vunpack.c.l.bf16 %v3579
      %v3590 = vunpack.c.l.bf16 %v3580
      %v3591 = vunpack.c.l.bf16 %v3581
      %v3592 = vunpack.c.l.bf16 %v3582
      %v3593 = vunpack.c.l.bf16 %v3583
      %v3594 = vadd.f32 %v3584, %v3585
      %v3595 = vadd.f32 %v3594, %v3586
      %v3596 = vadd.f32 %v3595, %v3587
      %v3597 = vadd.f32 %v3596, %v3588
      %v3598 = vadd.f32 %v3597, %v3589
      %v3599 = vadd.f32 %v3598, %v3590
      %v3600 = vadd.f32 %v3599, %v3591
      %v3601 = vadd.f32 %v3600, %v3592
      %v3602 = vadd.f32 %v3601, %v3593
      %v3603 = vrot.slane %v3602, 4
      %v3604 = vadd.f32 %v3602, %v3603
      %v3605 = vrot.slane %v3604, 2
      %v3606 = vadd.f32 %v3604, %v3605
      %v3607 = vrot.slane %v3606, 1
      %v3608 = vadd.f32 %v3606, %v3607
      %v3609 = vpack.c.bf16 %v3608, %v3608
      %3610 = vmatprep.subr.bf16.mxu0 0
      %3611 = vmatpush1.bf16.msra.mxu0 %v3511
      %3612 = vmatprep.subr.bf16.mxu0 0
      %3613 = vmatpush1.bf16.msra.mxu0 %v3512
      %3614 = vmatprep.subr.bf16.mxu0 0
      %3615 = vmatpush1.bf16.msra.mxu0 %v3513
      %3616 = vmatprep.subr.bf16.mxu0 0
      %3617 = vmatpush1.bf16.msra.mxu0 %v3514
      %3618 = vmatprep.subr.bf16.mxu0 0
      %3619 = vmatpush1.bf16.msra.mxu0 %v3515
      %3620 = vmatprep.subr.bf16.mxu0 0
      %3621 = vmatpush1.bf16.msra.mxu0 %v3516
      %3622 = vmatprep.subr.bf16.mxu0 0
      %3623 = vmatpush1.bf16.msra.mxu0 %v3517
      %3624 = vmatprep.subr.bf16.mxu0 0
      %3625 = vmatpush1.bf16.msra.mxu0 %v3518
      %3626 = vmatprep.subr.bf16.mxu0 0
      %3627 = vmatpush1.bf16.msra.mxu0 0
      %3628 = vmatprep.subr.bf16.mxu0 0
      %3629 = vmatpush1.bf16.msra.mxu0 0
      %3630 = vmatprep.subr.bf16.mxu0 0
      %3631 = vmatpush1.bf16.msra.mxu0 0
      %3632 = vmatprep.subr.bf16.mxu0 0
      %3633 = vmatpush1.bf16.msra.mxu0 0
      %3634 = vmatprep.subr.bf16.mxu0 0
      %3635 = vmatpush1.bf16.msra.mxu0 0
      %3636 = vmatprep.subr.bf16.mxu0 0
      %3637 = vmatpush1.bf16.msra.mxu0 0
      %3638 = vmatprep.subr.bf16.mxu0 0
      %3639 = vmatpush1.bf16.msra.mxu0 0
      %3640 = vmatprep.subr.bf16.mxu0 0
      %3641 = vmatpush1.bf16.msra.mxu0 0
      %3642 = vmatprep.mubr.bf16.mxu0 0
      %3643 = vmatmul.mubr.bf16.gmra.mrb[0].mxu0 %v3609
      %v3644 = vpop.f32.mrb[0].mxu0
      %v3645 = vadd.f32 0.0, %v3644
      %v3646 = vpop.f32.mrb[0].mxu0
      %v3647 = vpop.f32.mrb[0].mxu0
      %v3648 = vpop.f32.mrb[0].mxu0
      %3649 = vdwg.mxu0
      %v3650 = vmul.f32 %v3645, %v3645
      %v3651 = vsel %vm2084, %v3650, 0.0
      %3652 = vadd.xlane.f32.xlu0 %v3651
      %v3653 = vpop.xlane.xlu0 %3652
      %v3654 = vmax.f32 %v3653, 1e-12
      %v3655 = vrsqrt.pop %v3654
      %v3656 = vmul.f32 %v3645, %v3655
      %v3657 = vmul.f32 %v2090, %v3573
      %v3658 = vsel %vm2084, %v3657, 0.0
      %3659 = vadd.xlane.f32.xlu0 %v3658
      %v3660 = vpop.xlane.xlu0 %3659
      %v3661 = vmul.f32 %v3426, %v3656
      %v3662 = vsel %vm2084, %v3661, 0.0
      %3663 = vadd.xlane.f32.xlu0 %v3662
      %v3664 = vpop.xlane.xlu0 %3663
      %v3665 = vmul.f32 %v2090, %v3426
      %v3666 = vsel %vm2084, %v3665, 0.0
      %3667 = vadd.xlane.f32.xlu0 %v3666
      %v3668 = vpop.xlane.xlu0 %3667
      %v3669 = vsub.f32 %v3426, %v2090
      %v3670 = vsub.f32 %v3656, %v3573
      %v3671 = vmul.f32 %v3669, %v3669
      %v3672 = vsel %vm2084, %v3671, 0.0
      %3673 = vadd.xlane.f32.xlu0 %v3672
      %v3674 = vpop.xlane.xlu0 %3673
      %v3675 = vmax.f32 %v3674, 1e-16
      %v3676 = vmul.f32 %v3670, %v3670
      %v3677 = vsel %vm2084, %v3676, 0.0
      %3678 = vadd.xlane.f32.xlu0 %v3677
      %v3679 = vpop.xlane.xlu0 %3678
      %v3680 = vmax.f32 %v3679, 1e-16
      %v3681 = vmul.f32 %v3669, %v3670
      %v3682 = vsel %vm2084, %v3681, 0.0
      %3683 = vadd.xlane.f32.xlu0 %v3682
      %v3684 = vpop.xlane.xlu0 %3683
      %v3685 = vmul.f32 %v3675, %v3680
      %v3686 = vrsqrt.pop %v3685
      %v3687 = vmul.f32 %v3684, %v3686
      %v3688 = vlaneseq
      %v3689 = vand.u32 %v3688, 127
      %vm3690 = vcmp.eq.s32.totalorder %v3689, 0
      %v3691 = vsel %vm3690, %v3660, 0.0
      %vm3692 = vcmp.eq.s32.totalorder %v3689, 1
      %v3693 = vsel %vm3692, %v3664, 0.0
      %v3694 = vadd.f32 %v3691, %v3693
      %vm3695 = vcmp.eq.s32.totalorder %v3689, 2
      %v3696 = vsel %vm3695, %v3687, 0.0
      %v3697 = vadd.f32 %v3694, %v3696
      %vm3698 = vcmp.eq.s32.totalorder %v3689, 3
      %v3699 = vsel %vm3698, %v3668, 0.0
      %v3700 = vadd.f32 %v3697, %v3699
      %3701 = vst [vmem:[%s361] sm:$0x1] %v3700
      %p3702 = scmp.lt.s32.totalorder %s19, 1
      %s3703 = scalar_select %p3702, %s19, 1
      %s3704 = scalar_lea.vmem %s8, %s3703
      // Predicated region
      $region53: #{clip_similarity_forward.1} parent=51 // pred_check
        %p3705 = pneg %p225
      $region54: #{clip_similarity_forward.1} parent=51 // pred_check_branch
        %3707 = sbr.rel (%p3705) target = $region56
      $region55: #{clip_similarity_forward.1} parent=51 // pred_region
        _
      $region56: #{clip_similarity_forward.1} parent=51 // pred_fallthru
        _
    $region52: #{clip_similarity_forward.1} parent=5 // pred_fallthru
      _
    %p3708 = scmp.le.s32.totalorder 2, %s14
    // Predicated region
    $region57: #{clip_similarity_forward.1} parent=5 // pred_check
      %p3709 = pneg %p3708
    $region58: #{clip_similarity_forward.1} parent=5 // pred_check_branch
      %3711 = sbr.rel (%p3709) target = $region60
    $region59: #{clip_similarity_forward.1} parent=5 // pred_region
      %s3712 = ssub.s32 %s14, 2
      // Predicated region
      $region61: #{clip_similarity_forward.1} parent=59 // pred_check
        %p3713 = pneg %p231
      $region62: #{clip_similarity_forward.1} parent=59 // pred_check_branch
        %3715 = sbr.rel (%p3713) target = $region64
      $region63: #{clip_similarity_forward.1} parent=59 // pred_region
        %p3716 = scmp.lt.s32.totalorder %s20, 1
        %s3717 = scalar_select %p3716, %s20, 1
        %s3718 = scalar_lea.vmem %s8, %s3717
      $region64: #{clip_similarity_forward.1} parent=59 // pred_fallthru
        _
    $region60: #{clip_similarity_forward.1} parent=5 // pred_fallthru
      _
  $region6: #{clip_similarity_forward.1} parent=0 // loop_footer
    %s18 = sadd.s32 1, %s14
  $region7: #{clip_similarity_forward.1} parent=0 // loop_footer_branch
    %13 = sbr.rel target = $region3
  $region8: #{clip_similarity_forward.1} parent=0 // loop_exit
    _

</llo_original>
